<compile_context>
chip_gen: v6e
topology: v6e:2x2x1
jax: 0.10.0
libtpu: 0.0.40
codegen_flags: <defaults>
</compile_context>

<pallas_src>
import functools
import math

import jax
import jax.numpy as jnp
from jax import lax
from jax.experimental import pallas as pl
from jax.experimental.pallas import tpu as pltpu


# ----------------------------------------------------------------------------
# Config / padded sizes
# ----------------------------------------------------------------------------
class Cfg:
    hidden_size = 32
    num_hidden_layers = 2
    num_attention_heads = 4
    intermediate_size = 64
    vocab_size = 100
    max_position_embeddings = 64
    type_vocab_size = 2
    num_labels = 3
    modal_hidden_size = 16          # output dim of the (identity) modal encoder
    hidden_dropout_prob = 0.1       # inference mode -> identity
    layer_norm_eps = 1e-12


HP = 128   # hidden size padded to a full 128-lane vreg
IP = 128   # intermediate size padded to 128 lanes

# packed per-layer vector rows (all padded lanes are exactly zero)
NV = 16
ROW_BQ, ROW_BK, ROW_BV, ROW_BO = 0, 1, 2, 3
ROW_LN1G, ROW_LN1B = 4, 5
ROW_BI, ROW_BOUT = 6, 7
ROW_LN2G, ROW_LN2B = 8, 9

# packed embed-stage vector rows
EROW_PROJB, EROW_LNG, EROW_LNB = 0, 1, 2


# ----------------------------------------------------------------------------
# Fused encoder kernel: embeddings + all transformer layers
# ----------------------------------------------------------------------------
def _mmbt_kernel(base_ref, modal_ref, postype_ref, projw_ref, evec_ref,
                 wqkv_ref, wo_ref, wi_ref, wout_ref, vecs_ref, o_ref,
                 *, nh, dh, h_real, s_real, m_lo, m_hi, n_layers, eps):
    SP = base_ref.shape[1]
    HPc = base_ref.shape[2]

    # ---- hoisted masks (computed once per kernel invocation) ----------------
    lane = lax.broadcasted_iota(jnp.int32, (1, HPc), 1)
    lane_mask = (lane < h_real).astype(jnp.float32)                 # (1, HP)
    row = lax.broadcasted_iota(jnp.int32, (SP, 1), 0)
    modal_mask = jnp.logical_and(row >= m_lo, row < m_hi).astype(jnp.float32)
    key_iota = lax.broadcasted_iota(jnp.int32, (1, 1, SP), 2)
    key_bias = jnp.where(key_iota < s_real, 0.0, -1e30)             # (1,1,SP)

    inv_h = 1.0 / h_real

    def ln(x, g, b):
        """LayerNorm over the first h_real lanes (padded lanes of x are 0)."""
        mu = jnp.sum(x, axis=-1, keepdims=True) * inv_h
        d = (x - mu) * lane_mask
        var = jnp.sum(d * d, axis=-1, keepdims=True) * inv_h
        return (x - mu) * lax.rsqrt(var + eps) * g + b

    # ---- embeddings: modal proj (masked to modal rows) + sums + LN ----------
    evec = evec_ref[...]                                            # (8, HP)
    proj = jnp.dot(modal_ref[0].astype(jnp.bfloat16), projw_ref[...],
                   preferred_element_type=jnp.float32) + evec[EROW_PROJB:EROW_PROJB + 1, :]
    emb = base_ref[0] + proj * modal_mask + postype_ref[...]
    x = ln(emb, evec[EROW_LNG:EROW_LNG + 1, :], evec[EROW_LNB:EROW_LNB + 1, :])

    scale = 1.0 / math.sqrt(dh)

    # ---- transformer layers (unrolled; weights already resident in VMEM) ----
    for l in range(n_layers):
        vecs = vecs_ref[l]                                          # (NV, HP)

        # fused, lane-aligned QKV projection (bf16 operands, f32 accumulate)
        qkv = jnp.dot(x.astype(jnp.bfloat16), wqkv_ref[l],
                      preferred_element_type=jnp.float32)           # (SP, 3*HP)
        q = qkv[:, 0:HPc] + vecs[ROW_BQ:ROW_BQ + 1, :]
        k = qkv[:, HPc:2 * HPc] + vecs[ROW_BK:ROW_BK + 1, :]
        v = qkv[:, 2 * HPc:3 * HPc] + vecs[ROW_BV:ROW_BV + 1, :]

        # head-batched attention: [nh, SP, dh]
        q3 = jnp.stack([q[:, h * dh:(h + 1) * dh] for h in range(nh)], axis=0)
        k3 = jnp.stack([k[:, h * dh:(h + 1) * dh] for h in range(nh)], axis=0)
        v3 = jnp.stack([v[:, h * dh:(h + 1) * dh] for h in range(nh)], axis=0)

        s = jnp.einsum('hqd,hkd->hqk', q3, k3,
                       preferred_element_type=jnp.float32) * scale  # (nh,SP,SP)
        s = s + key_bias                      # mask padded key rows (rows >= s_real)
        s = s - jnp.max(s, axis=-1, keepdims=True)
        p = jnp.exp(s)
        p = p * pl.reciprocal(jnp.sum(p, axis=-1, keepdims=True), approx=True)
        ctx = jnp.einsum('hqk,hkd->hqd', p, v3,
                         preferred_element_type=jnp.float32)        # (nh,SP,dh)
        ctx_cat = jnp.concatenate([ctx[h] for h in range(nh)], axis=-1)  # (SP, H)

        # single out-projection matmul (K=H), then residual + LN1
        attn = jnp.dot(ctx_cat.astype(jnp.bfloat16), wo_ref[l],
                       preferred_element_type=jnp.float32) + vecs[ROW_BO:ROW_BO + 1, :]
        x1 = ln(x + attn, vecs[ROW_LN1G:ROW_LN1G + 1, :], vecs[ROW_LN1B:ROW_LN1B + 1, :])

        # FFN (bf16 matmuls, f32 accumulate)
        inter = jnp.dot(x1.astype(jnp.bfloat16), wi_ref[l],
                        preferred_element_type=jnp.float32) + vecs[ROW_BI:ROW_BI + 1, :]
        # TODO(synk): HF BERT default is exact erf GELU; tanh approximation used here.
        inter = jax.nn.gelu(inter, approximate=True)
        ffn = jnp.dot(inter.astype(jnp.bfloat16), wout_ref[l],
                      preferred_element_type=jnp.float32) + vecs[ROW_BOUT:ROW_BOUT + 1, :]

        x = ln(x1 + ffn, vecs[ROW_LN2G:ROW_LN2G + 1, :], vecs[ROW_LN2B:ROW_LN2B + 1, :])

    o_ref[0] = x


def mmbt_encoder(params, cfg, base, modal_full, postype, s_real, m_hi):
    """Single fused pallas_call for embeddings + all transformer layers."""
    B, SP, _ = base.shape
    Md = modal_full.shape[-1]
    H = cfg.hidden_size
    L = cfg.num_hidden_layers

    kern = functools.partial(
        _mmbt_kernel,
        nh=cfg.num_attention_heads,
        dh=H // cfg.num_attention_heads,
        h_real=H,
        s_real=s_real,
        m_lo=1,
        m_hi=m_hi,
        n_layers=L,
        eps=cfg.layer_norm_eps,
    )

    batch3 = lambda shape: pl.BlockSpec(shape, lambda b: (b, 0, 0))
    full2 = lambda shape: pl.BlockSpec(shape, lambda b: (0, 0))
    full3 = lambda shape: pl.BlockSpec(shape, lambda b: (0, 0, 0))

    return pl.pallas_call(
        kern,
        grid=(B,),
        in_specs=[
            batch3((1, SP, HP)),          # base token embeddings (word start/end/text)
            batch3((1, SP, Md)),          # modal features placed at rows 1..mS-2
            full2((SP, HP)),              # position + token-type embedding table
            full2((Md, HP)),              # modal projection weight (bf16)
            full2((8, HP)),               # packed embed vectors (proj_b, ln_g, ln_b)
            full3((L, HP, 3 * HP)),       # fused lane-aligned QKV weights (bf16)
            full3((L, H, HP)),            # attention out-proj weights (bf16)
            full3((L, HP, IP)),           # FFN in weights (bf16)
            full3((L, IP, HP)),           # FFN out weights (bf16)
            full3((L, NV, HP)),           # packed per-layer vectors
        ],
        out_specs=batch3((1, SP, HP)),
        out_shape=jax.ShapeDtypeStruct((B, SP, HP), jnp.float32),
        compiler_params=pltpu.CompilerParams(dimension_semantics=("parallel",)),
    )(base, modal_full, postype, params["modal_proj_w"], params["emb_vecs"],
      params["wqkv"], params["wo"], params["wi"], params["wout"], params["vecs"])


# ----------------------------------------------------------------------------
# Parameter init (stacked / lane-padded layouts; padded entries exactly zero)
# ----------------------------------------------------------------------------
def init_params(cfg, key):
    H, I, V = cfg.hidden_size, cfg.intermediate_size, cfg.vocab_size
    Md, L = cfg.modal_hidden_size, cfg.num_hidden_layers
    keys = iter(jax.random.split(key, 64))

    def w(shape):
        return (0.02 * jax.random.normal(next(keys), shape)).astype(jnp.float32)

    def pad_cols(x, n):
        return jnp.pad(x, ((0, 0), (0, n - x.shape[1])))

    # stacked layer weights
    wqkv = jnp.zeros((L, HP, 3 * HP), jnp.float32)
    wo = jnp.zeros((L, H, HP), jnp.float32)
    wi = jnp.zeros((L, HP, IP), jnp.float32)
    wout = jnp.zeros((L, IP, HP), jnp.float32)
    vecs = jnp.zeros((L, NV, HP), jnp.float32)
    for l in range(L):
        wqkv = wqkv.at[l, :H, 0:H].set(w((H, H)))                   # Q
        wqkv = wqkv.at[l, :H, HP:HP + H].set(w((H, H)))             # K
        wqkv = wqkv.at[l, :H, 2 * HP:2 * HP + H].set(w((H, H)))     # V
        wo = wo.at[l, :H, :H].set(w((H, H)))
        wi = wi.at[l, :H, :I].set(w((H, I)))
        wout = wout.at[l, :I, :H].set(w((I, H)))
        vecs = vecs.at[l, ROW_LN1G, :H].set(1.0)                    # LN gammas
        vecs = vecs.at[l, ROW_LN2G, :H].set(1.0)
        # all linear biases / LN betas stay zero

    emb_vecs = jnp.zeros((8, HP), jnp.float32)
    emb_vecs = emb_vecs.at[EROW_LNG, :H].set(1.0)                   # embedding LN gamma

    return {
        "word_emb": pad_cols(w((V, H)), HP),
        "pos_emb": pad_cols(w((cfg.max_position_embeddings, H)), HP),
        "type_emb": pad_cols(w((cfg.type_vocab_size, H)), HP),
        "modal_proj_w": pad_cols(w((Md, H)), HP).astype(jnp.bfloat16),
        "emb_vecs": emb_vecs,
        "wqkv": wqkv.astype(jnp.bfloat16),
        "wo": wo.astype(jnp.bfloat16),
        "wi": wi.astype(jnp.bfloat16),
        "wout": wout.astype(jnp.bfloat16),
        "vecs": vecs,
        # pooler / classifier stay tiny & unpadded (plain jnp)
        "pooler_w": w((H, H)),
        "pooler_b": jnp.zeros((H,), jnp.float32),
        "cls_w": w((H, cfg.num_labels)),
        "cls_b": jnp.zeros((cfg.num_labels,), jnp.float32),
    }


# ----------------------------------------------------------------------------
# MMBT forward
# ----------------------------------------------------------------------------
def mmbt_for_classification(params, cfg, input_modal, input_ids,
                            modal_start_tokens, modal_end_tokens, labels=None):
    H = cfg.hidden_size
    B, Mseq, Md = input_modal.shape
    T = input_ids.shape[1]
    mS = Mseq + 2                       # [start] modal... [end]
    S = mS + T                          # full sequence length
    SP = 8 * ((S + 7) // 8)             # pad to a multiple of 8 sublanes

    we = params["word_emb"]

    # --- base token embeddings: start/end + text word embeds, zero elsewhere ---
    base = jnp.zeros((B, SP, HP), jnp.float32)
    base = base.at[:, 0, :].set(we[modal_start_tokens])
    base = base.at[:, mS - 1, :].set(we[modal_end_tokens])
    base = base.at[:, mS:mS + T, :].set(we[input_ids])

    # --- modal features placed at their sequence rows (zero elsewhere) ---------
    modal_full = jnp.zeros((B, SP, Md), jnp.float32)
    modal_full = modal_full.at[:, 1:mS - 1, :].set(input_modal)

    # --- position + token-type table (batch-invariant, pad rows zero) ----------
    # modal segment: token_type 0, positions 0..mS-1; text: token_type 1, 0..T-1
    postype = jnp.zeros((SP, HP), jnp.float32)
    postype = postype.at[:mS].set(params["pos_emb"][:mS] + params["type_emb"][0])
    postype = postype.at[mS:S].set(params["pos_emb"][:T] + params["type_emb"][1])

    # NOTE: attention_mask defaults to all-ones -> additive mask only masks the
    # 2 sequence-padding rows (added in-kernel).
    # TODO(synk): caller-supplied padding attention_mask not supported.

    # --- single fused Pallas kernel: embeddings + all layers -------------------
    x = mmbt_encoder(params, cfg, base, modal_full, postype,
                     s_real=S, m_hi=mS - 1)                  # [B, SP, HP]

    # --- pooler + classifier + loss: tiny -> plain jnp --------------------------
    first = x[:, 0, :H]                                      # [B, H]
    pooled = jnp.tanh(first @ params["pooler_w"] + params["pooler_b"])
    # dropout is identity at inference
    logits = pooled @ params["cls_w"] + params["cls_b"]      # [B, num_labels]

    outputs = (logits,)
    if labels is not None:
        if cfg.num_labels == 1:
            loss = jnp.mean((logits.reshape(-1)
                             - labels.reshape(-1).astype(jnp.float32)) ** 2)
        else:
            lo = logits.reshape(-1, cfg.num_labels)
            lse = jax.nn.logsumexp(lo, axis=-1)
            picked = jnp.take_along_axis(lo, labels.reshape(-1, 1), axis=-1)[:, 0]
            loss = jnp.mean(lse - picked)
        outputs = (loss,) + outputs
    return outputs


# ----------------------------------------------------------------------------
# Main
# ----------------------------------------------------------------------------
if __name__ == "__main__":
    cfg = Cfg()
    key = jax.random.PRNGKey(0)
    k_param, k_modal, k_ids, k_lab = jax.random.split(key, 4)

    params = init_params(cfg, k_param)

    B, Mseq = 2, 4
    input_modal = jax.random.normal(k_modal, (B, Mseq, cfg.modal_hidden_size),
                                    dtype=jnp.float32)
    input_ids = jax.random.randint(k_ids, (B, 8), 0, cfg.vocab_size)
    modal_start_tokens = jnp.array([1, 1], dtype=jnp.int32)
    modal_end_tokens = jnp.array([2, 2], dtype=jnp.int32)
    labels = jax.random.randint(k_lab, (B,), 0, cfg.num_labels)

    fwd = jax.jit(mmbt_for_classification, static_argnums=(1,))
    loss, logits = fwd(params, cfg, input_modal, input_ids,
                       modal_start_tokens, modal_end_tokens, labels)

    jax.block_until_ready((loss, logits))
    assert logits.shape == (B, cfg.num_labels)
    assert loss.shape == ()
    assert bool(jnp.isfinite(loss)) and bool(jnp.all(jnp.isfinite(logits)))
    print("KERNEL_OK")
</pallas_src>

<mosaic_0001>
module attributes {stable_mosaic.version = 11 : i64} {
  func.func @_mmbt_kernel(%arg0: i32, %arg1: memref<1x16x128xf32, #tpu.memory_space<vmem>>, %arg2: memref<1x16x16xf32, #tpu.memory_space<vmem>>, %arg3: memref<16x128xf32, #tpu.memory_space<vmem>>, %arg4: memref<16x128xbf16, #tpu.memory_space<vmem>>, %arg5: memref<8x128xf32, #tpu.memory_space<vmem>>, %arg6: memref<2x128x384xbf16, #tpu.memory_space<vmem>>, %arg7: memref<2x32x128xbf16, #tpu.memory_space<vmem>>, %arg8: memref<2x128x128xbf16, #tpu.memory_space<vmem>>, %arg9: memref<2x128x128xbf16, #tpu.memory_space<vmem>>, %arg10: memref<2x16x128xf32, #tpu.memory_space<vmem>>, %arg11: memref<1x16x128xf32, #tpu.memory_space<vmem>>) attributes {dimension_semantics = [#tpu.dimension_semantics<parallel>], iteration_bounds = array<i64: 2>, scalar_prefetch = 0 : i64, scratch_operands = 0 : i64, tpu.core_type = #tpu.core_type<tc>, window_params = [{transform_indices = @transform_0, window_bounds = array<i64: 1, 16, 128>}, {transform_indices = @transform_1, window_bounds = array<i64: 1, 16, 16>}, {pipeline_mode = #tpu.pipeline_mode<synchronous>, transform_indices = @transform_2, window_bounds = array<i64: 16, 128>}, {pipeline_mode = #tpu.pipeline_mode<synchronous>, transform_indices = @transform_3, window_bounds = array<i64: 16, 128>}, {pipeline_mode = #tpu.pipeline_mode<synchronous>, transform_indices = @transform_4, window_bounds = array<i64: 8, 128>}, {pipeline_mode = #tpu.pipeline_mode<synchronous>, transform_indices = @transform_5, window_bounds = array<i64: 2, 128, 384>}, {pipeline_mode = #tpu.pipeline_mode<synchronous>, transform_indices = @transform_6, window_bounds = array<i64: 2, 32, 128>}, {pipeline_mode = #tpu.pipeline_mode<synchronous>, transform_indices = @transform_7, window_bounds = array<i64: 2, 128, 128>}, {pipeline_mode = #tpu.pipeline_mode<synchronous>, transform_indices = @transform_8, window_bounds = array<i64: 2, 128, 128>}, {pipeline_mode = #tpu.pipeline_mode<synchronous>, transform_indices = @transform_9, window_bounds = array<i64: 2, 16, 128>}, {transform_indices = @transform_10, window_bounds = array<i64: 1, 16, 128>}]} {
    %0 = tpu.iota {dimensions = array<i32: 1>} : vector<1x128xi32>
    %c32_i32 = arith.constant 32 : i32
    %1 = vector.broadcast %c32_i32 : i32 to vector<1x128xi32>
    %2 = arith.cmpi slt, %0, %1 : vector<1x128xi32>
    %3 = arith.extui %2 : vector<1x128xi1> to vector<1x128xi32>
    %4 = arith.sitofp %3 : vector<1x128xi32> to vector<1x128xf32>
    %5 = tpu.iota {dimensions = array<i32: 0>} : vector<16x1xi32>
    %c1_i32 = arith.constant 1 : i32
    %6 = vector.broadcast %c1_i32 : i32 to vector<16x1xi32>
    %7 = arith.cmpi sge, %5, %6 : vector<16x1xi32>
    %c5_i32 = arith.constant 5 : i32
    %8 = vector.broadcast %c5_i32 : i32 to vector<16x1xi32>
    %9 = arith.cmpi slt, %5, %8 : vector<16x1xi32>
    %10 = arith.andi %7, %9 : vector<16x1xi1>
    %11 = arith.extui %10 : vector<16x1xi1> to vector<16x1xi32>
    %12 = arith.sitofp %11 : vector<16x1xi32> to vector<16x1xf32>
    %13 = tpu.iota {dimensions = array<i32: 2>} : vector<1x1x16xi32>
    %c14_i32 = arith.constant 14 : i32
    %14 = vector.broadcast %c14_i32 : i32 to vector<1x1x16xi32>
    %15 = arith.cmpi slt, %13, %14 : vector<1x1x16xi32>
    %cst = arith.constant 0.000000e+00 : f32
    %cst_0 = arith.constant -1.000000e+30 : f32
    %16 = vector.broadcast %cst : f32 to vector<1x1x16xf32>
    %17 = vector.broadcast %cst_0 : f32 to vector<1x1x16xf32>
    %18 = arith.select %15, %16, %17 : vector<1x1x16xi1>, vector<1x1x16xf32>
    %c0 = arith.constant 0 : index
    %c0_1 = arith.constant 0 : index
    %19 = vector.load %arg5[%c0, %c0_1] : memref<8x128xf32, #tpu.memory_space<vmem>>, vector<8x128xf32>
    %c0_2 = arith.constant 0 : index
    %c0_3 = arith.constant 0 : index
    %c0_4 = arith.constant 0 : index
    %20 = vector.load %arg2[%c0_2, %c0_3, %c0_4] : memref<1x16x16xf32, #tpu.memory_space<vmem>>, vector<1x16x16xf32>
    %21 = vector.shape_cast %20 : vector<1x16x16xf32> to vector<16x16xf32>
    %22 = arith.truncf %21 : vector<16x16xf32> to vector<16x16xbf16>
    %c0_5 = arith.constant 0 : index
    %c0_6 = arith.constant 0 : index
    %23 = vector.load %arg4[%c0_5, %c0_6] : memref<16x128xbf16, #tpu.memory_space<vmem>>, vector<16x128xbf16>
    %cst_7 = arith.constant dense<0.000000e+00> : vector<16x128xf32>
    %24 = tpu.matmul %22, %23, %cst_7 {dimension_numbers = #tpu.dot_dimension_numbers<[1], [0], [0], [1], [0, 0, 1, 1], [], []>} : vector<16x16xbf16>, vector<16x128xbf16>, vector<16x128xf32> -> vector<16x128xf32>
    %25 = vector.extract_strided_slice %19 {offsets = [0, 0], sizes = [1, 128], strides = [1, 1]} : vector<8x128xf32> to vector<1x128xf32>
    %26 = vector.broadcast %25 : vector<1x128xf32> to vector<16x128xf32>
    %27 = arith.addf %24, %26 : vector<16x128xf32>
    %c0_8 = arith.constant 0 : index
    %c0_9 = arith.constant 0 : index
    %c0_10 = arith.constant 0 : index
    %28 = vector.load %arg1[%c0_8, %c0_9, %c0_10] : memref<1x16x128xf32, #tpu.memory_space<vmem>>, vector<1x16x128xf32>
    %29 = vector.shape_cast %28 : vector<1x16x128xf32> to vector<16x128xf32>
    %30 = vector.broadcast %12 : vector<16x1xf32> to vector<16x128xf32>
    %31 = arith.mulf %27, %30 : vector<16x128xf32>
    %32 = arith.addf %29, %31 : vector<16x128xf32>
    %c0_11 = arith.constant 0 : index
    %c0_12 = arith.constant 0 : index
    %33 = vector.load %arg3[%c0_11, %c0_12] : memref<16x128xf32, #tpu.memory_space<vmem>>, vector<16x128xf32>
    %34 = arith.addf %32, %33 : vector<16x128xf32>
    %35 = vector.extract_strided_slice %19 {offsets = [1, 0], sizes = [1, 128], strides = [1, 1]} : vector<8x128xf32> to vector<1x128xf32>
    %36 = vector.extract_strided_slice %19 {offsets = [2, 0], sizes = [1, 128], strides = [1, 1]} : vector<8x128xf32> to vector<1x128xf32>
    %cst_13 = arith.constant dense<0.000000e+00> : vector<16xf32>
    %37 = vector.multi_reduction <add>, %34, %cst_13 [1] : vector<16x128xf32> to vector<16xf32>
    %38 = vector.shape_cast %37 : vector<16xf32> to vector<16x1xf32>
    %cst_14 = arith.constant 3.125000e-02 : f32
    %39 = vector.broadcast %cst_14 : f32 to vector<16x1xf32>
    %40 = arith.mulf %38, %39 : vector<16x1xf32>
    %41 = vector.broadcast %40 : vector<16x1xf32> to vector<16x128xf32>
    %42 = arith.subf %34, %41 : vector<16x128xf32>
    %43 = vector.broadcast %4 : vector<1x128xf32> to vector<16x128xf32>
    %44 = arith.mulf %42, %43 : vector<16x128xf32>
    %45 = arith.mulf %44, %44 : vector<16x128xf32>
    %cst_15 = arith.constant dense<0.000000e+00> : vector<16xf32>
    %46 = vector.multi_reduction <add>, %45, %cst_15 [1] : vector<16x128xf32> to vector<16xf32>
    %47 = vector.shape_cast %46 : vector<16xf32> to vector<16x1xf32>
    %cst_16 = arith.constant 3.125000e-02 : f32
    %48 = vector.broadcast %cst_16 : f32 to vector<16x1xf32>
    %49 = arith.mulf %47, %48 : vector<16x1xf32>
    %50 = vector.broadcast %40 : vector<16x1xf32> to vector<16x128xf32>
    %51 = arith.subf %34, %50 : vector<16x128xf32>
    %cst_17 = arith.constant 9.99999996E-13 : f32
    %52 = vector.broadcast %cst_17 : f32 to vector<16x1xf32>
    %53 = arith.addf %49, %52 : vector<16x1xf32>
    %54 = math.rsqrt %53 : vector<16x1xf32>
    %55 = vector.broadcast %54 : vector<16x1xf32> to vector<16x128xf32>
    %56 = arith.mulf %51, %55 : vector<16x128xf32>
    %57 = vector.broadcast %35 : vector<1x128xf32> to vector<16x128xf32>
    %58 = arith.mulf %56, %57 : vector<16x128xf32>
    %59 = vector.broadcast %36 : vector<1x128xf32> to vector<16x128xf32>
    %60 = arith.addf %58, %59 : vector<16x128xf32>
    %c0_18 = arith.constant 0 : index
    %c0_19 = arith.constant 0 : index
    %c0_20 = arith.constant 0 : index
    %61 = vector.load %arg10[%c0_18, %c0_19, %c0_20] : memref<2x16x128xf32, #tpu.memory_space<vmem>>, vector<1x16x128xf32>
    %62 = vector.shape_cast %61 : vector<1x16x128xf32> to vector<16x128xf32>
    %63 = arith.truncf %60 : vector<16x128xf32> to vector<16x128xbf16>
    %c0_21 = arith.constant 0 : index
    %c0_22 = arith.constant 0 : index
    %c0_23 = arith.constant 0 : index
    %64 = vector.load %arg6[%c0_21, %c0_22, %c0_23] : memref<2x128x384xbf16, #tpu.memory_space<vmem>>, vector<1x128x384xbf16>
    %65 = vector.shape_cast %64 : vector<1x128x384xbf16> to vector<128x384xbf16>
    %cst_24 = arith.constant dense<0.000000e+00> : vector<16x384xf32>
    %66 = tpu.matmul %63, %65, %cst_24 {dimension_numbers = #tpu.dot_dimension_numbers<[1], [0], [0], [1], [0, 0, 1, 1], [], []>} : vector<16x128xbf16>, vector<128x384xbf16>, vector<16x384xf32> -> vector<16x384xf32>
    %67 = vector.extract_strided_slice %66 {offsets = [0, 0], sizes = [16, 128], strides = [1, 1]} : vector<16x384xf32> to vector<16x128xf32>
    %68 = vector.extract_strided_slice %62 {offsets = [0, 0], sizes = [1, 128], strides = [1, 1]} : vector<16x128xf32> to vector<1x128xf32>
    %69 = vector.broadcast %68 : vector<1x128xf32> to vector<16x128xf32>
    %70 = arith.addf %67, %69 : vector<16x128xf32>
    %71 = vector.extract_strided_slice %66 {offsets = [0, 128], sizes = [16, 128], strides = [1, 1]} : vector<16x384xf32> to vector<16x128xf32>
    %72 = vector.extract_strided_slice %62 {offsets = [1, 0], sizes = [1, 128], strides = [1, 1]} : vector<16x128xf32> to vector<1x128xf32>
    %73 = vector.broadcast %72 : vector<1x128xf32> to vector<16x128xf32>
    %74 = arith.addf %71, %73 : vector<16x128xf32>
    %75 = vector.extract_strided_slice %66 {offsets = [0, 256], sizes = [16, 128], strides = [1, 1]} : vector<16x384xf32> to vector<16x128xf32>
    %76 = vector.extract_strided_slice %62 {offsets = [2, 0], sizes = [1, 128], strides = [1, 1]} : vector<16x128xf32> to vector<1x128xf32>
    %77 = vector.broadcast %76 : vector<1x128xf32> to vector<16x128xf32>
    %78 = arith.addf %75, %77 : vector<16x128xf32>
    %79 = vector.extract_strided_slice %70 {offsets = [0, 0], sizes = [16, 8], strides = [1, 1]} : vector<16x128xf32> to vector<16x8xf32>
    %80 = vector.extract_strided_slice %70 {offsets = [0, 8], sizes = [16, 8], strides = [1, 1]} : vector<16x128xf32> to vector<16x8xf32>
    %81 = vector.extract_strided_slice %70 {offsets = [0, 16], sizes = [16, 8], strides = [1, 1]} : vector<16x128xf32> to vector<16x8xf32>
    %82 = vector.extract_strided_slice %70 {offsets = [0, 24], sizes = [16, 8], strides = [1, 1]} : vector<16x128xf32> to vector<16x8xf32>
    %83 = vector.shape_cast %79 : vector<16x8xf32> to vector<1x16x8xf32>
    %84 = vector.shape_cast %80 : vector<16x8xf32> to vector<1x16x8xf32>
    %85 = vector.shape_cast %81 : vector<16x8xf32> to vector<1x16x8xf32>
    %86 = vector.shape_cast %82 : vector<16x8xf32> to vector<1x16x8xf32>
    %87 = tpu.concatenate %83, %84, %85, %86 in 0 : vector<1x16x8xf32>, vector<1x16x8xf32>, vector<1x16x8xf32>, vector<1x16x8xf32> -> vector<4x16x8xf32>
    %88 = vector.extract_strided_slice %74 {offsets = [0, 0], sizes = [16, 8], strides = [1, 1]} : vector<16x128xf32> to vector<16x8xf32>
    %89 = vector.extract_strided_slice %74 {offsets = [0, 8], sizes = [16, 8], strides = [1, 1]} : vector<16x128xf32> to vector<16x8xf32>
    %90 = vector.extract_strided_slice %74 {offsets = [0, 16], sizes = [16, 8], strides = [1, 1]} : vector<16x128xf32> to vector<16x8xf32>
    %91 = vector.extract_strided_slice %74 {offsets = [0, 24], sizes = [16, 8], strides = [1, 1]} : vector<16x128xf32> to vector<16x8xf32>
    %92 = vector.shape_cast %88 : vector<16x8xf32> to vector<1x16x8xf32>
    %93 = vector.shape_cast %89 : vector<16x8xf32> to vector<1x16x8xf32>
    %94 = vector.shape_cast %90 : vector<16x8xf32> to vector<1x16x8xf32>
    %95 = vector.shape_cast %91 : vector<16x8xf32> to vector<1x16x8xf32>
    %96 = tpu.concatenate %92, %93, %94, %95 in 0 : vector<1x16x8xf32>, vector<1x16x8xf32>, vector<1x16x8xf32>, vector<1x16x8xf32> -> vector<4x16x8xf32>
    %97 = vector.extract_strided_slice %78 {offsets = [0, 0], sizes = [16, 8], strides = [1, 1]} : vector<16x128xf32> to vector<16x8xf32>
    %98 = vector.extract_strided_slice %78 {offsets = [0, 8], sizes = [16, 8], strides = [1, 1]} : vector<16x128xf32> to vector<16x8xf32>
    %99 = vector.extract_strided_slice %78 {offsets = [0, 16], sizes = [16, 8], strides = [1, 1]} : vector<16x128xf32> to vector<16x8xf32>
    %100 = vector.extract_strided_slice %78 {offsets = [0, 24], sizes = [16, 8], strides = [1, 1]} : vector<16x128xf32> to vector<16x8xf32>
    %101 = vector.shape_cast %97 : vector<16x8xf32> to vector<1x16x8xf32>
    %102 = vector.shape_cast %98 : vector<16x8xf32> to vector<1x16x8xf32>
    %103 = vector.shape_cast %99 : vector<16x8xf32> to vector<1x16x8xf32>
    %104 = vector.shape_cast %100 : vector<16x8xf32> to vector<1x16x8xf32>
    %105 = tpu.concatenate %101, %102, %103, %104 in 0 : vector<1x16x8xf32>, vector<1x16x8xf32>, vector<1x16x8xf32>, vector<1x16x8xf32> -> vector<4x16x8xf32>
    "tpu.trace_start"() <{level = 10 : i32, message = "hqd,hkd->hqk"}> : () -> ()
    %cst_25 = arith.constant dense<0.000000e+00> : vector<4x16x16xf32>
    %106 = tpu.matmul %87, %96, %cst_25 {dimension_numbers = #tpu.dot_dimension_numbers<[2], [2], [1], [1], [0, 0, 0, 1, 1, 1], [0], [0]>} : vector<4x16x8xf32>, vector<4x16x8xf32>, vector<4x16x16xf32> -> vector<4x16x16xf32>
    "tpu.trace_stop"() : () -> ()
    %cst_26 = arith.constant 0.353553385 : f32
    %107 = vector.broadcast %cst_26 : f32 to vector<4x16x16xf32>
    %108 = arith.mulf %106, %107 : vector<4x16x16xf32>
    %109 = vector.broadcast %18 : vector<1x1x16xf32> to vector<4x16x16xf32>
    %110 = arith.addf %108, %109 : vector<4x16x16xf32>
    %cst_27 = arith.constant dense<0xFF800000> : vector<4x16xf32>
    %111 = vector.multi_reduction <maximumf>, %110, %cst_27 [2] : vector<4x16x16xf32> to vector<4x16xf32>
    %112 = vector.shape_cast %111 : vector<4x16xf32> to vector<4x16x1xf32>
    %113 = vector.broadcast %112 : vector<4x16x1xf32> to vector<4x16x16xf32>
    %114 = arith.subf %110, %113 : vector<4x16x16xf32>
    %115 = math.exp %114 : vector<4x16x16xf32>
    %cst_28 = arith.constant dense<0.000000e+00> : vector<4x16xf32>
    %116 = vector.multi_reduction <add>, %115, %cst_28 [2] : vector<4x16x16xf32> to vector<4x16xf32>
    %117 = vector.shape_cast %116 : vector<4x16xf32> to vector<4x16x1xf32>
    %118 = tpu.reciprocal %117 {approx = true} : vector<4x16x1xf32> -> vector<4x16x1xf32>
    %119 = vector.broadcast %118 : vector<4x16x1xf32> to vector<4x16x16xf32>
    %120 = arith.mulf %115, %119 : vector<4x16x16xf32>
    "tpu.trace_start"() <{level = 10 : i32, message = "hqk,hkd->hqd"}> : () -> ()
    %cst_29 = arith.constant dense<0.000000e+00> : vector<4x16x8xf32>
    %121 = tpu.matmul %120, %105, %cst_29 {dimension_numbers = #tpu.dot_dimension_numbers<[2], [1], [1], [2], [0, 0, 0, 1, 1, 2], [0], [0]>} : vector<4x16x16xf32>, vector<4x16x8xf32>, vector<4x16x8xf32> -> vector<4x16x8xf32>
    "tpu.trace_stop"() : () -> ()
    %122 = vector.extract_strided_slice %121 {offsets = [0, 0, 0], sizes = [1, 16, 8], strides = [1, 1, 1]} : vector<4x16x8xf32> to vector<1x16x8xf32>
    %123 = vector.shape_cast %122 : vector<1x16x8xf32> to vector<16x8xf32>
    %124 = vector.extract_strided_slice %121 {offsets = [1, 0, 0], sizes = [1, 16, 8], strides = [1, 1, 1]} : vector<4x16x8xf32> to vector<1x16x8xf32>
    %125 = vector.shape_cast %124 : vector<1x16x8xf32> to vector<16x8xf32>
    %126 = vector.extract_strided_slice %121 {offsets = [2, 0, 0], sizes = [1, 16, 8], strides = [1, 1, 1]} : vector<4x16x8xf32> to vector<1x16x8xf32>
    %127 = vector.shape_cast %126 : vector<1x16x8xf32> to vector<16x8xf32>
    %128 = vector.extract_strided_slice %121 {offsets = [3, 0, 0], sizes = [1, 16, 8], strides = [1, 1, 1]} : vector<4x16x8xf32> to vector<1x16x8xf32>
    %129 = vector.shape_cast %128 : vector<1x16x8xf32> to vector<16x8xf32>
    %130 = tpu.concatenate %123, %125, %127, %129 in 1 : vector<16x8xf32>, vector<16x8xf32>, vector<16x8xf32>, vector<16x8xf32> -> vector<16x32xf32>
    %131 = arith.truncf %130 : vector<16x32xf32> to vector<16x32xbf16>
    %c0_30 = arith.constant 0 : index
    %c0_31 = arith.constant 0 : index
    %c0_32 = arith.constant 0 : index
    %132 = vector.load %arg7[%c0_30, %c0_31, %c0_32] : memref<2x32x128xbf16, #tpu.memory_space<vmem>>, vector<1x32x128xbf16>
    %133 = vector.shape_cast %132 : vector<1x32x128xbf16> to vector<32x128xbf16>
    %cst_33 = arith.constant dense<0.000000e+00> : vector<16x128xf32>
    %134 = tpu.matmul %131, %133, %cst_33 {dimension_numbers = #tpu.dot_dimension_numbers<[1], [0], [0], [1], [0, 0, 1, 1], [], []>} : vector<16x32xbf16>, vector<32x128xbf16>, vector<16x128xf32> -> vector<16x128xf32>
    %135 = vector.extract_strided_slice %62 {offsets = [3, 0], sizes = [1, 128], strides = [1, 1]} : vector<16x128xf32> to vector<1x128xf32>
    %136 = vector.broadcast %135 : vector<1x128xf32> to vector<16x128xf32>
    %137 = arith.addf %134, %136 : vector<16x128xf32>
    %138 = arith.addf %60, %137 : vector<16x128xf32>
    %139 = vector.extract_strided_slice %62 {offsets = [4, 0], sizes = [1, 128], strides = [1, 1]} : vector<16x128xf32> to vector<1x128xf32>
    %140 = vector.extract_strided_slice %62 {offsets = [5, 0], sizes = [1, 128], strides = [1, 1]} : vector<16x128xf32> to vector<1x128xf32>
    %cst_34 = arith.constant dense<0.000000e+00> : vector<16xf32>
    %141 = vector.multi_reduction <add>, %138, %cst_34 [1] : vector<16x128xf32> to vector<16xf32>
    %142 = vector.shape_cast %141 : vector<16xf32> to vector<16x1xf32>
    %cst_35 = arith.constant 3.125000e-02 : f32
    %143 = vector.broadcast %cst_35 : f32 to vector<16x1xf32>
    %144 = arith.mulf %142, %143 : vector<16x1xf32>
    %145 = vector.broadcast %144 : vector<16x1xf32> to vector<16x128xf32>
    %146 = arith.subf %138, %145 : vector<16x128xf32>
    %147 = vector.broadcast %4 : vector<1x128xf32> to vector<16x128xf32>
    %148 = arith.mulf %146, %147 : vector<16x128xf32>
    %149 = arith.mulf %148, %148 : vector<16x128xf32>
    %cst_36 = arith.constant dense<0.000000e+00> : vector<16xf32>
    %150 = vector.multi_reduction <add>, %149, %cst_36 [1] : vector<16x128xf32> to vector<16xf32>
    %151 = vector.shape_cast %150 : vector<16xf32> to vector<16x1xf32>
    %cst_37 = arith.constant 3.125000e-02 : f32
    %152 = vector.broadcast %cst_37 : f32 to vector<16x1xf32>
    %153 = arith.mulf %151, %152 : vector<16x1xf32>
    %154 = vector.broadcast %144 : vector<16x1xf32> to vector<16x128xf32>
    %155 = arith.subf %138, %154 : vector<16x128xf32>
    %cst_38 = arith.constant 9.99999996E-13 : f32
    %156 = vector.broadcast %cst_38 : f32 to vector<16x1xf32>
    %157 = arith.addf %153, %156 : vector<16x1xf32>
    %158 = math.rsqrt %157 : vector<16x1xf32>
    %159 = vector.broadcast %158 : vector<16x1xf32> to vector<16x128xf32>
    %160 = arith.mulf %155, %159 : vector<16x128xf32>
    %161 = vector.broadcast %139 : vector<1x128xf32> to vector<16x128xf32>
    %162 = arith.mulf %160, %161 : vector<16x128xf32>
    %163 = vector.broadcast %140 : vector<1x128xf32> to vector<16x128xf32>
    %164 = arith.addf %162, %163 : vector<16x128xf32>
    %165 = arith.truncf %164 : vector<16x128xf32> to vector<16x128xbf16>
    %c0_39 = arith.constant 0 : index
    %c0_40 = arith.constant 0 : index
    %c0_41 = arith.constant 0 : index
    %166 = vector.load %arg8[%c0_39, %c0_40, %c0_41] : memref<2x128x128xbf16, #tpu.memory_space<vmem>>, vector<1x128x128xbf16>
    %167 = vector.shape_cast %166 : vector<1x128x128xbf16> to vector<128x128xbf16>
    %cst_42 = arith.constant dense<0.000000e+00> : vector<16x128xf32>
    %168 = tpu.matmul %165, %167, %cst_42 {dimension_numbers = #tpu.dot_dimension_numbers<[1], [0], [0], [1], [0, 0, 1, 1], [], []>} : vector<16x128xbf16>, vector<128x128xbf16>, vector<16x128xf32> -> vector<16x128xf32>
    %169 = vector.extract_strided_slice %62 {offsets = [6, 0], sizes = [1, 128], strides = [1, 1]} : vector<16x128xf32> to vector<1x128xf32>
    %170 = vector.broadcast %169 : vector<1x128xf32> to vector<16x128xf32>
    %171 = arith.addf %168, %170 : vector<16x128xf32>
    %172 = arith.mulf %171, %171 : vector<16x128xf32>
    %173 = arith.mulf %171, %172 : vector<16x128xf32>
    %cst_43 = arith.constant 4.471500e-02 : f32
    %174 = vector.broadcast %cst_43 : f32 to vector<16x128xf32>
    %175 = arith.mulf %174, %173 : vector<16x128xf32>
    %176 = arith.addf %171, %175 : vector<16x128xf32>
    %cst_44 = arith.constant 0.797884583 : f32
    %177 = vector.broadcast %cst_44 : f32 to vector<16x128xf32>
    %178 = arith.mulf %177, %176 : vector<16x128xf32>
    %179 = math.tanh %178 : vector<16x128xf32>
    %cst_45 = arith.constant 1.000000e+00 : f32
    %180 = vector.broadcast %cst_45 : f32 to vector<16x128xf32>
    %181 = arith.addf %180, %179 : vector<16x128xf32>
    %cst_46 = arith.constant 5.000000e-01 : f32
    %182 = vector.broadcast %cst_46 : f32 to vector<16x128xf32>
    %183 = arith.mulf %182, %181 : vector<16x128xf32>
    %184 = arith.mulf %171, %183 : vector<16x128xf32>
    %185 = arith.truncf %184 : vector<16x128xf32> to vector<16x128xbf16>
    %c0_47 = arith.constant 0 : index
    %c0_48 = arith.constant 0 : index
    %c0_49 = arith.constant 0 : index
    %186 = vector.load %arg9[%c0_47, %c0_48, %c0_49] : memref<2x128x128xbf16, #tpu.memory_space<vmem>>, vector<1x128x128xbf16>
    %187 = vector.shape_cast %186 : vector<1x128x128xbf16> to vector<128x128xbf16>
    %cst_50 = arith.constant dense<0.000000e+00> : vector<16x128xf32>
    %188 = tpu.matmul %185, %187, %cst_50 {dimension_numbers = #tpu.dot_dimension_numbers<[1], [0], [0], [1], [0, 0, 1, 1], [], []>} : vector<16x128xbf16>, vector<128x128xbf16>, vector<16x128xf32> -> vector<16x128xf32>
    %189 = vector.extract_strided_slice %62 {offsets = [7, 0], sizes = [1, 128], strides = [1, 1]} : vector<16x128xf32> to vector<1x128xf32>
    %190 = vector.broadcast %189 : vector<1x128xf32> to vector<16x128xf32>
    %191 = arith.addf %188, %190 : vector<16x128xf32>
    %192 = arith.addf %164, %191 : vector<16x128xf32>
    %193 = vector.extract_strided_slice %62 {offsets = [8, 0], sizes = [1, 128], strides = [1, 1]} : vector<16x128xf32> to vector<1x128xf32>
    %194 = vector.extract_strided_slice %62 {offsets = [9, 0], sizes = [1, 128], strides = [1, 1]} : vector<16x128xf32> to vector<1x128xf32>
    %cst_51 = arith.constant dense<0.000000e+00> : vector<16xf32>
    %195 = vector.multi_reduction <add>, %192, %cst_51 [1] : vector<16x128xf32> to vector<16xf32>
    %196 = vector.shape_cast %195 : vector<16xf32> to vector<16x1xf32>
    %cst_52 = arith.constant 3.125000e-02 : f32
    %197 = vector.broadcast %cst_52 : f32 to vector<16x1xf32>
    %198 = arith.mulf %196, %197 : vector<16x1xf32>
    %199 = vector.broadcast %198 : vector<16x1xf32> to vector<16x128xf32>
    %200 = arith.subf %192, %199 : vector<16x128xf32>
    %201 = vector.broadcast %4 : vector<1x128xf32> to vector<16x128xf32>
    %202 = arith.mulf %200, %201 : vector<16x128xf32>
    %203 = arith.mulf %202, %202 : vector<16x128xf32>
    %cst_53 = arith.constant dense<0.000000e+00> : vector<16xf32>
    %204 = vector.multi_reduction <add>, %203, %cst_53 [1] : vector<16x128xf32> to vector<16xf32>
    %205 = vector.shape_cast %204 : vector<16xf32> to vector<16x1xf32>
    %cst_54 = arith.constant 3.125000e-02 : f32
    %206 = vector.broadcast %cst_54 : f32 to vector<16x1xf32>
    %207 = arith.mulf %205, %206 : vector<16x1xf32>
    %208 = vector.broadcast %198 : vector<16x1xf32> to vector<16x128xf32>
    %209 = arith.subf %192, %208 : vector<16x128xf32>
    %cst_55 = arith.constant 9.99999996E-13 : f32
    %210 = vector.broadcast %cst_55 : f32 to vector<16x1xf32>
    %211 = arith.addf %207, %210 : vector<16x1xf32>
    %212 = math.rsqrt %211 : vector<16x1xf32>
    %213 = vector.broadcast %212 : vector<16x1xf32> to vector<16x128xf32>
    %214 = arith.mulf %209, %213 : vector<16x128xf32>
    %215 = vector.broadcast %193 : vector<1x128xf32> to vector<16x128xf32>
    %216 = arith.mulf %214, %215 : vector<16x128xf32>
    %217 = vector.broadcast %194 : vector<1x128xf32> to vector<16x128xf32>
    %218 = arith.addf %216, %217 : vector<16x128xf32>
    %c1 = arith.constant 1 : index
    %c0_56 = arith.constant 0 : index
    %c0_57 = arith.constant 0 : index
    %219 = vector.load %arg10[%c1, %c0_56, %c0_57] : memref<2x16x128xf32, #tpu.memory_space<vmem>>, vector<1x16x128xf32>
    %220 = vector.shape_cast %219 : vector<1x16x128xf32> to vector<16x128xf32>
    %221 = arith.truncf %218 : vector<16x128xf32> to vector<16x128xbf16>
    %c1_58 = arith.constant 1 : index
    %c0_59 = arith.constant 0 : index
    %c0_60 = arith.constant 0 : index
    %222 = vector.load %arg6[%c1_58, %c0_59, %c0_60] : memref<2x128x384xbf16, #tpu.memory_space<vmem>>, vector<1x128x384xbf16>
    %223 = vector.shape_cast %222 : vector<1x128x384xbf16> to vector<128x384xbf16>
    %cst_61 = arith.constant dense<0.000000e+00> : vector<16x384xf32>
    %224 = tpu.matmul %221, %223, %cst_61 {dimension_numbers = #tpu.dot_dimension_numbers<[1], [0], [0], [1], [0, 0, 1, 1], [], []>} : vector<16x128xbf16>, vector<128x384xbf16>, vector<16x384xf32> -> vector<16x384xf32>
    %225 = vector.extract_strided_slice %224 {offsets = [0, 0], sizes = [16, 128], strides = [1, 1]} : vector<16x384xf32> to vector<16x128xf32>
    %226 = vector.extract_strided_slice %220 {offsets = [0, 0], sizes = [1, 128], strides = [1, 1]} : vector<16x128xf32> to vector<1x128xf32>
    %227 = vector.broadcast %226 : vector<1x128xf32> to vector<16x128xf32>
    %228 = arith.addf %225, %227 : vector<16x128xf32>
    %229 = vector.extract_strided_slice %224 {offsets = [0, 128], sizes = [16, 128], strides = [1, 1]} : vector<16x384xf32> to vector<16x128xf32>
    %230 = vector.extract_strided_slice %220 {offsets = [1, 0], sizes = [1, 128], strides = [1, 1]} : vector<16x128xf32> to vector<1x128xf32>
    %231 = vector.broadcast %230 : vector<1x128xf32> to vector<16x128xf32>
    %232 = arith.addf %229, %231 : vector<16x128xf32>
    %233 = vector.extract_strided_slice %224 {offsets = [0, 256], sizes = [16, 128], strides = [1, 1]} : vector<16x384xf32> to vector<16x128xf32>
    %234 = vector.extract_strided_slice %220 {offsets = [2, 0], sizes = [1, 128], strides = [1, 1]} : vector<16x128xf32> to vector<1x128xf32>
    %235 = vector.broadcast %234 : vector<1x128xf32> to vector<16x128xf32>
    %236 = arith.addf %233, %235 : vector<16x128xf32>
    %237 = vector.extract_strided_slice %228 {offsets = [0, 0], sizes = [16, 8], strides = [1, 1]} : vector<16x128xf32> to vector<16x8xf32>
    %238 = vector.extract_strided_slice %228 {offsets = [0, 8], sizes = [16, 8], strides = [1, 1]} : vector<16x128xf32> to vector<16x8xf32>
    %239 = vector.extract_strided_slice %228 {offsets = [0, 16], sizes = [16, 8], strides = [1, 1]} : vector<16x128xf32> to vector<16x8xf32>
    %240 = vector.extract_strided_slice %228 {offsets = [0, 24], sizes = [16, 8], strides = [1, 1]} : vector<16x128xf32> to vector<16x8xf32>
    %241 = vector.shape_cast %237 : vector<16x8xf32> to vector<1x16x8xf32>
    %242 = vector.shape_cast %238 : vector<16x8xf32> to vector<1x16x8xf32>
    %243 = vector.shape_cast %239 : vector<16x8xf32> to vector<1x16x8xf32>
    %244 = vector.shape_cast %240 : vector<16x8xf32> to vector<1x16x8xf32>
    %245 = tpu.concatenate %241, %242, %243, %244 in 0 : vector<1x16x8xf32>, vector<1x16x8xf32>, vector<1x16x8xf32>, vector<1x16x8xf32> -> vector<4x16x8xf32>
    %246 = vector.extract_strided_slice %232 {offsets = [0, 0], sizes = [16, 8], strides = [1, 1]} : vector<16x128xf32> to vector<16x8xf32>
    %247 = vector.extract_strided_slice %232 {offsets = [0, 8], sizes = [16, 8], strides = [1, 1]} : vector<16x128xf32> to vector<16x8xf32>
    %248 = vector.extract_strided_slice %232 {offsets = [0, 16], sizes = [16, 8], strides = [1, 1]} : vector<16x128xf32> to vector<16x8xf32>
    %249 = vector.extract_strided_slice %232 {offsets = [0, 24], sizes = [16, 8], strides = [1, 1]} : vector<16x128xf32> to vector<16x8xf32>
    %250 = vector.shape_cast %246 : vector<16x8xf32> to vector<1x16x8xf32>
    %251 = vector.shape_cast %247 : vector<16x8xf32> to vector<1x16x8xf32>
    %252 = vector.shape_cast %248 : vector<16x8xf32> to vector<1x16x8xf32>
    %253 = vector.shape_cast %249 : vector<16x8xf32> to vector<1x16x8xf32>
    %254 = tpu.concatenate %250, %251, %252, %253 in 0 : vector<1x16x8xf32>, vector<1x16x8xf32>, vector<1x16x8xf32>, vector<1x16x8xf32> -> vector<4x16x8xf32>
    %255 = vector.extract_strided_slice %236 {offsets = [0, 0], sizes = [16, 8], strides = [1, 1]} : vector<16x128xf32> to vector<16x8xf32>
    %256 = vector.extract_strided_slice %236 {offsets = [0, 8], sizes = [16, 8], strides = [1, 1]} : vector<16x128xf32> to vector<16x8xf32>
    %257 = vector.extract_strided_slice %236 {offsets = [0, 16], sizes = [16, 8], strides = [1, 1]} : vector<16x128xf32> to vector<16x8xf32>
    %258 = vector.extract_strided_slice %236 {offsets = [0, 24], sizes = [16, 8], strides = [1, 1]} : vector<16x128xf32> to vector<16x8xf32>
    %259 = vector.shape_cast %255 : vector<16x8xf32> to vector<1x16x8xf32>
    %260 = vector.shape_cast %256 : vector<16x8xf32> to vector<1x16x8xf32>
    %261 = vector.shape_cast %257 : vector<16x8xf32> to vector<1x16x8xf32>
    %262 = vector.shape_cast %258 : vector<16x8xf32> to vector<1x16x8xf32>
    %263 = tpu.concatenate %259, %260, %261, %262 in 0 : vector<1x16x8xf32>, vector<1x16x8xf32>, vector<1x16x8xf32>, vector<1x16x8xf32> -> vector<4x16x8xf32>
    "tpu.trace_start"() <{level = 10 : i32, message = "hqd,hkd->hqk"}> : () -> ()
    %cst_62 = arith.constant dense<0.000000e+00> : vector<4x16x16xf32>
    %264 = tpu.matmul %245, %254, %cst_62 {dimension_numbers = #tpu.dot_dimension_numbers<[2], [2], [1], [1], [0, 0, 0, 1, 1, 1], [0], [0]>} : vector<4x16x8xf32>, vector<4x16x8xf32>, vector<4x16x16xf32> -> vector<4x16x16xf32>
    "tpu.trace_stop"() : () -> ()
    %cst_63 = arith.constant 0.353553385 : f32
    %265 = vector.broadcast %cst_63 : f32 to vector<4x16x16xf32>
    %266 = arith.mulf %264, %265 : vector<4x16x16xf32>
    %267 = vector.broadcast %18 : vector<1x1x16xf32> to vector<4x16x16xf32>
    %268 = arith.addf %266, %267 : vector<4x16x16xf32>
    %cst_64 = arith.constant dense<0xFF800000> : vector<4x16xf32>
    %269 = vector.multi_reduction <maximumf>, %268, %cst_64 [2] : vector<4x16x16xf32> to vector<4x16xf32>
    %270 = vector.shape_cast %269 : vector<4x16xf32> to vector<4x16x1xf32>
    %271 = vector.broadcast %270 : vector<4x16x1xf32> to vector<4x16x16xf32>
    %272 = arith.subf %268, %271 : vector<4x16x16xf32>
    %273 = math.exp %272 : vector<4x16x16xf32>
    %cst_65 = arith.constant dense<0.000000e+00> : vector<4x16xf32>
    %274 = vector.multi_reduction <add>, %273, %cst_65 [2] : vector<4x16x16xf32> to vector<4x16xf32>
    %275 = vector.shape_cast %274 : vector<4x16xf32> to vector<4x16x1xf32>
    %276 = tpu.reciprocal %275 {approx = true} : vector<4x16x1xf32> -> vector<4x16x1xf32>
    %277 = vector.broadcast %276 : vector<4x16x1xf32> to vector<4x16x16xf32>
    %278 = arith.mulf %273, %277 : vector<4x16x16xf32>
    "tpu.trace_start"() <{level = 10 : i32, message = "hqk,hkd->hqd"}> : () -> ()
    %cst_66 = arith.constant dense<0.000000e+00> : vector<4x16x8xf32>
    %279 = tpu.matmul %278, %263, %cst_66 {dimension_numbers = #tpu.dot_dimension_numbers<[2], [1], [1], [2], [0, 0, 0, 1, 1, 2], [0], [0]>} : vector<4x16x16xf32>, vector<4x16x8xf32>, vector<4x16x8xf32> -> vector<4x16x8xf32>
    "tpu.trace_stop"() : () -> ()
    %280 = vector.extract_strided_slice %279 {offsets = [0, 0, 0], sizes = [1, 16, 8], strides = [1, 1, 1]} : vector<4x16x8xf32> to vector<1x16x8xf32>
    %281 = vector.shape_cast %280 : vector<1x16x8xf32> to vector<16x8xf32>
    %282 = vector.extract_strided_slice %279 {offsets = [1, 0, 0], sizes = [1, 16, 8], strides = [1, 1, 1]} : vector<4x16x8xf32> to vector<1x16x8xf32>
    %283 = vector.shape_cast %282 : vector<1x16x8xf32> to vector<16x8xf32>
    %284 = vector.extract_strided_slice %279 {offsets = [2, 0, 0], sizes = [1, 16, 8], strides = [1, 1, 1]} : vector<4x16x8xf32> to vector<1x16x8xf32>
    %285 = vector.shape_cast %284 : vector<1x16x8xf32> to vector<16x8xf32>
    %286 = vector.extract_strided_slice %279 {offsets = [3, 0, 0], sizes = [1, 16, 8], strides = [1, 1, 1]} : vector<4x16x8xf32> to vector<1x16x8xf32>
    %287 = vector.shape_cast %286 : vector<1x16x8xf32> to vector<16x8xf32>
    %288 = tpu.concatenate %281, %283, %285, %287 in 1 : vector<16x8xf32>, vector<16x8xf32>, vector<16x8xf32>, vector<16x8xf32> -> vector<16x32xf32>
    %289 = arith.truncf %288 : vector<16x32xf32> to vector<16x32xbf16>
    %c1_67 = arith.constant 1 : index
    %c0_68 = arith.constant 0 : index
    %c0_69 = arith.constant 0 : index
    %290 = vector.load %arg7[%c1_67, %c0_68, %c0_69] : memref<2x32x128xbf16, #tpu.memory_space<vmem>>, vector<1x32x128xbf16>
    %291 = vector.shape_cast %290 : vector<1x32x128xbf16> to vector<32x128xbf16>
    %cst_70 = arith.constant dense<0.000000e+00> : vector<16x128xf32>
    %292 = tpu.matmul %289, %291, %cst_70 {dimension_numbers = #tpu.dot_dimension_numbers<[1], [0], [0], [1], [0, 0, 1, 1], [], []>} : vector<16x32xbf16>, vector<32x128xbf16>, vector<16x128xf32> -> vector<16x128xf32>
    %293 = vector.extract_strided_slice %220 {offsets = [3, 0], sizes = [1, 128], strides = [1, 1]} : vector<16x128xf32> to vector<1x128xf32>
    %294 = vector.broadcast %293 : vector<1x128xf32> to vector<16x128xf32>
    %295 = arith.addf %292, %294 : vector<16x128xf32>
    %296 = arith.addf %218, %295 : vector<16x128xf32>
    %297 = vector.extract_strided_slice %220 {offsets = [4, 0], sizes = [1, 128], strides = [1, 1]} : vector<16x128xf32> to vector<1x128xf32>
    %298 = vector.extract_strided_slice %220 {offsets = [5, 0], sizes = [1, 128], strides = [1, 1]} : vector<16x128xf32> to vector<1x128xf32>
    %cst_71 = arith.constant dense<0.000000e+00> : vector<16xf32>
    %299 = vector.multi_reduction <add>, %296, %cst_71 [1] : vector<16x128xf32> to vector<16xf32>
    %300 = vector.shape_cast %299 : vector<16xf32> to vector<16x1xf32>
    %cst_72 = arith.constant 3.125000e-02 : f32
    %301 = vector.broadcast %cst_72 : f32 to vector<16x1xf32>
    %302 = arith.mulf %300, %301 : vector<16x1xf32>
    %303 = vector.broadcast %302 : vector<16x1xf32> to vector<16x128xf32>
    %304 = arith.subf %296, %303 : vector<16x128xf32>
    %305 = vector.broadcast %4 : vector<1x128xf32> to vector<16x128xf32>
    %306 = arith.mulf %304, %305 : vector<16x128xf32>
    %307 = arith.mulf %306, %306 : vector<16x128xf32>
    %cst_73 = arith.constant dense<0.000000e+00> : vector<16xf32>
    %308 = vector.multi_reduction <add>, %307, %cst_73 [1] : vector<16x128xf32> to vector<16xf32>
    %309 = vector.shape_cast %308 : vector<16xf32> to vector<16x1xf32>
    %cst_74 = arith.constant 3.125000e-02 : f32
    %310 = vector.broadcast %cst_74 : f32 to vector<16x1xf32>
    %311 = arith.mulf %309, %310 : vector<16x1xf32>
    %312 = vector.broadcast %302 : vector<16x1xf32> to vector<16x128xf32>
    %313 = arith.subf %296, %312 : vector<16x128xf32>
    %cst_75 = arith.constant 9.99999996E-13 : f32
    %314 = vector.broadcast %cst_75 : f32 to vector<16x1xf32>
    %315 = arith.addf %311, %314 : vector<16x1xf32>
    %316 = math.rsqrt %315 : vector<16x1xf32>
    %317 = vector.broadcast %316 : vector<16x1xf32> to vector<16x128xf32>
    %318 = arith.mulf %313, %317 : vector<16x128xf32>
    %319 = vector.broadcast %297 : vector<1x128xf32> to vector<16x128xf32>
    %320 = arith.mulf %318, %319 : vector<16x128xf32>
    %321 = vector.broadcast %298 : vector<1x128xf32> to vector<16x128xf32>
    %322 = arith.addf %320, %321 : vector<16x128xf32>
    %323 = arith.truncf %322 : vector<16x128xf32> to vector<16x128xbf16>
    %c1_76 = arith.constant 1 : index
    %c0_77 = arith.constant 0 : index
    %c0_78 = arith.constant 0 : index
    %324 = vector.load %arg8[%c1_76, %c0_77, %c0_78] : memref<2x128x128xbf16, #tpu.memory_space<vmem>>, vector<1x128x128xbf16>
    %325 = vector.shape_cast %324 : vector<1x128x128xbf16> to vector<128x128xbf16>
    %cst_79 = arith.constant dense<0.000000e+00> : vector<16x128xf32>
    %326 = tpu.matmul %323, %325, %cst_79 {dimension_numbers = #tpu.dot_dimension_numbers<[1], [0], [0], [1], [0, 0, 1, 1], [], []>} : vector<16x128xbf16>, vector<128x128xbf16>, vector<16x128xf32> -> vector<16x128xf32>
    %327 = vector.extract_strided_slice %220 {offsets = [6, 0], sizes = [1, 128], strides = [1, 1]} : vector<16x128xf32> to vector<1x128xf32>
    %328 = vector.broadcast %327 : vector<1x128xf32> to vector<16x128xf32>
    %329 = arith.addf %326, %328 : vector<16x128xf32>
    %330 = arith.mulf %329, %329 : vector<16x128xf32>
    %331 = arith.mulf %329, %330 : vector<16x128xf32>
    %cst_80 = arith.constant 4.471500e-02 : f32
    %332 = vector.broadcast %cst_80 : f32 to vector<16x128xf32>
    %333 = arith.mulf %332, %331 : vector<16x128xf32>
    %334 = arith.addf %329, %333 : vector<16x128xf32>
    %cst_81 = arith.constant 0.797884583 : f32
    %335 = vector.broadcast %cst_81 : f32 to vector<16x128xf32>
    %336 = arith.mulf %335, %334 : vector<16x128xf32>
    %337 = math.tanh %336 : vector<16x128xf32>
    %cst_82 = arith.constant 1.000000e+00 : f32
    %338 = vector.broadcast %cst_82 : f32 to vector<16x128xf32>
    %339 = arith.addf %338, %337 : vector<16x128xf32>
    %cst_83 = arith.constant 5.000000e-01 : f32
    %340 = vector.broadcast %cst_83 : f32 to vector<16x128xf32>
    %341 = arith.mulf %340, %339 : vector<16x128xf32>
    %342 = arith.mulf %329, %341 : vector<16x128xf32>
    %343 = arith.truncf %342 : vector<16x128xf32> to vector<16x128xbf16>
    %c1_84 = arith.constant 1 : index
    %c0_85 = arith.constant 0 : index
    %c0_86 = arith.constant 0 : index
    %344 = vector.load %arg9[%c1_84, %c0_85, %c0_86] : memref<2x128x128xbf16, #tpu.memory_space<vmem>>, vector<1x128x128xbf16>
    %345 = vector.shape_cast %344 : vector<1x128x128xbf16> to vector<128x128xbf16>
    %cst_87 = arith.constant dense<0.000000e+00> : vector<16x128xf32>
    %346 = tpu.matmul %343, %345, %cst_87 {dimension_numbers = #tpu.dot_dimension_numbers<[1], [0], [0], [1], [0, 0, 1, 1], [], []>} : vector<16x128xbf16>, vector<128x128xbf16>, vector<16x128xf32> -> vector<16x128xf32>
    %347 = vector.extract_strided_slice %220 {offsets = [7, 0], sizes = [1, 128], strides = [1, 1]} : vector<16x128xf32> to vector<1x128xf32>
    %348 = vector.broadcast %347 : vector<1x128xf32> to vector<16x128xf32>
    %349 = arith.addf %346, %348 : vector<16x128xf32>
    %350 = arith.addf %322, %349 : vector<16x128xf32>
    %351 = vector.extract_strided_slice %220 {offsets = [8, 0], sizes = [1, 128], strides = [1, 1]} : vector<16x128xf32> to vector<1x128xf32>
    %352 = vector.extract_strided_slice %220 {offsets = [9, 0], sizes = [1, 128], strides = [1, 1]} : vector<16x128xf32> to vector<1x128xf32>
    %cst_88 = arith.constant dense<0.000000e+00> : vector<16xf32>
    %353 = vector.multi_reduction <add>, %350, %cst_88 [1] : vector<16x128xf32> to vector<16xf32>
    %354 = vector.shape_cast %353 : vector<16xf32> to vector<16x1xf32>
    %cst_89 = arith.constant 3.125000e-02 : f32
    %355 = vector.broadcast %cst_89 : f32 to vector<16x1xf32>
    %356 = arith.mulf %354, %355 : vector<16x1xf32>
    %357 = vector.broadcast %356 : vector<16x1xf32> to vector<16x128xf32>
    %358 = arith.subf %350, %357 : vector<16x128xf32>
    %359 = vector.broadcast %4 : vector<1x128xf32> to vector<16x128xf32>
    %360 = arith.mulf %358, %359 : vector<16x128xf32>
    %361 = arith.mulf %360, %360 : vector<16x128xf32>
    %cst_90 = arith.constant dense<0.000000e+00> : vector<16xf32>
    %362 = vector.multi_reduction <add>, %361, %cst_90 [1] : vector<16x128xf32> to vector<16xf32>
    %363 = vector.shape_cast %362 : vector<16xf32> to vector<16x1xf32>
    %cst_91 = arith.constant 3.125000e-02 : f32
    %364 = vector.broadcast %cst_91 : f32 to vector<16x1xf32>
    %365 = arith.mulf %363, %364 : vector<16x1xf32>
    %366 = vector.broadcast %356 : vector<16x1xf32> to vector<16x128xf32>
    %367 = arith.subf %350, %366 : vector<16x128xf32>
    %cst_92 = arith.constant 9.99999996E-13 : f32
    %368 = vector.broadcast %cst_92 : f32 to vector<16x1xf32>
    %369 = arith.addf %365, %368 : vector<16x1xf32>
    %370 = math.rsqrt %369 : vector<16x1xf32>
    %371 = vector.broadcast %370 : vector<16x1xf32> to vector<16x128xf32>
    %372 = arith.mulf %367, %371 : vector<16x128xf32>
    %373 = vector.broadcast %351 : vector<1x128xf32> to vector<16x128xf32>
    %374 = arith.mulf %372, %373 : vector<16x128xf32>
    %375 = vector.broadcast %352 : vector<1x128xf32> to vector<16x128xf32>
    %376 = arith.addf %374, %375 : vector<16x128xf32>
    %c0_93 = arith.constant 0 : index
    %c0_94 = arith.constant 0 : index
    %c0_95 = arith.constant 0 : index
    %377 = vector.load %arg11[%c0_93, %c0_94, %c0_95] : memref<1x16x128xf32, #tpu.memory_space<vmem>>, vector<1x16x128xf32>
    %378 = vector.shape_cast %377 : vector<1x16x128xf32> to vector<16x128xf32>
    %379 = vector.shape_cast %376 : vector<16x128xf32> to vector<1x16x128xf32>
    tpu.vector_store %arg11[%c0_93, %c0_94, %c0_95], %379 {strides = array<i32>} : memref<1x16x128xf32, #tpu.memory_space<vmem>>, vector<1x16x128xf32>,
    return
  }
  func.func @transform_0(%arg0: i32) -> (i32, i32, i32) {
    %c0_i32 = arith.constant 0 : i32
    %c0_i32_0 = arith.constant 0 : i32
    %c0_i32_1 = arith.constant 0 : i32
    return %arg0, %c0_i32, %c0_i32_0 : i32, i32, i32
  }
  func.func @transform_1(%arg0: i32) -> (i32, i32, i32) {
    %c0_i32 = arith.constant 0 : i32
    %c0_i32_0 = arith.constant 0 : i32
    %c0_i32_1 = arith.constant 0 : i32
    return %arg0, %c0_i32, %c0_i32_0 : i32, i32, i32
  }
  func.func @transform_2(%arg0: i32) -> (i32, i32) {
    %c0_i32 = arith.constant 0 : i32
    %c0_i32_0 = arith.constant 0 : i32
    %c0_i32_1 = arith.constant 0 : i32
    return %c0_i32, %c0_i32_0 : i32, i32
  }
  func.func @transform_3(%arg0: i32) -> (i32, i32) {
    %c0_i32 = arith.constant 0 : i32
    %c0_i32_0 = arith.constant 0 : i32
    %c0_i32_1 = arith.constant 0 : i32
    return %c0_i32, %c0_i32_0 : i32, i32
  }
  func.func @transform_4(%arg0: i32) -> (i32, i32) {
    %c0_i32 = arith.constant 0 : i32
    %c0_i32_0 = arith.constant 0 : i32
    %c0_i32_1 = arith.constant 0 : i32
    return %c0_i32, %c0_i32_0 : i32, i32
  }
  func.func @transform_5(%arg0: i32) -> (i32, i32, i32) {
    %c0_i32 = arith.constant 0 : i32
    %c0_i32_0 = arith.constant 0 : i32
    %c0_i32_1 = arith.constant 0 : i32
    %c0_i32_2 = arith.constant 0 : i32
    return %c0_i32, %c0_i32_0, %c0_i32_1 : i32, i32, i32
  }
  func.func @transform_6(%arg0: i32) -> (i32, i32, i32) {
    %c0_i32 = arith.constant 0 : i32
    %c0_i32_0 = arith.constant 0 : i32
    %c0_i32_1 = arith.constant 0 : i32
    %c0_i32_2 = arith.constant 0 : i32
    return %c0_i32, %c0_i32_0, %c0_i32_1 : i32, i32, i32
  }
  func.func @transform_7(%arg0: i32) -> (i32, i32, i32) {
    %c0_i32 = arith.constant 0 : i32
    %c0_i32_0 = arith.constant 0 : i32
    %c0_i32_1 = arith.constant 0 : i32
    %c0_i32_2 = arith.constant 0 : i32
    return %c0_i32, %c0_i32_0, %c0_i32_1 : i32, i32, i32
  }
  func.func @transform_8(%arg0: i32) -> (i32, i32, i32) {
    %c0_i32 = arith.constant 0 : i32
    %c0_i32_0 = arith.constant 0 : i32
    %c0_i32_1 = arith.constant 0 : i32
    %c0_i32_2 = arith.constant 0 : i32
    return %c0_i32, %c0_i32_0, %c0_i32_1 : i32, i32, i32
  }
  func.func @transform_9(%arg0: i32) -> (i32, i32, i32) {
    %c0_i32 = arith.constant 0 : i32
    %c0_i32_0 = arith.constant 0 : i32
    %c0_i32_1 = arith.constant 0 : i32
    %c0_i32_2 = arith.constant 0 : i32
    return %c0_i32, %c0_i32_0, %c0_i32_1 : i32, i32, i32
  }
  func.func @transform_10(%arg0: i32) -> (i32, i32, i32) {
    %c0_i32 = arith.constant 0 : i32
    %c0_i32_0 = arith.constant 0 : i32
    %c0_i32_1 = arith.constant 0 : i32
    return %arg0, %c0_i32, %c0_i32_0 : i32, i32, i32
  }
}

</mosaic_0001>

<llo_original>
// kernel: mmbt_for_classification.1
$region0: #{mmbt_for_classification.1}
  #allocation0 [shape = 'u32[]', space=smem, size = 0x4, offset = 0x4, fixed_abs, tag = 'smem constant byte address 0x4 - core index']
  #allocation1 [shape = 'u32[144,128]{1,0:T(1,128)}', space=vmem, size = 0x12000, scoped, tag = 'internal scratch']
  %s0 = inlined_call_operand.vmem [shape: f32[2,16,128], index: 0, kind: input, shape index: {}]
  %s1 = inlined_call_operand.vmem [shape: f32[2,16,16], index: 1, kind: input, shape index: {}]
  %s2 = inlined_call_operand.vmem [shape: f32[16,128], index: 2, kind: input, shape index: {}]
  %s3 = inlined_call_operand.vmem [shape: bf16[16,128], index: 3, kind: input, shape index: {}]
  %s4 = inlined_call_operand.vmem [shape: f32[8,128], index: 4, kind: input, shape index: {}]
  %s5 = inlined_call_operand.vmem [shape: bf16[2,128,384], index: 5, kind: input, shape index: {}]
  %s6 = inlined_call_operand.vmem [shape: bf16[2,32,128], index: 6, kind: input, shape index: {}]
  %s7 = inlined_call_operand.hbm [shape: bf16[2,128,128], index: 7, kind: input, shape index: {}]
  %s8 = inlined_call_operand.hbm [shape: bf16[2,128,128], index: 8, kind: input, shape index: {}]
  %s9 = inlined_call_operand.hbm [shape: f32[2,16,128], index: 9, kind: input, shape index: {}]
  %s10 = inlined_call_operand.vmem [shape: f32[2,16,128], index: 10, kind: output, shape index: {}]
  %s11 = sld [smem:[#allocation0]]
  $region85: #{mmbt_for_classification.1} parent=0
    _
  %s13 = ssub.s32 1, %s11
  %s14 = scalar_select 0, %s13, %s11
  $region1: #{mmbt_for_classification.1} parent=0
    #allocation2 [shape = 'u8[65536]{0}', space=vmem, size = 0x10000, scoped, tag = 'input window, operand 7, single buffered']
    #allocation3 [shape = 's32[2]{0}', space=sflag, size = 0x8, scoped, tag = 'scoped memory for mmbt_for_classification.1']
    #allocation4 [shape = 'u8[65536]{0}', space=vmem, size = 0x10000, scoped, tag = 'input window, operand 8, single buffered']
    #allocation5 [shape = 's32[1]{0}', space=sflag, size = 0x4, scoped, tag = 'scoped memory for mmbt_for_classification.1']
    #allocation6 [shape = 'u8[16384]{0}', space=vmem, size = 0x4000, scoped, tag = 'input window, operand 9, single buffered']
    %15 = vsyncpa [#allocation3], 0
    %16 = vsyncpa [#allocation5], 0
    loop: start=0, step=1, limit=4
    $region2: #{mmbt_for_classification.1} parent=1 // loop_pre_header
      _
    $region3: #{mmbt_for_classification.1} parent=1 // loop_header
      %s18 = sphi 0, %s22
      %p19 = scmp.ge.s32.totalorder %s18, 4
      %s28 = sphi 0, %s30
      %s31 = sphi 0, %s28
      %s32 = sphi 0, %s31
      %s48 = sphi 0, %s32
      %s54 = sphi 0, %s56
      %s57 = sphi 0, %s54
      %s58 = sphi 0, %s57
      %s74 = sphi 0, %s58
      %s78 = sphi 0, %s78
      %s80 = sphi 0, %s78
      %s81 = sphi 0, %s80
      %s95 = sphi 0, %s81
      %s99 = sphi 0, %s99
      %s101 = sphi 0, %s99
      %s102 = sphi 0, %s101
      %s116 = sphi 0, %s102
      %s120 = sphi 0, %s120
      %s122 = sphi 0, %s120
      %s123 = sphi 0, %s122
      %s137 = sphi 0, %s123
      %s141 = sphi 0, %s141
      %s143 = sphi 0, %s141
      %s144 = sphi 0, %s143
      %s158 = sphi 0, %s144
      %s162 = sphi 0, %s162
      %s164 = sphi 0, %s162
      %s165 = sphi 0, %s164
      %s179 = sphi 0, %s165
      %s183 = sphi 0, %s183
      %s185 = sphi 0, %s183
      %s186 = sphi 0, %s185
      %s200 = sphi 0, %s186
      %s204 = sphi 0, %s204
      %s206 = sphi 0, %s204
      %s207 = sphi 0, %s206
      %s221 = sphi 0, %s207
      %s225 = sphi 0, %s225
      %s227 = sphi 0, %s225
      %s228 = sphi 0, %s227
      %s242 = sphi 0, %s228
      %s248 = sphi 0, %s250
      %s251 = sphi 0, %s248
      %s252 = sphi 0, %s251
      %s268 = sphi 0, %s252
    $region4: #{mmbt_for_classification.1} parent=1 // loop_header_branch
      %21 = sbr.rel (%p19) target = $region8
    $region5: #{mmbt_for_classification.1} parent=1 // loop_body
      %s23 = ssub.s32 %s18, 1
      %s24 = ssub.s32 %s18, 2
      %s25 = sadd.s32 %s18, 1
      %s26 = ssub.s32 %s18, %s25
      %p27 = scmp.eq.s32.totalorder %s26, 0
      %s29 = sadd.s32 %s28, 1
      %s30 = scalar_select %p27, %s28, %s29
      %p33 = pneg %p27
      %p34 = scmp.eq.s32.totalorder %s18, 1
      %p35 = por %p33, %p34
      %p36 = scmp.ne.s32.totalorder %s28, %s31
      %p37 = scmp.eq.s32.totalorder %s18, 0
      %p38 = por %p36, %p37
      %p39 = scmp.ne.s32.totalorder %s28, %s31
      %p40 = scmp.eq.s32.totalorder %s23, 1
      %p41 = por %p39, %p40
      %p42 = scmp.ne.s32.totalorder %s31, %s32
      %p43 = scmp.eq.s32.totalorder %s23, 0
      %p44 = por %p42, %p43
      %p45 = scmp.ne.s32.totalorder %s31, %s32
      %p46 = scmp.eq.s32.totalorder %s24, 1
      %p47 = por %p45, %p46
      %p49 = scmp.ne.s32.totalorder %s32, %s48
      %p50 = scmp.eq.s32.totalorder %s24, 0
      %p51 = por %p49, %p50
      %s52 = ssub.s32 %s18, %s25
      %p53 = scmp.eq.s32.totalorder %s52, 0
      %s55 = sadd.s32 %s54, 1
      %s56 = scalar_select %p53, %s54, %s55
      %p59 = pneg %p53
      %p60 = scmp.eq.s32.totalorder %s18, 1
      %p61 = por %p59, %p60
      %p62 = scmp.ne.s32.totalorder %s54, %s57
      %p63 = scmp.eq.s32.totalorder %s18, 0
      %p64 = por %p62, %p63
      %p65 = scmp.ne.s32.totalorder %s54, %s57
      %p66 = scmp.eq.s32.totalorder %s23, 1
      %p67 = por %p65, %p66
      %p68 = scmp.ne.s32.totalorder %s57, %s58
      %p69 = scmp.eq.s32.totalorder %s23, 0
      %p70 = por %p68, %p69
      %p71 = scmp.ne.s32.totalorder %s57, %s58
      %p72 = scmp.eq.s32.totalorder %s24, 1
      %p73 = por %p71, %p72
      %p75 = scmp.ne.s32.totalorder %s58, %s74
      %p76 = scmp.eq.s32.totalorder %s24, 0
      %p77 = por %p75, %p76
      %s79 = sadd.s32 %s78, 1
      %p82 = scmp.eq.s32.totalorder %s18, 1
      %p83 = scmp.ne.s32.totalorder %s78, %s80
      %p84 = scmp.eq.s32.totalorder %s18, 0
      %p85 = por %p83, %p84
      %p86 = scmp.ne.s32.totalorder %s78, %s80
      %p87 = scmp.eq.s32.totalorder %s23, 1
      %p88 = por %p86, %p87
      %p89 = scmp.ne.s32.totalorder %s80, %s81
      %p90 = scmp.eq.s32.totalorder %s23, 0
      %p91 = por %p89, %p90
      %p92 = scmp.ne.s32.totalorder %s80, %s81
      %p93 = scmp.eq.s32.totalorder %s24, 1
      %p94 = por %p92, %p93
      %p96 = scmp.ne.s32.totalorder %s81, %s95
      %p97 = scmp.eq.s32.totalorder %s24, 0
      %p98 = por %p96, %p97
      %s100 = sadd.s32 %s99, 1
      %p103 = scmp.eq.s32.totalorder %s18, 1
      %p104 = scmp.ne.s32.totalorder %s99, %s101
      %p105 = scmp.eq.s32.totalorder %s18, 0
      %p106 = por %p104, %p105
      %p107 = scmp.ne.s32.totalorder %s99, %s101
      %p108 = scmp.eq.s32.totalorder %s23, 1
      %p109 = por %p107, %p108
      %p110 = scmp.ne.s32.totalorder %s101, %s102
      %p111 = scmp.eq.s32.totalorder %s23, 0
      %p112 = por %p110, %p111
      %p113 = scmp.ne.s32.totalorder %s101, %s102
      %p114 = scmp.eq.s32.totalorder %s24, 1
      %p115 = por %p113, %p114
      %p117 = scmp.ne.s32.totalorder %s102, %s116
      %p118 = scmp.eq.s32.totalorder %s24, 0
      %p119 = por %p117, %p118
      %s121 = sadd.s32 %s120, 1
      %p124 = scmp.eq.s32.totalorder %s18, 1
      %p125 = scmp.ne.s32.totalorder %s120, %s122
      %p126 = scmp.eq.s32.totalorder %s18, 0
      %p127 = por %p125, %p126
      %p128 = scmp.ne.s32.totalorder %s120, %s122
      %p129 = scmp.eq.s32.totalorder %s23, 1
      %p130 = por %p128, %p129
      %p131 = scmp.ne.s32.totalorder %s122, %s123
      %p132 = scmp.eq.s32.totalorder %s23, 0
      %p133 = por %p131, %p132
      %p134 = scmp.ne.s32.totalorder %s122, %s123
      %p135 = scmp.eq.s32.totalorder %s24, 1
      %p136 = por %p134, %p135
      %p138 = scmp.ne.s32.totalorder %s123, %s137
      %p139 = scmp.eq.s32.totalorder %s24, 0
      %p140 = por %p138, %p139
      %s142 = sadd.s32 %s141, 1
      %p145 = scmp.eq.s32.totalorder %s18, 1
      %p146 = scmp.ne.s32.totalorder %s141, %s143
      %p147 = scmp.eq.s32.totalorder %s18, 0
      %p148 = por %p146, %p147
      %p149 = scmp.ne.s32.totalorder %s141, %s143
      %p150 = scmp.eq.s32.totalorder %s23, 1
      %p151 = por %p149, %p150
      %p152 = scmp.ne.s32.totalorder %s143, %s144
      %p153 = scmp.eq.s32.totalorder %s23, 0
      %p154 = por %p152, %p153
      %p155 = scmp.ne.s32.totalorder %s143, %s144
      %p156 = scmp.eq.s32.totalorder %s24, 1
      %p157 = por %p155, %p156
      %p159 = scmp.ne.s32.totalorder %s144, %s158
      %p160 = scmp.eq.s32.totalorder %s24, 0
      %p161 = por %p159, %p160
      %s163 = sadd.s32 %s162, 1
      %p166 = scmp.eq.s32.totalorder %s18, 1
      %p167 = scmp.ne.s32.totalorder %s162, %s164
      %p168 = scmp.eq.s32.totalorder %s18, 0
      %p169 = por %p167, %p168
      %p170 = scmp.ne.s32.totalorder %s162, %s164
      %p171 = scmp.eq.s32.totalorder %s23, 1
      %p172 = por %p170, %p171
      %p173 = scmp.ne.s32.totalorder %s164, %s165
      %p174 = scmp.eq.s32.totalorder %s23, 0
      %p175 = por %p173, %p174
      %p176 = scmp.ne.s32.totalorder %s164, %s165
      %p177 = scmp.eq.s32.totalorder %s24, 1
      %p178 = por %p176, %p177
      %p180 = scmp.ne.s32.totalorder %s165, %s179
      %p181 = scmp.eq.s32.totalorder %s24, 0
      %p182 = por %p180, %p181
      %s184 = sadd.s32 %s183, 1
      %p187 = scmp.eq.s32.totalorder %s18, 1
      %p188 = scmp.ne.s32.totalorder %s183, %s185
      %p189 = scmp.eq.s32.totalorder %s18, 0
      %p190 = por %p188, %p189
      %p191 = scmp.ne.s32.totalorder %s183, %s185
      %p192 = scmp.eq.s32.totalorder %s23, 1
      %p193 = por %p191, %p192
      %p194 = scmp.ne.s32.totalorder %s185, %s186
      %p195 = scmp.eq.s32.totalorder %s23, 0
      %p196 = por %p194, %p195
      %p197 = scmp.ne.s32.totalorder %s185, %s186
      %p198 = scmp.eq.s32.totalorder %s24, 1
      %p199 = por %p197, %p198
      %p201 = scmp.ne.s32.totalorder %s186, %s200
      %p202 = scmp.eq.s32.totalorder %s24, 0
      %p203 = por %p201, %p202
      %s205 = sadd.s32 %s204, 1
      %p208 = scmp.eq.s32.totalorder %s18, 1
      %p209 = scmp.ne.s32.totalorder %s204, %s206
      %p210 = scmp.eq.s32.totalorder %s18, 0
      %p211 = por %p209, %p210
      %p212 = scmp.ne.s32.totalorder %s204, %s206
      %p213 = scmp.eq.s32.totalorder %s23, 1
      %p214 = por %p212, %p213
      %p215 = scmp.ne.s32.totalorder %s206, %s207
      %p216 = scmp.eq.s32.totalorder %s23, 0
      %p217 = por %p215, %p216
      %p218 = scmp.ne.s32.totalorder %s206, %s207
      %p219 = scmp.eq.s32.totalorder %s24, 1
      %p220 = por %p218, %p219
      %p222 = scmp.ne.s32.totalorder %s207, %s221
      %p223 = scmp.eq.s32.totalorder %s24, 0
      %p224 = por %p222, %p223
      %s226 = sadd.s32 %s225, 1
      %p229 = scmp.eq.s32.totalorder %s18, 1
      %p230 = scmp.ne.s32.totalorder %s225, %s227
      %p231 = scmp.eq.s32.totalorder %s18, 0
      %p232 = por %p230, %p231
      %p233 = scmp.ne.s32.totalorder %s225, %s227
      %p234 = scmp.eq.s32.totalorder %s23, 1
      %p235 = por %p233, %p234
      %p236 = scmp.ne.s32.totalorder %s227, %s228
      %p237 = scmp.eq.s32.totalorder %s23, 0
      %p238 = por %p236, %p237
      %p239 = scmp.ne.s32.totalorder %s227, %s228
      %p240 = scmp.eq.s32.totalorder %s24, 1
      %p241 = por %p239, %p240
      %p243 = scmp.ne.s32.totalorder %s228, %s242
      %p244 = scmp.eq.s32.totalorder %s24, 0
      %p245 = por %p243, %p244
      %s246 = ssub.s32 %s18, %s25
      %p247 = scmp.eq.s32.totalorder %s246, 0
      %s249 = sadd.s32 %s248, 1
      %s250 = scalar_select %p247, %s248, %s249
      %p253 = pneg %p247
      %p254 = scmp.eq.s32.totalorder %s18, 1
      %p255 = por %p253, %p254
      %p256 = scmp.ne.s32.totalorder %s248, %s251
      %p257 = scmp.eq.s32.totalorder %s18, 0
      %p258 = por %p256, %p257
      %p259 = scmp.ne.s32.totalorder %s248, %s251
      %p260 = scmp.eq.s32.totalorder %s23, 1
      %p261 = por %p259, %p260
      %p262 = scmp.ne.s32.totalorder %s251, %s252
      %p263 = scmp.eq.s32.totalorder %s23, 0
      %p264 = por %p262, %p263
      %p265 = scmp.ne.s32.totalorder %s251, %s252
      %p266 = scmp.eq.s32.totalorder %s24, 1
      %p267 = por %p265, %p266
      %p269 = scmp.ne.s32.totalorder %s252, %s268
      %p270 = scmp.eq.s32.totalorder %s24, 0
      %p271 = por %p269, %p270
      %p272 = scmp.le.s32.totalorder 1, %s18
      %p273 = scmp.lt.s32.totalorder %s18, 3
      %p274 = pnand %p272, %p273
      %p275 = pneg %p274
      // Predicated region
      $region9: #{mmbt_for_classification.1} parent=5 // pred_check
        _
      $region10: #{mmbt_for_classification.1} parent=5 // pred_check_branch
        %277 = sbr.rel (%p274) target = $region12
      $region11: #{mmbt_for_classification.1} parent=5 // pred_region
        %s278 = ssub.s32 %s18, 1
        // Predicated region
        $region13: #{mmbt_for_classification.1} parent=11 // pred_check
          %p279 = pneg %p91
        $region14: #{mmbt_for_classification.1} parent=11 // pred_check_branch
          %281 = sbr.rel (%p279) target = $region16
        $region15: #{mmbt_for_classification.1} parent=11 // pred_region
          _
        $region16: #{mmbt_for_classification.1} parent=11 // pred_fallthru
          _
        // Predicated region
        $region17: #{mmbt_for_classification.1} parent=11 // pred_check
          %p282 = pneg %p112
        $region18: #{mmbt_for_classification.1} parent=11 // pred_check_branch
          %284 = sbr.rel (%p282) target = $region20
        $region19: #{mmbt_for_classification.1} parent=11 // pred_region
          _
        $region20: #{mmbt_for_classification.1} parent=11 // pred_fallthru
          _
        // Predicated region
        $region21: #{mmbt_for_classification.1} parent=11 // pred_check
          %p285 = pneg %p133
        $region22: #{mmbt_for_classification.1} parent=11 // pred_check_branch
          %287 = sbr.rel (%p285) target = $region24
        $region23: #{mmbt_for_classification.1} parent=11 // pred_region
          _
        $region24: #{mmbt_for_classification.1} parent=11 // pred_fallthru
          _
        // Predicated region
        $region25: #{mmbt_for_classification.1} parent=11 // pred_check
          %p288 = pneg %p154
        $region26: #{mmbt_for_classification.1} parent=11 // pred_check_branch
          %290 = sbr.rel (%p288) target = $region28
        $region27: #{mmbt_for_classification.1} parent=11 // pred_region
          _
        $region28: #{mmbt_for_classification.1} parent=11 // pred_fallthru
          _
        // Predicated region
        $region29: #{mmbt_for_classification.1} parent=11 // pred_check
          %p291 = pneg %p175
        $region30: #{mmbt_for_classification.1} parent=11 // pred_check_branch
          %293 = sbr.rel (%p291) target = $region32
        $region31: #{mmbt_for_classification.1} parent=11 // pred_region
          _
        $region32: #{mmbt_for_classification.1} parent=11 // pred_fallthru
          _
        // Predicated region
        $region33: #{mmbt_for_classification.1} parent=11 // pred_check
          %p294 = pneg %p196
        $region34: #{mmbt_for_classification.1} parent=11 // pred_check_branch
          %296 = sbr.rel (%p294) target = $region36
        $region35: #{mmbt_for_classification.1} parent=11 // pred_region
          %s298 = ssub.s32 2048, 2048
          %299 = vsyncadd [#allocation3], %s298
          %s300 = sshll.u32 [#allocation2], 4
          %s301 = int_to_ptr.vmem [resolvable:$true] %s300
          %306 = dma.hbm_to_vmem [thread:$0]  %s7, 2048, %s301, [#allocation3], 64, 64, 4
        $region36: #{mmbt_for_classification.1} parent=11 // pred_fallthru
          _
        // Predicated region
        $region37: #{mmbt_for_classification.1} parent=11 // pred_check
          %p307 = pneg %p217
        $region38: #{mmbt_for_classification.1} parent=11 // pred_check_branch
          %309 = sbr.rel (%p307) target = $region40
        $region39: #{mmbt_for_classification.1} parent=11 // pred_region
          %s311 = ssub.s32 2048, 2048
          %312 = vsyncadd [#allocation5], %s311
          %s313 = sshll.u32 [#allocation4], 4
          %s314 = int_to_ptr.vmem [resolvable:$true] %s313
          %319 = dma.hbm_to_vmem [thread:$0]  %s8, 2048, %s314, [#allocation5], 64, 64, 4
        $region40: #{mmbt_for_classification.1} parent=11 // pred_fallthru
          _
        // Predicated region
        $region41: #{mmbt_for_classification.1} parent=11 // pred_check
          %p320 = pneg %p238
        $region42: #{mmbt_for_classification.1} parent=11 // pred_check_branch
          %322 = sbr.rel (%p320) target = $region44
        $region43: #{mmbt_for_classification.1} parent=11 // pred_region
          %s324 = ssub.s32 512, 512
          %325 = vsyncadd [#allocation5], %s324
          %s326 = sshll.u32 [#allocation6], 4
          %s327 = int_to_ptr.vmem [resolvable:$true] %s326
          %332 = dma.hbm_to_vmem [thread:$0]  %s9, 512, %s327, [#allocation5], 128, 128, 8
        $region44: #{mmbt_for_classification.1} parent=11 // pred_fallthru
          _
      $region12: #{mmbt_for_classification.1} parent=5 // pred_fallthru
        _
      %p333 = scmp.lt.s32.totalorder %s18, 2
      // Predicated region
      $region45: #{mmbt_for_classification.1} parent=5 // pred_check
        %p334 = pneg %p333
      $region46: #{mmbt_for_classification.1} parent=5 // pred_check_branch
        %336 = sbr.rel (%p334) target = $region48
      $region47: #{mmbt_for_classification.1} parent=5 // pred_region
        // Predicated region
        $region49: #{mmbt_for_classification.1} parent=47 // pred_check
          %p337 = pneg %p38
        $region50: #{mmbt_for_classification.1} parent=47 // pred_check_branch
          %339 = sbr.rel (%p337) target = $region52
        $region51: #{mmbt_for_classification.1} parent=47 // pred_region
          %p340 = scmp.lt.s32.totalorder %s18, 1
          %s341 = scalar_select %p340, %s18, 1
          %s342 = smul.addr %s341, 2
          %s343 = smul.addr %s342, 8
          %s344 = scalar_lea.vmem %s0, %s343
        $region52: #{mmbt_for_classification.1} parent=47 // pred_fallthru
          _
        // Predicated region
        $region53: #{mmbt_for_classification.1} parent=47 // pred_check
          %p345 = pneg %p64
        $region54: #{mmbt_for_classification.1} parent=47 // pred_check_branch
          %347 = sbr.rel (%p345) target = $region56
        $region55: #{mmbt_for_classification.1} parent=47 // pred_region
          %p348 = scmp.lt.s32.totalorder %s18, 1
          %s349 = scalar_select %p348, %s18, 1
          %s350 = smul.addr %s349, 2
          %s351 = smul.addr %s350, 8
          %s352 = scalar_lea.vmem %s1, %s351
        $region56: #{mmbt_for_classification.1} parent=47 // pred_fallthru
          _
      $region48: #{mmbt_for_classification.1} parent=5 // pred_fallthru
        _
      %p353 = scmp.le.s32.totalorder 1, %s18
      %p354 = scmp.lt.s32.totalorder %s18, 3
      %p355 = pnand %p353, %p354
      %p356 = pneg %p355
      // Predicated region
      $region57: #{mmbt_for_classification.1} parent=5 // pred_check
        _
      $region58: #{mmbt_for_classification.1} parent=5 // pred_check_branch
        %358 = sbr.rel (%p355) target = $region60
      $region59: #{mmbt_for_classification.1} parent=5 // pred_region
        %s359 = ssub.s32 %s18, 1
        // Predicated region
        $region61: #{mmbt_for_classification.1} parent=59 // pred_check
          %p360 = pneg %p196
        $region62: #{mmbt_for_classification.1} parent=59 // pred_check_branch
          %362 = sbr.rel (%p360) target = $region64
        $region63: #{mmbt_for_classification.1} parent=59 // pred_region
          %363 = dma.done [#allocation3], 2048
        $region64: #{mmbt_for_classification.1} parent=59 // pred_fallthru
          _
        // Predicated region
        $region65: #{mmbt_for_classification.1} parent=59 // pred_check
          %p364 = pneg %p217
        $region66: #{mmbt_for_classification.1} parent=59 // pred_check_branch
          %366 = sbr.rel (%p364) target = $region68
        $region67: #{mmbt_for_classification.1} parent=59 // pred_region
          %367 = dma.done [#allocation5], 2048
        $region68: #{mmbt_for_classification.1} parent=59 // pred_fallthru
          _
        // Predicated region
        $region69: #{mmbt_for_classification.1} parent=59 // pred_check
          %p368 = pneg %p238
        $region70: #{mmbt_for_classification.1} parent=59 // pred_check_branch
          %370 = sbr.rel (%p368) target = $region72
        $region71: #{mmbt_for_classification.1} parent=59 // pred_region
          %371 = dma.done [#allocation5], 512
        $region72: #{mmbt_for_classification.1} parent=59 // pred_fallthru
          _
        %p372 = scmp.lt.s32.totalorder %s23, 1
        %s373 = scalar_select %p372, %s23, 1
        %s374 = smul.addr %s373, 2
        %s375 = smul.addr %s374, 8
        %s376 = scalar_lea.vmem %s0, %s375
        %p377 = pneg %p44
        %p378 = pneg %p41
        %p379 = scmp.lt.s32.totalorder %s23, 1
        %s380 = scalar_select %p379, %s23, 1
        %s381 = smul.addr %s380, 2
        %s382 = smul.addr %s381, 8
        %s383 = scalar_lea.vmem %s1, %s382
        %p384 = pneg %p70
        %p385 = pneg %p67
        %p386 = pneg %p91
        %p387 = pneg %p88
        %p388 = pneg %p112
        %p389 = pneg %p109
        %p390 = pneg %p133
        %p391 = pneg %p130
        %p392 = pneg %p154
        %p393 = pneg %p151
        %p394 = pneg %p175
        %p395 = pneg %p172
        %p396 = pneg %p196
        %p397 = pneg %p193
        %p398 = pneg %p217
        %p399 = pneg %p214
        %p400 = pneg %p238
        %p401 = pneg %p235
        %p402 = pneg %p264
        %p403 = pneg %p261
        %p404 = scmp.lt.s32.totalorder %s23, 1
        %s405 = scalar_select %p404, %s23, 1
        %s406 = smul.addr %s405, 2
        %s407 = smul.addr %s406, 8
        %s408 = scalar_lea.vmem %s10, %s407
        %p409 = scmp.lt.s32.totalorder %s23, 1
        %s410 = scalar_select %p409, %s23, 1
        %s411 = smul.addr %s410, 2
        %s412 = smul.addr %s411, 8
        %s413 = scalar_lea.vmem %s0, %s412
        %p414 = scmp.lt.s32.totalorder %s23, 1
        %s415 = scalar_select %p414, %s23, 1
        %s416 = smul.addr %s415, 2
        %s417 = smul.addr %s416, 8
        %s418 = scalar_lea.vmem %s1, %s417
        %p419 = scmp.lt.s32.totalorder %s23, 1
        %s420 = scalar_select %p419, %s23, 1
        %s421 = smul.addr %s420, 2
        %s422 = smul.addr %s421, 8
        %s423 = scalar_lea.vmem %s10, %s422
        %v425 = vlaneseq
        %v426 = vand.u32 %v425, 127
        %vm427 = vcmp.lt.s32.totalorder %v426, 32
        %v428 = vsel %vm427, 1, 0
        %v429 = vcvt.s32.f32 %v428
        %v430 = vlaneseq
        %v431 = vshrl.u32 %v430, 7
        %v432 = vadd.s32 %v431, 8
        %vm433 = vcmp.ge.s32.totalorder %v431, 1
        %vm434 = vcmp.ge.s32.totalorder %v432, 1
        %vm435 = vcmp.lt.s32.totalorder %v431, 5
        %vm436 = vcmp.lt.s32.totalorder %v432, 5
        %vm437 = vmand %vm433, %vm435
        %vm438 = vmand %vm434, %vm436
        %v439 = vsel %vm437, 1, 0
        %v440 = vsel %vm438, 1, 0
        %v441 = vcvt.s32.f32 %v439
        %v442 = vcvt.s32.f32 %v440
        %vm443 = vcmp.lt.s32.totalorder %v426, 14
        %v444 = vsel %vm443, 0.0, -1e+30
        %v445 = vld [vmem:[%s4] sm:$0xff]
        %v446 = vld [vmem:[%s418] sm:$0xff]
        %v447 = vld [vmem:[%s418 + $0x8] sm:$0xff]
        %v448 = vpack.c.bf16 %v447, %v446
        %v449 = vld [vmem:[%s3] sm:$0xf]
        %v450 = vld [vmem:[%s3 + $0x4] sm:$0xf]
        %v451 = vlaneseq
        %v452 = vshrl.u32 %v451, 7
        %v453 = vsub.s32 0, %v452
        %v454 = vrot.slane %v445, %v453
        %v457 = vunpack.c.l.b16 %v449
        %v458 = vunpack.c.l.b16 %v450
        %v459 = vpack.c.b16 %v458, %v457
        %vm461 = vcmask 130048
        %v463 = vsel %vm461, %v448, 0
        %465 = vmatprep.subr.bf16.mxu0 0
        %466 = vmatpush1.bf16.msra.mxu0 0
        %467 = vmatprep.subr.bf16.mxu0 0
        %468 = vmatpush1.bf16.msra.mxu0 0
        %469 = vmatprep.subr.bf16.mxu0 0
        %470 = vmatpush1.bf16.msra.mxu0 0
        %471 = vmatprep.subr.bf16.mxu0 0
        %472 = vmatpush1.bf16.msra.mxu0 0
        %473 = vmatprep.subr.bf16.mxu0 0
        %474 = vmatpush1.bf16.msra.mxu0 0
        %475 = vmatprep.subr.bf16.mxu0 0
        %476 = vmatpush1.bf16.msra.mxu0 0
        %477 = vmatprep.subr.bf16.mxu0 0
        %478 = vmatpush1.bf16.msra.mxu0 0
        %479 = vmatprep.subr.bf16.mxu0 0
        %480 = vmatpush1.bf16.msra.mxu0 %v459
        %481 = vmatprep.subr.bf16.mxu0 0
        %482 = vmatpush2.bf16.msra.mxu0 0
        %483 = vmatprep.subr.bf16.mxu0 0
        %484 = vmatpush2.bf16.msra.mxu0 0
        %485 = vmatprep.subr.bf16.mxu0 0
        %486 = vmatpush2.bf16.msra.mxu0 0
        %487 = vmatprep.subr.bf16.mxu0 0
        %488 = vmatpush2.bf16.msra.mxu0 0
        %489 = vmatprep.subr.bf16.mxu0 0
        %490 = vmatpush2.bf16.msra.mxu0 0
        %491 = vmatprep.subr.bf16.mxu0 0
        %492 = vmatpush2.bf16.msra.mxu0 0
        %493 = vmatprep.subr.bf16.mxu0 0
        %494 = vmatpush2.bf16.msra.mxu0 0
        %495 = vmatprep.subr.bf16.mxu0 0
        %496 = vmatpush2.bf16.msra.mxu0 0
        %497 = vmatprep.mubr.bf16.mxu0 0
        %498 = vmatmul.mubr.bf16.gmra.mxu0 %v463
        %v499 = vpop.f32.mrf.mxu0
        %v500 = vadd.f32 %v454, %v499
        %v501 = vpop.f32.mrf.mxu0
        %v502 = vpop.f32.mrf.mxu0
        %v503 = vadd.f32 %v454, %v502
        %v504 = vpop.f32.mrf.mxu0
        %505 = vdwg.mxu0
        %v506 = vld [vmem:[%s413] sm:$0xff]
        %v507 = vld [vmem:[%s413 + $0x8] sm:$0xff]
        %v508 = vmul.f32 %v500, %v441
        %v509 = vmul.f32 %v503, %v442
        %v510 = vadd.f32 %v506, %v508
        %v511 = vadd.f32 %v507, %v509
        %v512 = vld [vmem:[%s2] sm:$0xff]
        %v513 = vld [vmem:[%s2 + $0x8] sm:$0xff]
        %v514 = vadd.f32 %v510, %v512
        %v515 = vadd.f32 %v511, %v513
        %516 = vadd.xlane.f32.xlu0 %v514
        %v517 = vpop.xlane.xlu0 %516
        %518 = vadd.xlane.f32.xlu0 %v515
        %v519 = vpop.xlane.xlu0 %518
        %v520 = vmul.f32 %v517, 0.03125
        %v521 = vmul.f32 %v519, 0.03125
        %v522 = vsub.f32 %v514, %v520
        %v523 = vsub.f32 %v515, %v521
        %v524 = vmul.f32 %v522, %v429
        %v525 = vmul.f32 %v523, %v429
        %v526 = vmul.f32 %v524, %v524
        %v527 = vmul.f32 %v525, %v525
        %528 = vadd.xlane.f32.xlu0 %v526
        %v529 = vpop.xlane.xlu0 %528
        %530 = vadd.xlane.f32.xlu0 %v527
        %v531 = vpop.xlane.xlu0 %530
        %v532 = vmul.f32 %v529, 0.03125
        %v533 = vmul.f32 %v531, 0.03125
        %v534 = vadd.f32 %v532, 1e-12
        %v535 = vadd.f32 %v533, 1e-12
        %v536 = vrsqrt.pop %v534
        %v537 = vrsqrt.pop %v535
        %v538 = vmul.f32 %v522, %v536
        %v539 = vmul.f32 %v523, %v537
        %v540 = vlaneseq
        %v541 = vshrl.u32 %v540, 7
        %v542 = vsub.s32 1, %v541
        %v543 = vrot.slane %v445, %v542
        %v544 = vmul.f32 %v538, %v543
        %v545 = vmul.f32 %v539, %v543
        %v546 = vlaneseq
        %v547 = vshrl.u32 %v546, 7
        %v548 = vsub.s32 2, %v547
        %v549 = vrot.slane %v445, %v548
        %v550 = vadd.f32 %v544, %v549
        %v551 = vadd.f32 %v545, %v549
        %v552 = vld [vmem:[#allocation6] sm:$0xff]
        %v553 = vld [vmem:[#allocation6 + $0x8] sm:$0xff]
        %v554 = vpack.c.bf16 %v551, %v550
        %v555 = vld [vmem:[%s5] sm:$0xff]
        %v556 = vld [vmem:[%s5 + $0x8] sm:$0xf]
        %v557 = vld [vmem:[%s5 + $0xc] sm:$0xff]
        %v558 = vld [vmem:[%s5 + $0x14] sm:$0xf]
        %v559 = vld [vmem:[%s5 + $0x18] sm:$0xff]
        %v560 = vld [vmem:[%s5 + $0x20] sm:$0xf]
        %v561 = vld [vmem:[%s5 + $0x24] sm:$0xff]
        %v562 = vld [vmem:[%s5 + $0x2c] sm:$0xf]
        %v563 = vld [vmem:[%s5 + $0x30] sm:$0xff]
        %v564 = vld [vmem:[%s5 + $0x38] sm:$0xf]
        %v565 = vld [vmem:[%s5 + $0x3c] sm:$0xff]
        %v566 = vld [vmem:[%s5 + $0x44] sm:$0xf]
        %v567 = vld [vmem:[%s5 + $0x48] sm:$0xff]
        %v568 = vld [vmem:[%s5 + $0x50] sm:$0xf]
        %v569 = vld [vmem:[%s5 + $0x54] sm:$0xff]
        %v570 = vld [vmem:[%s5 + $0x5c] sm:$0xf]
        %v571 = vld [vmem:[%s5 + $0x60] sm:$0xff]
        %v572 = vld [vmem:[%s5 + $0x68] sm:$0xf]
        %v573 = vld [vmem:[%s5 + $0x6c] sm:$0xff]
        %v574 = vld [vmem:[%s5 + $0x74] sm:$0xf]
        %v575 = vld [vmem:[%s5 + $0x78] sm:$0xff]
        %v576 = vld [vmem:[%s5 + $0x80] sm:$0xf]
        %v577 = vld [vmem:[%s5 + $0x84] sm:$0xff]
        %v578 = vld [vmem:[%s5 + $0x8c] sm:$0xf]
        %v579 = vld [vmem:[%s5 + $0x90] sm:$0xff]
        %v580 = vld [vmem:[%s5 + $0x98] sm:$0xf]
        %v581 = vld [vmem:[%s5 + $0x9c] sm:$0xff]
        %v582 = vld [vmem:[%s5 + $0xa4] sm:$0xf]
        %v583 = vld [vmem:[%s5 + $0xa8] sm:$0xff]
        %v584 = vld [vmem:[%s5 + $0xb0] sm:$0xf]
        %v585 = vld [vmem:[%s5 + $0xb4] sm:$0xff]
        %v586 = vld [vmem:[%s5 + $0xbc] sm:$0xf]
        %v619 = vunpack.c.l.b16 %v555
        %v620 = vunpack.c.h.b16 %v555
        %v621 = vunpack.c.l.b16 %v556
        %v622 = vunpack.c.l.b16 %v557
        %v623 = vunpack.c.h.b16 %v557
        %v624 = vunpack.c.l.b16 %v558
        %v625 = vunpack.c.l.b16 %v559
        %v626 = vunpack.c.h.b16 %v559
        %v627 = vunpack.c.l.b16 %v560
        %v628 = vunpack.c.l.b16 %v561
        %v629 = vunpack.c.h.b16 %v561
        %v630 = vunpack.c.l.b16 %v562
        %v631 = vunpack.c.l.b16 %v563
        %v632 = vunpack.c.h.b16 %v563
        %v633 = vunpack.c.l.b16 %v564
        %v634 = vunpack.c.l.b16 %v565
        %v635 = vunpack.c.h.b16 %v565
        %v636 = vunpack.c.l.b16 %v566
        %v637 = vunpack.c.l.b16 %v567
        %v638 = vunpack.c.h.b16 %v567
        %v639 = vunpack.c.l.b16 %v568
        %v640 = vunpack.c.l.b16 %v569
        %v641 = vunpack.c.h.b16 %v569
        %v642 = vunpack.c.l.b16 %v570
        %v643 = vunpack.c.l.b16 %v571
        %v644 = vunpack.c.h.b16 %v571
        %v645 = vunpack.c.l.b16 %v572
        %v646 = vunpack.c.l.b16 %v573
        %v647 = vunpack.c.h.b16 %v573
        %v648 = vunpack.c.l.b16 %v574
        %v649 = vunpack.c.l.b16 %v575
        %v650 = vunpack.c.h.b16 %v575
        %v651 = vunpack.c.l.b16 %v576
        %v652 = vunpack.c.l.b16 %v577
        %v653 = vunpack.c.h.b16 %v577
        %v654 = vunpack.c.l.b16 %v578
        %v655 = vunpack.c.l.b16 %v579
        %v656 = vunpack.c.h.b16 %v579
        %v657 = vunpack.c.l.b16 %v580
        %v658 = vunpack.c.l.b16 %v581
        %v659 = vunpack.c.h.b16 %v581
        %v660 = vunpack.c.l.b16 %v582
        %v661 = vunpack.c.l.b16 %v583
        %v662 = vunpack.c.h.b16 %v583
        %v663 = vunpack.c.l.b16 %v584
        %v664 = vunpack.c.l.b16 %v585
        %v665 = vunpack.c.h.b16 %v585
        %v666 = vunpack.c.l.b16 %v586
        %v667 = vpack.c.b16 %v622, %v619
        %v668 = vpack.c.b16 %v623, %v620
        %v669 = vpack.c.b16 %v624, %v621
        %v670 = vpack.c.b16 %v628, %v625
        %v671 = vpack.c.b16 %v629, %v626
        %v672 = vpack.c.b16 %v630, %v627
        %v673 = vpack.c.b16 %v634, %v631
        %v674 = vpack.c.b16 %v635, %v632
        %v675 = vpack.c.b16 %v636, %v633
        %v676 = vpack.c.b16 %v640, %v637
        %v677 = vpack.c.b16 %v641, %v638
        %v678 = vpack.c.b16 %v642, %v639
        %v679 = vpack.c.b16 %v646, %v643
        %v680 = vpack.c.b16 %v647, %v644
        %v681 = vpack.c.b16 %v648, %v645
        %v682 = vpack.c.b16 %v652, %v649
        %v683 = vpack.c.b16 %v653, %v650
        %v684 = vpack.c.b16 %v654, %v651
        %v685 = vpack.c.b16 %v658, %v655
        %v686 = vpack.c.b16 %v659, %v656
        %v687 = vpack.c.b16 %v660, %v657
        %v688 = vpack.c.b16 %v664, %v661
        %v689 = vpack.c.b16 %v665, %v662
        %v690 = vpack.c.b16 %v666, %v663
        %715 = vmatprep.subr.bf16.mxu0 %v689
        %716 = vmatpush1.bf16.msra.mxu0 %v688
        %717 = vmatprep.subr.bf16.mxu0 %v686
        %718 = vmatpush1.bf16.msra.mxu0 %v685
        %719 = vmatprep.subr.bf16.mxu0 %v683
        %720 = vmatpush1.bf16.msra.mxu0 %v682
        %721 = vmatprep.subr.bf16.mxu0 %v680
        %722 = vmatpush1.bf16.msra.mxu0 %v679
        %723 = vmatprep.subr.bf16.mxu0 %v677
        %724 = vmatpush1.bf16.msra.mxu0 %v676
        %725 = vmatprep.subr.bf16.mxu0 %v674
        %726 = vmatpush1.bf16.msra.mxu0 %v673
        %727 = vmatprep.subr.bf16.mxu0 %v671
        %728 = vmatpush1.bf16.msra.mxu0 %v670
        %729 = vmatprep.subr.bf16.mxu0 %v668
        %730 = vmatpush1.bf16.msra.mxu0 %v667
        %731 = vmatprep.subr.bf16.mxu0 0
        %732 = vmatpush2.bf16.msra.mxu0 0
        %733 = vmatprep.subr.bf16.mxu0 0
        %734 = vmatpush2.bf16.msra.mxu0 0
        %735 = vmatprep.subr.bf16.mxu0 0
        %736 = vmatpush2.bf16.msra.mxu0 0
        %737 = vmatprep.subr.bf16.mxu0 0
        %738 = vmatpush2.bf16.msra.mxu0 0
        %739 = vmatprep.subr.bf16.mxu0 0
        %740 = vmatpush2.bf16.msra.mxu0 0
        %741 = vmatprep.subr.bf16.mxu0 0
        %742 = vmatpush2.bf16.msra.mxu0 0
        %743 = vmatprep.subr.bf16.mxu0 0
        %744 = vmatpush2.bf16.msra.mxu0 0
        %745 = vmatprep.subr.bf16.mxu0 0
        %746 = vmatpush2.bf16.msra.mxu0 0
        %747 = vmatprep.mubr.bf16.mxu0 0
        %748 = vmatmul.mubr.bf16.gmra.mxu0 %v554
        %v749 = vpop.f32.mrf.mxu0
        %v750 = vadd.f32 0.0, %v749
        %v751 = vpop.f32.mrf.mxu0
        %v752 = vadd.f32 0.0, %v751
        %v753 = vpop.f32.mrf.mxu0
        %v754 = vadd.f32 0.0, %v753
        %v755 = vpop.f32.mrf.mxu0
        %v756 = vadd.f32 0.0, %v755
        %757 = vdwg.mxu0
        %758 = vmatprep.subr.bf16.mxu0 0
        %759 = vmatpush1.bf16.msra.mxu0 %v690
        %760 = vmatprep.subr.bf16.mxu0 0
        %761 = vmatpush1.bf16.msra.mxu0 %v687
        %762 = vmatprep.subr.bf16.mxu0 0
        %763 = vmatpush1.bf16.msra.mxu0 %v684
        %764 = vmatprep.subr.bf16.mxu0 0
        %765 = vmatpush1.bf16.msra.mxu0 %v681
        %766 = vmatprep.subr.bf16.mxu0 0
        %767 = vmatpush1.bf16.msra.mxu0 %v678
        %768 = vmatprep.subr.bf16.mxu0 0
        %769 = vmatpush1.bf16.msra.mxu0 %v675
        %770 = vmatprep.subr.bf16.mxu0 0
        %771 = vmatpush1.bf16.msra.mxu0 %v672
        %772 = vmatprep.subr.bf16.mxu0 0
        %773 = vmatpush1.bf16.msra.mxu0 %v669
        %774 = vmatprep.subr.bf16.mxu0 0
        %775 = vmatpush2.bf16.msra.mxu0 0
        %776 = vmatprep.subr.bf16.mxu0 0
        %777 = vmatpush2.bf16.msra.mxu0 0
        %778 = vmatprep.subr.bf16.mxu0 0
        %779 = vmatpush2.bf16.msra.mxu0 0
        %780 = vmatprep.subr.bf16.mxu0 0
        %781 = vmatpush2.bf16.msra.mxu0 0
        %782 = vmatprep.subr.bf16.mxu0 0
        %783 = vmatpush2.bf16.msra.mxu0 0
        %784 = vmatprep.subr.bf16.mxu0 0
        %785 = vmatpush2.bf16.msra.mxu0 0
        %786 = vmatprep.subr.bf16.mxu0 0
        %787 = vmatpush2.bf16.msra.mxu0 0
        %788 = vmatprep.subr.bf16.mxu0 0
        %789 = vmatpush2.bf16.msra.mxu0 0
        %790 = vmatprep.mubr.bf16.mxu0 0
        %791 = vmatmul.mubr.bf16.gmra.mxu0 %v554
        %v792 = vpop.f32.mrf.mxu0
        %v793 = vadd.f32 0.0, %v792
        %v794 = vpop.f32.mrf.mxu0
        %v795 = vpop.f32.mrf.mxu0
        %v796 = vadd.f32 0.0, %v795
        %v797 = vpop.f32.mrf.mxu0
        %798 = vdwg.mxu0
        %v799 = vlaneseq
        %v800 = vshrl.u32 %v799, 7
        %v801 = vsub.s32 0, %v800
        %v802 = vrot.slane %v552, %v801
        %v803 = vadd.f32 %v750, %v802
        %v804 = vadd.f32 %v754, %v802
        %v805 = vlaneseq
        %v806 = vshrl.u32 %v805, 7
        %v807 = vsub.s32 1, %v806
        %v808 = vrot.slane %v552, %v807
        %v809 = vadd.f32 %v752, %v808
        %v810 = vadd.f32 %v756, %v808
        %v811 = vlaneseq
        %v812 = vshrl.u32 %v811, 7
        %v813 = vsub.s32 2, %v812
        %v814 = vrot.slane %v552, %v813
        %v815 = vadd.f32 %v793, %v814
        %v816 = vadd.f32 %v796, %v814
        %819 = vrot.lane.b32.xlu0 %v803, 120
        %v820 = vpop.permute.xlu0 %819
        %821 = vrot.lane.b32.xlu0 %v804, 120
        %v822 = vpop.permute.xlu0 %821
        %823 = vrot.lane.b32.xlu0 %v803, 112
        %v824 = vpop.permute.xlu0 %823
        %825 = vrot.lane.b32.xlu0 %v804, 112
        %v826 = vpop.permute.xlu0 %825
        %827 = vrot.lane.b32.xlu0 %v803, 104
        %v828 = vpop.permute.xlu0 %827
        %829 = vrot.lane.b32.xlu0 %v804, 104
        %v830 = vpop.permute.xlu0 %829
        %833 = vrot.lane.b32.xlu0 %v809, 120
        %v834 = vpop.permute.xlu0 %833
        %835 = vrot.lane.b32.xlu0 %v810, 120
        %v836 = vpop.permute.xlu0 %835
        %837 = vrot.lane.b32.xlu0 %v809, 112
        %v838 = vpop.permute.xlu0 %837
        %839 = vrot.lane.b32.xlu0 %v810, 112
        %v840 = vpop.permute.xlu0 %839
        %841 = vrot.lane.b32.xlu0 %v809, 104
        %v842 = vpop.permute.xlu0 %841
        %843 = vrot.lane.b32.xlu0 %v810, 104
        %v844 = vpop.permute.xlu0 %843
        %847 = vrot.lane.b32.xlu0 %v815, 120
        %v848 = vpop.permute.xlu0 %847
        %849 = vrot.lane.b32.xlu0 %v816, 120
        %v850 = vpop.permute.xlu0 %849
        %853 = vrot.lane.b32.xlu0 %v815, 112
        %v854 = vpop.permute.xlu0 %853
        %855 = vrot.lane.b32.xlu0 %v816, 112
        %v856 = vpop.permute.xlu0 %855
        %859 = vrot.lane.b32.xlu0 %v815, 104
        %v860 = vpop.permute.xlu0 %859
        %861 = vrot.lane.b32.xlu0 %v816, 104
        %v862 = vpop.permute.xlu0 %861
        %vm865 = vcmask 64512
        %v866 = vsel %vm865, %v803, 0
        %v868 = vsel %vm865, %v804, 0
        %v870 = vsel %vm865, %v809, 0
        %v872 = vsel %vm865, %v810, 0
        %874 = vmatprep.subr.mxu0 0.0
        %875 = vmatpush1.xpose.msra.mxu0 0.0
        %876 = vmatprep.subr.mxu0 0.0
        %877 = vmatpush1.xpose.msra.mxu0 0.0
        %878 = vmatprep.subr.mxu0 0.0
        %879 = vmatpush1.xpose.msra.mxu0 0.0
        %880 = vmatprep.subr.mxu0 0.0
        %881 = vmatpush1.xpose.msra.mxu0 0.0
        %882 = vmatprep.subr.mxu0 0.0
        %883 = vmatpush1.xpose.msra.mxu0 0.0
        %884 = vmatprep.subr.mxu0 0.0
        %885 = vmatpush1.xpose.msra.mxu0 0.0
        %886 = vmatprep.subr.mxu0 0.0
        %887 = vmatpush1.xpose.msra.mxu0 0.0
        %888 = vmatprep.subr.mxu0 0.0
        %889 = vmatpush1.xpose.msra.mxu0 0.0
        %890 = vmatprep.subr.mxu0 0.0
        %891 = vmatpush1.xpose.msra.mxu0 0.0
        %892 = vmatprep.subr.mxu0 0.0
        %893 = vmatpush1.xpose.msra.mxu0 0.0
        %894 = vmatprep.subr.mxu0 0.0
        %895 = vmatpush1.xpose.msra.mxu0 0.0
        %896 = vmatprep.subr.mxu0 0.0
        %897 = vmatpush1.xpose.msra.mxu0 0.0
        %898 = vmatprep.subr.mxu0 0.0
        %899 = vmatpush1.xpose.msra.mxu0 0.0
        %900 = vmatprep.subr.mxu0 0.0
        %901 = vmatpush1.xpose.msra.mxu0 0.0
        %902 = vmatprep.subr.mxu0 0.0
        %903 = vmatpush1.xpose.msra.mxu0 %v872
        %904 = vmatprep.subr.mxu0 0.0
        %905 = vmatpush1.xpose.msra.mxu0 %v870
        %906 = vmatprep.subr.mxu0 0.0
        %907 = vmatpush2.xpose.msra.mxu0 0.0
        %908 = vmatprep.subr.mxu0 0.0
        %909 = vmatpush2.xpose.msra.mxu0 0.0
        %910 = vmatprep.subr.mxu0 0.0
        %911 = vmatpush2.xpose.msra.mxu0 0.0
        %912 = vmatprep.subr.mxu0 0.0
        %913 = vmatpush2.xpose.msra.mxu0 0.0
        %914 = vmatprep.subr.mxu0 0.0
        %915 = vmatpush2.xpose.msra.mxu0 0.0
        %916 = vmatprep.subr.mxu0 0.0
        %917 = vmatpush2.xpose.msra.mxu0 0.0
        %918 = vmatprep.subr.mxu0 0.0
        %919 = vmatpush2.xpose.msra.mxu0 0.0
        %920 = vmatprep.subr.mxu0 0.0
        %921 = vmatpush2.xpose.msra.mxu0 0.0
        %922 = vmatprep.subr.mxu0 0.0
        %923 = vmatpush2.xpose.msra.mxu0 0.0
        %924 = vmatprep.subr.mxu0 0.0
        %925 = vmatpush2.xpose.msra.mxu0 0.0
        %926 = vmatprep.subr.mxu0 0.0
        %927 = vmatpush2.xpose.msra.mxu0 0.0
        %928 = vmatprep.subr.mxu0 0.0
        %929 = vmatpush2.xpose.msra.mxu0 0.0
        %930 = vmatprep.subr.mxu0 0.0
        %931 = vmatpush2.xpose.msra.mxu0 0.0
        %932 = vmatprep.subr.mxu0 0.0
        %933 = vmatpush2.xpose.msra.mxu0 0.0
        %934 = vmatprep.subr.mxu0 0.0
        %935 = vmatpush2.xpose.msra.mxu0 0.0
        %936 = vmatprep.subr.mxu0 0.0
        %937 = vmatpush2.xpose.msra.mxu0 0.0
        %938 = vmatprep.mubr.f32.mxu0 0.0
        %939 = vmatmul.mubr.f32.gmra.mxu0 %v866
        %v940 = vpop.f32.mrf.mxu0
        %v941 = vadd.f32 0.0, %v940
        %v942 = vpop.f32.mrf.mxu0
        %943 = vmatprep.mubr.f32.mxu0 0.0
        %944 = vmatmul.mubr.f32.gmra.mxu0 %v868
        %v945 = vpop.f32.mrf.mxu0
        %v946 = vadd.f32 0.0, %v945
        %v947 = vpop.f32.mrf.mxu0
        %948 = vdwg.mxu0
        %v949 = vsel %vm865, %v820, 0
        %v951 = vsel %vm865, %v822, 0
        %v953 = vsel %vm865, %v834, 0
        %v955 = vsel %vm865, %v836, 0
        %957 = vmatprep.subr.mxu0 0.0
        %958 = vmatpush1.xpose.msra.mxu0 0.0
        %959 = vmatprep.subr.mxu0 0.0
        %960 = vmatpush1.xpose.msra.mxu0 0.0
        %961 = vmatprep.subr.mxu0 0.0
        %962 = vmatpush1.xpose.msra.mxu0 0.0
        %963 = vmatprep.subr.mxu0 0.0
        %964 = vmatpush1.xpose.msra.mxu0 0.0
        %965 = vmatprep.subr.mxu0 0.0
        %966 = vmatpush1.xpose.msra.mxu0 0.0
        %967 = vmatprep.subr.mxu0 0.0
        %968 = vmatpush1.xpose.msra.mxu0 0.0
        %969 = vmatprep.subr.mxu0 0.0
        %970 = vmatpush1.xpose.msra.mxu0 0.0
        %971 = vmatprep.subr.mxu0 0.0
        %972 = vmatpush1.xpose.msra.mxu0 0.0
        %973 = vmatprep.subr.mxu0 0.0
        %974 = vmatpush1.xpose.msra.mxu0 0.0
        %975 = vmatprep.subr.mxu0 0.0
        %976 = vmatpush1.xpose.msra.mxu0 0.0
        %977 = vmatprep.subr.mxu0 0.0
        %978 = vmatpush1.xpose.msra.mxu0 0.0
        %979 = vmatprep.subr.mxu0 0.0
        %980 = vmatpush1.xpose.msra.mxu0 0.0
        %981 = vmatprep.subr.mxu0 0.0
        %982 = vmatpush1.xpose.msra.mxu0 0.0
        %983 = vmatprep.subr.mxu0 0.0
        %984 = vmatpush1.xpose.msra.mxu0 0.0
        %985 = vmatprep.subr.mxu0 0.0
        %986 = vmatpush1.xpose.msra.mxu0 %v955
        %987 = vmatprep.subr.mxu0 0.0
        %988 = vmatpush1.xpose.msra.mxu0 %v953
        %989 = vmatprep.subr.mxu0 0.0
        %990 = vmatpush2.xpose.msra.mxu0 0.0
        %991 = vmatprep.subr.mxu0 0.0
        %992 = vmatpush2.xpose.msra.mxu0 0.0
        %993 = vmatprep.subr.mxu0 0.0
        %994 = vmatpush2.xpose.msra.mxu0 0.0
        %995 = vmatprep.subr.mxu0 0.0
        %996 = vmatpush2.xpose.msra.mxu0 0.0
        %997 = vmatprep.subr.mxu0 0.0
        %998 = vmatpush2.xpose.msra.mxu0 0.0
        %999 = vmatprep.subr.mxu0 0.0
        %1000 = vmatpush2.xpose.msra.mxu0 0.0
        %1001 = vmatprep.subr.mxu0 0.0
        %1002 = vmatpush2.xpose.msra.mxu0 0.0
        %1003 = vmatprep.subr.mxu0 0.0
        %1004 = vmatpush2.xpose.msra.mxu0 0.0
        %1005 = vmatprep.subr.mxu0 0.0
        %1006 = vmatpush2.xpose.msra.mxu0 0.0
        %1007 = vmatprep.subr.mxu0 0.0
        %1008 = vmatpush2.xpose.msra.mxu0 0.0
        %1009 = vmatprep.subr.mxu0 0.0
        %1010 = vmatpush2.xpose.msra.mxu0 0.0
        %1011 = vmatprep.subr.mxu0 0.0
        %1012 = vmatpush2.xpose.msra.mxu0 0.0
        %1013 = vmatprep.subr.mxu0 0.0
        %1014 = vmatpush2.xpose.msra.mxu0 0.0
        %1015 = vmatprep.subr.mxu0 0.0
        %1016 = vmatpush2.xpose.msra.mxu0 0.0
        %1017 = vmatprep.subr.mxu0 0.0
        %1018 = vmatpush2.xpose.msra.mxu0 0.0
        %1019 = vmatprep.subr.mxu0 0.0
        %1020 = vmatpush2.xpose.msra.mxu0 0.0
        %1021 = vmatprep.mubr.f32.mxu0 0.0
        %1022 = vmatmul.mubr.f32.gmra.mxu0 %v949
        %v1023 = vpop.f32.mrf.mxu0
        %v1024 = vadd.f32 0.0, %v1023
        %v1025 = vpop.f32.mrf.mxu0
        %1026 = vmatprep.mubr.f32.mxu0 0.0
        %1027 = vmatmul.mubr.f32.gmra.mxu0 %v951
        %v1028 = vpop.f32.mrf.mxu0
        %v1029 = vadd.f32 0.0, %v1028
        %v1030 = vpop.f32.mrf.mxu0
        %1031 = vdwg.mxu0
        %v1032 = vsel %vm865, %v824, 0
        %v1034 = vsel %vm865, %v826, 0
        %v1036 = vsel %vm865, %v838, 0
        %v1038 = vsel %vm865, %v840, 0
        %1040 = vmatprep.subr.mxu0 0.0
        %1041 = vmatpush1.xpose.msra.mxu0 0.0
        %1042 = vmatprep.subr.mxu0 0.0
        %1043 = vmatpush1.xpose.msra.mxu0 0.0
        %1044 = vmatprep.subr.mxu0 0.0
        %1045 = vmatpush1.xpose.msra.mxu0 0.0
        %1046 = vmatprep.subr.mxu0 0.0
        %1047 = vmatpush1.xpose.msra.mxu0 0.0
        %1048 = vmatprep.subr.mxu0 0.0
        %1049 = vmatpush1.xpose.msra.mxu0 0.0
        %1050 = vmatprep.subr.mxu0 0.0
        %1051 = vmatpush1.xpose.msra.mxu0 0.0
        %1052 = vmatprep.subr.mxu0 0.0
        %1053 = vmatpush1.xpose.msra.mxu0 0.0
        %1054 = vmatprep.subr.mxu0 0.0
        %1055 = vmatpush1.xpose.msra.mxu0 0.0
        %1056 = vmatprep.subr.mxu0 0.0
        %1057 = vmatpush1.xpose.msra.mxu0 0.0
        %1058 = vmatprep.subr.mxu0 0.0
        %1059 = vmatpush1.xpose.msra.mxu0 0.0
        %1060 = vmatprep.subr.mxu0 0.0
        %1061 = vmatpush1.xpose.msra.mxu0 0.0
        %1062 = vmatprep.subr.mxu0 0.0
        %1063 = vmatpush1.xpose.msra.mxu0 0.0
        %1064 = vmatprep.subr.mxu0 0.0
        %1065 = vmatpush1.xpose.msra.mxu0 0.0
        %1066 = vmatprep.subr.mxu0 0.0
        %1067 = vmatpush1.xpose.msra.mxu0 0.0
        %1068 = vmatprep.subr.mxu0 0.0
        %1069 = vmatpush1.xpose.msra.mxu0 %v1038
        %1070 = vmatprep.subr.mxu0 0.0
        %1071 = vmatpush1.xpose.msra.mxu0 %v1036
        %1072 = vmatprep.subr.mxu0 0.0
        %1073 = vmatpush2.xpose.msra.mxu0 0.0
        %1074 = vmatprep.subr.mxu0 0.0
        %1075 = vmatpush2.xpose.msra.mxu0 0.0
        %1076 = vmatprep.subr.mxu0 0.0
        %1077 = vmatpush2.xpose.msra.mxu0 0.0
        %1078 = vmatprep.subr.mxu0 0.0
        %1079 = vmatpush2.xpose.msra.mxu0 0.0
        %1080 = vmatprep.subr.mxu0 0.0
        %1081 = vmatpush2.xpose.msra.mxu0 0.0
        %1082 = vmatprep.subr.mxu0 0.0
        %1083 = vmatpush2.xpose.msra.mxu0 0.0
        %1084 = vmatprep.subr.mxu0 0.0
        %1085 = vmatpush2.xpose.msra.mxu0 0.0
        %1086 = vmatprep.subr.mxu0 0.0
        %1087 = vmatpush2.xpose.msra.mxu0 0.0
        %1088 = vmatprep.subr.mxu0 0.0
        %1089 = vmatpush2.xpose.msra.mxu0 0.0
        %1090 = vmatprep.subr.mxu0 0.0
        %1091 = vmatpush2.xpose.msra.mxu0 0.0
        %1092 = vmatprep.subr.mxu0 0.0
        %1093 = vmatpush2.xpose.msra.mxu0 0.0
        %1094 = vmatprep.subr.mxu0 0.0
        %1095 = vmatpush2.xpose.msra.mxu0 0.0
        %1096 = vmatprep.subr.mxu0 0.0
        %1097 = vmatpush2.xpose.msra.mxu0 0.0
        %1098 = vmatprep.subr.mxu0 0.0
        %1099 = vmatpush2.xpose.msra.mxu0 0.0
        %1100 = vmatprep.subr.mxu0 0.0
        %1101 = vmatpush2.xpose.msra.mxu0 0.0
        %1102 = vmatprep.subr.mxu0 0.0
        %1103 = vmatpush2.xpose.msra.mxu0 0.0
        %1104 = vmatprep.mubr.f32.mxu0 0.0
        %1105 = vmatmul.mubr.f32.gmra.mxu0 %v1032
        %v1106 = vpop.f32.mrf.mxu0
        %v1107 = vadd.f32 0.0, %v1106
        %v1108 = vpop.f32.mrf.mxu0
        %1109 = vmatprep.mubr.f32.mxu0 0.0
        %1110 = vmatmul.mubr.f32.gmra.mxu0 %v1034
        %v1111 = vpop.f32.mrf.mxu0
        %v1112 = vadd.f32 0.0, %v1111
        %v1113 = vpop.f32.mrf.mxu0
        %1114 = vdwg.mxu0
        %v1115 = vsel %vm865, %v828, 0
        %v1117 = vsel %vm865, %v830, 0
        %v1119 = vsel %vm865, %v842, 0
        %v1121 = vsel %vm865, %v844, 0
        %1123 = vmatprep.subr.mxu0 0.0
        %1124 = vmatpush1.xpose.msra.mxu0 0.0
        %1125 = vmatprep.subr.mxu0 0.0
        %1126 = vmatpush1.xpose.msra.mxu0 0.0
        %1127 = vmatprep.subr.mxu0 0.0
        %1128 = vmatpush1.xpose.msra.mxu0 0.0
        %1129 = vmatprep.subr.mxu0 0.0
        %1130 = vmatpush1.xpose.msra.mxu0 0.0
        %1131 = vmatprep.subr.mxu0 0.0
        %1132 = vmatpush1.xpose.msra.mxu0 0.0
        %1133 = vmatprep.subr.mxu0 0.0
        %1134 = vmatpush1.xpose.msra.mxu0 0.0
        %1135 = vmatprep.subr.mxu0 0.0
        %1136 = vmatpush1.xpose.msra.mxu0 0.0
        %1137 = vmatprep.subr.mxu0 0.0
        %1138 = vmatpush1.xpose.msra.mxu0 0.0
        %1139 = vmatprep.subr.mxu0 0.0
        %1140 = vmatpush1.xpose.msra.mxu0 0.0
        %1141 = vmatprep.subr.mxu0 0.0
        %1142 = vmatpush1.xpose.msra.mxu0 0.0
        %1143 = vmatprep.subr.mxu0 0.0
        %1144 = vmatpush1.xpose.msra.mxu0 0.0
        %1145 = vmatprep.subr.mxu0 0.0
        %1146 = vmatpush1.xpose.msra.mxu0 0.0
        %1147 = vmatprep.subr.mxu0 0.0
        %1148 = vmatpush1.xpose.msra.mxu0 0.0
        %1149 = vmatprep.subr.mxu0 0.0
        %1150 = vmatpush1.xpose.msra.mxu0 0.0
        %1151 = vmatprep.subr.mxu0 0.0
        %1152 = vmatpush1.xpose.msra.mxu0 %v1121
        %1153 = vmatprep.subr.mxu0 0.0
        %1154 = vmatpush1.xpose.msra.mxu0 %v1119
        %1155 = vmatprep.subr.mxu0 0.0
        %1156 = vmatpush2.xpose.msra.mxu0 0.0
        %1157 = vmatprep.subr.mxu0 0.0
        %1158 = vmatpush2.xpose.msra.mxu0 0.0
        %1159 = vmatprep.subr.mxu0 0.0
        %1160 = vmatpush2.xpose.msra.mxu0 0.0
        %1161 = vmatprep.subr.mxu0 0.0
        %1162 = vmatpush2.xpose.msra.mxu0 0.0
        %1163 = vmatprep.subr.mxu0 0.0
        %1164 = vmatpush2.xpose.msra.mxu0 0.0
        %1165 = vmatprep.subr.mxu0 0.0
        %1166 = vmatpush2.xpose.msra.mxu0 0.0
        %1167 = vmatprep.subr.mxu0 0.0
        %1168 = vmatpush2.xpose.msra.mxu0 0.0
        %1169 = vmatprep.subr.mxu0 0.0
        %1170 = vmatpush2.xpose.msra.mxu0 0.0
        %1171 = vmatprep.subr.mxu0 0.0
        %1172 = vmatpush2.xpose.msra.mxu0 0.0
        %1173 = vmatprep.subr.mxu0 0.0
        %1174 = vmatpush2.xpose.msra.mxu0 0.0
        %1175 = vmatprep.subr.mxu0 0.0
        %1176 = vmatpush2.xpose.msra.mxu0 0.0
        %1177 = vmatprep.subr.mxu0 0.0
        %1178 = vmatpush2.xpose.msra.mxu0 0.0
        %1179 = vmatprep.subr.mxu0 0.0
        %1180 = vmatpush2.xpose.msra.mxu0 0.0
        %1181 = vmatprep.subr.mxu0 0.0
        %1182 = vmatpush2.xpose.msra.mxu0 0.0
        %1183 = vmatprep.subr.mxu0 0.0
        %1184 = vmatpush2.xpose.msra.mxu0 0.0
        %1185 = vmatprep.subr.mxu0 0.0
        %1186 = vmatpush2.xpose.msra.mxu0 0.0
        %1187 = vmatprep.mubr.f32.mxu0 0.0
        %1188 = vmatmul.mubr.f32.gmra.mxu0 %v1115
        %v1189 = vpop.f32.mrf.mxu0
        %v1190 = vadd.f32 0.0, %v1189
        %v1191 = vpop.f32.mrf.mxu0
        %1192 = vmatprep.mubr.f32.mxu0 0.0
        %1193 = vmatmul.mubr.f32.gmra.mxu0 %v1117
        %v1194 = vpop.f32.mrf.mxu0
        %v1195 = vadd.f32 0.0, %v1194
        %v1196 = vpop.f32.mrf.mxu0
        %1197 = vdwg.mxu0
        %v1198 = vmul.f32 %v941, 0.35355338
        %v1199 = vmul.f32 %v946, 0.35355338
        %v1200 = vmul.f32 %v1024, 0.35355338
        %v1201 = vmul.f32 %v1029, 0.35355338
        %v1202 = vmul.f32 %v1107, 0.35355338
        %v1203 = vmul.f32 %v1112, 0.35355338
        %v1204 = vmul.f32 %v1190, 0.35355338
        %v1205 = vmul.f32 %v1195, 0.35355338
        %v1206 = vadd.f32 %v1198, %v444
        %v1207 = vadd.f32 %v1199, %v444
        %v1208 = vadd.f32 %v1200, %v444
        %v1209 = vadd.f32 %v1201, %v444
        %v1210 = vadd.f32 %v1202, %v444
        %v1211 = vadd.f32 %v1203, %v444
        %v1212 = vadd.f32 %v1204, %v444
        %v1213 = vadd.f32 %v1205, %v444
        %v1214 = vsel %vm461, %v1206, -inf
        %1215 = vmax.xlane.f32.xlu0 %v1214
        %v1216 = vpop.xlane.xlu0 %1215
        %v1217 = vsel %vm461, %v1207, -inf
        %1218 = vmax.xlane.f32.xlu0 %v1217
        %v1219 = vpop.xlane.xlu0 %1218
        %v1220 = vsel %vm461, %v1208, -inf
        %1221 = vmax.xlane.f32.xlu0 %v1220
        %v1222 = vpop.xlane.xlu0 %1221
        %v1223 = vsel %vm461, %v1209, -inf
        %1224 = vmax.xlane.f32.xlu0 %v1223
        %v1225 = vpop.xlane.xlu0 %1224
        %v1226 = vsel %vm461, %v1210, -inf
        %1227 = vmax.xlane.f32.xlu0 %v1226
        %v1228 = vpop.xlane.xlu0 %1227
        %v1229 = vsel %vm461, %v1211, -inf
        %1230 = vmax.xlane.f32.xlu0 %v1229
        %v1231 = vpop.xlane.xlu0 %1230
        %v1232 = vsel %vm461, %v1212, -inf
        %1233 = vmax.xlane.f32.xlu0 %v1232
        %v1234 = vpop.xlane.xlu0 %1233
        %v1235 = vsel %vm461, %v1213, -inf
        %1236 = vmax.xlane.f32.xlu0 %v1235
        %v1237 = vpop.xlane.xlu0 %1236
        %v1238 = vsub.f32 %v1206, %v1216
        %v1239 = vsub.f32 %v1207, %v1219
        %v1240 = vsub.f32 %v1208, %v1222
        %v1241 = vsub.f32 %v1209, %v1225
        %v1242 = vsub.f32 %v1210, %v1228
        %v1243 = vsub.f32 %v1211, %v1231
        %v1244 = vsub.f32 %v1212, %v1234
        %v1245 = vsub.f32 %v1213, %v1237
        %v1246 = vmul.f32 %v1238, 1.442695
        %v1247 = vpow.pop %v1246
        %v1248 = vmul.f32 %v1239, 1.442695
        %v1249 = vpow.pop %v1248
        %v1250 = vmul.f32 %v1240, 1.442695
        %v1251 = vpow.pop %v1250
        %v1252 = vmul.f32 %v1241, 1.442695
        %v1253 = vpow.pop %v1252
        %v1254 = vmul.f32 %v1242, 1.442695
        %v1255 = vpow.pop %v1254
        %v1256 = vmul.f32 %v1243, 1.442695
        %v1257 = vpow.pop %v1256
        %v1258 = vmul.f32 %v1244, 1.442695
        %v1259 = vpow.pop %v1258
        %v1260 = vmul.f32 %v1245, 1.442695
        %v1261 = vpow.pop %v1260
        %v1262 = vsel %vm461, %v1247, 0.0
        %1263 = vadd.xlane.f32.xlu0 %v1262
        %v1264 = vpop.xlane.xlu0 %1263
        %v1265 = vsel %vm461, %v1249, 0.0
        %1266 = vadd.xlane.f32.xlu0 %v1265
        %v1267 = vpop.xlane.xlu0 %1266
        %v1268 = vsel %vm461, %v1251, 0.0
        %1269 = vadd.xlane.f32.xlu0 %v1268
        %v1270 = vpop.xlane.xlu0 %1269
        %v1271 = vsel %vm461, %v1253, 0.0
        %1272 = vadd.xlane.f32.xlu0 %v1271
        %v1273 = vpop.xlane.xlu0 %1272
        %v1274 = vsel %vm461, %v1255, 0.0
        %1275 = vadd.xlane.f32.xlu0 %v1274
        %v1276 = vpop.xlane.xlu0 %1275
        %v1277 = vsel %vm461, %v1257, 0.0
        %1278 = vadd.xlane.f32.xlu0 %v1277
        %v1279 = vpop.xlane.xlu0 %1278
        %v1280 = vsel %vm461, %v1259, 0.0
        %1281 = vadd.xlane.f32.xlu0 %v1280
        %v1282 = vpop.xlane.xlu0 %1281
        %v1283 = vsel %vm461, %v1261, 0.0
        %1284 = vadd.xlane.f32.xlu0 %v1283
        %v1285 = vpop.xlane.xlu0 %1284
        %v1286 = vrcp.pop %v1264
        %v1287 = vrcp.pop %v1267
        %v1288 = vrcp.pop %v1270
        %v1289 = vrcp.pop %v1273
        %v1290 = vrcp.pop %v1276
        %v1291 = vrcp.pop %v1279
        %v1292 = vrcp.pop %v1282
        %v1293 = vrcp.pop %v1285
        %v1294 = vmul.f32 %v1247, %v1286
        %v1295 = vmul.f32 %v1249, %v1287
        %v1296 = vmul.f32 %v1251, %v1288
        %v1297 = vmul.f32 %v1253, %v1289
        %v1298 = vmul.f32 %v1255, %v1290
        %v1299 = vmul.f32 %v1257, %v1291
        %v1300 = vmul.f32 %v1259, %v1292
        %v1301 = vmul.f32 %v1261, %v1293
        %v1303 = vsel %vm461, %v1294, 0
        %v1306 = vsel %vm461, %v1295, 0
        %1308 = vmatprep.subr.mxu0 0.0
        %1309 = vmatpush1.msra.mxu0 0.0
        %1310 = vmatprep.subr.mxu0 0.0
        %1311 = vmatpush1.msra.mxu0 0.0
        %1312 = vmatprep.subr.mxu0 0.0
        %1313 = vmatpush1.msra.mxu0 0.0
        %1314 = vmatprep.subr.mxu0 0.0
        %1315 = vmatpush1.msra.mxu0 0.0
        %1316 = vmatprep.subr.mxu0 0.0
        %1317 = vmatpush1.msra.mxu0 0.0
        %1318 = vmatprep.subr.mxu0 0.0
        %1319 = vmatpush1.msra.mxu0 0.0
        %1320 = vmatprep.subr.mxu0 0.0
        %1321 = vmatpush1.msra.mxu0 0.0
        %1322 = vmatprep.subr.mxu0 0.0
        %1323 = vmatpush1.msra.mxu0 0.0
        %1324 = vmatprep.subr.mxu0 0.0
        %1325 = vmatpush1.msra.mxu0 0.0
        %1326 = vmatprep.subr.mxu0 0.0
        %1327 = vmatpush1.msra.mxu0 0.0
        %1328 = vmatprep.subr.mxu0 0.0
        %1329 = vmatpush1.msra.mxu0 0.0
        %1330 = vmatprep.subr.mxu0 0.0
        %1331 = vmatpush1.msra.mxu0 0.0
        %1332 = vmatprep.subr.mxu0 0.0
        %1333 = vmatpush1.msra.mxu0 0.0
        %1334 = vmatprep.subr.mxu0 0.0
        %1335 = vmatpush1.msra.mxu0 0.0
        %1336 = vmatprep.subr.mxu0 0.0
        %1337 = vmatpush1.msra.mxu0 %v816
        %1338 = vmatprep.subr.mxu0 0.0
        %1339 = vmatpush1.msra.mxu0 %v815
        %1340 = vmatprep.subr.mxu0 0.0
        %1341 = vmatpush2.msra.mxu0 0.0
        %1342 = vmatprep.subr.mxu0 0.0
        %1343 = vmatpush2.msra.mxu0 0.0
        %1344 = vmatprep.subr.mxu0 0.0
        %1345 = vmatpush2.msra.mxu0 0.0
        %1346 = vmatprep.subr.mxu0 0.0
        %1347 = vmatpush2.msra.mxu0 0.0
        %1348 = vmatprep.subr.mxu0 0.0
        %1349 = vmatpush2.msra.mxu0 0.0
        %1350 = vmatprep.subr.mxu0 0.0
        %1351 = vmatpush2.msra.mxu0 0.0
        %1352 = vmatprep.subr.mxu0 0.0
        %1353 = vmatpush2.msra.mxu0 0.0
        %1354 = vmatprep.subr.mxu0 0.0
        %1355 = vmatpush2.msra.mxu0 0.0
        %1356 = vmatprep.subr.mxu0 0.0
        %1357 = vmatpush2.msra.mxu0 0.0
        %1358 = vmatprep.subr.mxu0 0.0
        %1359 = vmatpush2.msra.mxu0 0.0
        %1360 = vmatprep.subr.mxu0 0.0
        %1361 = vmatpush2.msra.mxu0 0.0
        %1362 = vmatprep.subr.mxu0 0.0
        %1363 = vmatpush2.msra.mxu0 0.0
        %1364 = vmatprep.subr.mxu0 0.0
        %1365 = vmatpush2.msra.mxu0 0.0
        %1366 = vmatprep.subr.mxu0 0.0
        %1367 = vmatpush2.msra.mxu0 0.0
        %1368 = vmatprep.subr.mxu0 0.0
        %1369 = vmatpush2.msra.mxu0 0.0
        %1370 = vmatprep.subr.mxu0 0.0
        %1371 = vmatpush2.msra.mxu0 0.0
        %1372 = vmatprep.mubr.f32.mxu0 0.0
        %1373 = vmatmul.mubr.f32.gmra.mxu0 %v1303
        %v1374 = vpop.f32.mrf.mxu0
        %v1375 = vadd.f32 0.0, %v1374
        %v1376 = vpop.f32.mrf.mxu0
        %1377 = vmatprep.mubr.f32.mxu0 0.0
        %1378 = vmatmul.mubr.f32.gmra.mxu0 %v1306
        %v1379 = vpop.f32.mrf.mxu0
        %v1380 = vadd.f32 0.0, %v1379
        %v1381 = vpop.f32.mrf.mxu0
        %1382 = vdwg.mxu0
        %v1384 = vsel %vm461, %v1296, 0
        %v1387 = vsel %vm461, %v1297, 0
        %1389 = vmatprep.subr.mxu0 0.0
        %1390 = vmatpush1.msra.mxu0 0.0
        %1391 = vmatprep.subr.mxu0 0.0
        %1392 = vmatpush1.msra.mxu0 0.0
        %1393 = vmatprep.subr.mxu0 0.0
        %1394 = vmatpush1.msra.mxu0 0.0
        %1395 = vmatprep.subr.mxu0 0.0
        %1396 = vmatpush1.msra.mxu0 0.0
        %1397 = vmatprep.subr.mxu0 0.0
        %1398 = vmatpush1.msra.mxu0 0.0
        %1399 = vmatprep.subr.mxu0 0.0
        %1400 = vmatpush1.msra.mxu0 0.0
        %1401 = vmatprep.subr.mxu0 0.0
        %1402 = vmatpush1.msra.mxu0 0.0
        %1403 = vmatprep.subr.mxu0 0.0
        %1404 = vmatpush1.msra.mxu0 0.0
        %1405 = vmatprep.subr.mxu0 0.0
        %1406 = vmatpush1.msra.mxu0 0.0
        %1407 = vmatprep.subr.mxu0 0.0
        %1408 = vmatpush1.msra.mxu0 0.0
        %1409 = vmatprep.subr.mxu0 0.0
        %1410 = vmatpush1.msra.mxu0 0.0
        %1411 = vmatprep.subr.mxu0 0.0
        %1412 = vmatpush1.msra.mxu0 0.0
        %1413 = vmatprep.subr.mxu0 0.0
        %1414 = vmatpush1.msra.mxu0 0.0
        %1415 = vmatprep.subr.mxu0 0.0
        %1416 = vmatpush1.msra.mxu0 0.0
        %1417 = vmatprep.subr.mxu0 0.0
        %1418 = vmatpush1.msra.mxu0 %v850
        %1419 = vmatprep.subr.mxu0 0.0
        %1420 = vmatpush1.msra.mxu0 %v848
        %1421 = vmatprep.subr.mxu0 0.0
        %1422 = vmatpush2.msra.mxu0 0.0
        %1423 = vmatprep.subr.mxu0 0.0
        %1424 = vmatpush2.msra.mxu0 0.0
        %1425 = vmatprep.subr.mxu0 0.0
        %1426 = vmatpush2.msra.mxu0 0.0
        %1427 = vmatprep.subr.mxu0 0.0
        %1428 = vmatpush2.msra.mxu0 0.0
        %1429 = vmatprep.subr.mxu0 0.0
        %1430 = vmatpush2.msra.mxu0 0.0
        %1431 = vmatprep.subr.mxu0 0.0
        %1432 = vmatpush2.msra.mxu0 0.0
        %1433 = vmatprep.subr.mxu0 0.0
        %1434 = vmatpush2.msra.mxu0 0.0
        %1435 = vmatprep.subr.mxu0 0.0
        %1436 = vmatpush2.msra.mxu0 0.0
        %1437 = vmatprep.subr.mxu0 0.0
        %1438 = vmatpush2.msra.mxu0 0.0
        %1439 = vmatprep.subr.mxu0 0.0
        %1440 = vmatpush2.msra.mxu0 0.0
        %1441 = vmatprep.subr.mxu0 0.0
        %1442 = vmatpush2.msra.mxu0 0.0
        %1443 = vmatprep.subr.mxu0 0.0
        %1444 = vmatpush2.msra.mxu0 0.0
        %1445 = vmatprep.subr.mxu0 0.0
        %1446 = vmatpush2.msra.mxu0 0.0
        %1447 = vmatprep.subr.mxu0 0.0
        %1448 = vmatpush2.msra.mxu0 0.0
        %1449 = vmatprep.subr.mxu0 0.0
        %1450 = vmatpush2.msra.mxu0 0.0
        %1451 = vmatprep.subr.mxu0 0.0
        %1452 = vmatpush2.msra.mxu0 0.0
        %1453 = vmatprep.mubr.f32.mxu0 0.0
        %1454 = vmatmul.mubr.f32.gmra.mxu0 %v1384
        %v1455 = vpop.f32.mrf.mxu0
        %v1456 = vadd.f32 0.0, %v1455
        %v1457 = vpop.f32.mrf.mxu0
        %1458 = vmatprep.mubr.f32.mxu0 0.0
        %1459 = vmatmul.mubr.f32.gmra.mxu0 %v1387
        %v1460 = vpop.f32.mrf.mxu0
        %v1461 = vadd.f32 0.0, %v1460
        %v1462 = vpop.f32.mrf.mxu0
        %1463 = vdwg.mxu0
        %v1465 = vsel %vm461, %v1298, 0
        %v1468 = vsel %vm461, %v1299, 0
        %1470 = vmatprep.subr.mxu0 0.0
        %1471 = vmatpush1.msra.mxu0 0.0
        %1472 = vmatprep.subr.mxu0 0.0
        %1473 = vmatpush1.msra.mxu0 0.0
        %1474 = vmatprep.subr.mxu0 0.0
        %1475 = vmatpush1.msra.mxu0 0.0
        %1476 = vmatprep.subr.mxu0 0.0
        %1477 = vmatpush1.msra.mxu0 0.0
        %1478 = vmatprep.subr.mxu0 0.0
        %1479 = vmatpush1.msra.mxu0 0.0
        %1480 = vmatprep.subr.mxu0 0.0
        %1481 = vmatpush1.msra.mxu0 0.0
        %1482 = vmatprep.subr.mxu0 0.0
        %1483 = vmatpush1.msra.mxu0 0.0
        %1484 = vmatprep.subr.mxu0 0.0
        %1485 = vmatpush1.msra.mxu0 0.0
        %1486 = vmatprep.subr.mxu0 0.0
        %1487 = vmatpush1.msra.mxu0 0.0
        %1488 = vmatprep.subr.mxu0 0.0
        %1489 = vmatpush1.msra.mxu0 0.0
        %1490 = vmatprep.subr.mxu0 0.0
        %1491 = vmatpush1.msra.mxu0 0.0
        %1492 = vmatprep.subr.mxu0 0.0
        %1493 = vmatpush1.msra.mxu0 0.0
        %1494 = vmatprep.subr.mxu0 0.0
        %1495 = vmatpush1.msra.mxu0 0.0
        %1496 = vmatprep.subr.mxu0 0.0
        %1497 = vmatpush1.msra.mxu0 0.0
        %1498 = vmatprep.subr.mxu0 0.0
        %1499 = vmatpush1.msra.mxu0 %v856
        %1500 = vmatprep.subr.mxu0 0.0
        %1501 = vmatpush1.msra.mxu0 %v854
        %1502 = vmatprep.subr.mxu0 0.0
        %1503 = vmatpush2.msra.mxu0 0.0
        %1504 = vmatprep.subr.mxu0 0.0
        %1505 = vmatpush2.msra.mxu0 0.0
        %1506 = vmatprep.subr.mxu0 0.0
        %1507 = vmatpush2.msra.mxu0 0.0
        %1508 = vmatprep.subr.mxu0 0.0
        %1509 = vmatpush2.msra.mxu0 0.0
        %1510 = vmatprep.subr.mxu0 0.0
        %1511 = vmatpush2.msra.mxu0 0.0
        %1512 = vmatprep.subr.mxu0 0.0
        %1513 = vmatpush2.msra.mxu0 0.0
        %1514 = vmatprep.subr.mxu0 0.0
        %1515 = vmatpush2.msra.mxu0 0.0
        %1516 = vmatprep.subr.mxu0 0.0
        %1517 = vmatpush2.msra.mxu0 0.0
        %1518 = vmatprep.subr.mxu0 0.0
        %1519 = vmatpush2.msra.mxu0 0.0
        %1520 = vmatprep.subr.mxu0 0.0
        %1521 = vmatpush2.msra.mxu0 0.0
        %1522 = vmatprep.subr.mxu0 0.0
        %1523 = vmatpush2.msra.mxu0 0.0
        %1524 = vmatprep.subr.mxu0 0.0
        %1525 = vmatpush2.msra.mxu0 0.0
        %1526 = vmatprep.subr.mxu0 0.0
        %1527 = vmatpush2.msra.mxu0 0.0
        %1528 = vmatprep.subr.mxu0 0.0
        %1529 = vmatpush2.msra.mxu0 0.0
        %1530 = vmatprep.subr.mxu0 0.0
        %1531 = vmatpush2.msra.mxu0 0.0
        %1532 = vmatprep.subr.mxu0 0.0
        %1533 = vmatpush2.msra.mxu0 0.0
        %1534 = vmatprep.mubr.f32.mxu0 0.0
        %1535 = vmatmul.mubr.f32.gmra.mxu0 %v1465
        %v1536 = vpop.f32.mrf.mxu0
        %v1537 = vadd.f32 0.0, %v1536
        %v1538 = vpop.f32.mrf.mxu0
        %1539 = vmatprep.mubr.f32.mxu0 0.0
        %1540 = vmatmul.mubr.f32.gmra.mxu0 %v1468
        %v1541 = vpop.f32.mrf.mxu0
        %v1542 = vadd.f32 0.0, %v1541
        %v1543 = vpop.f32.mrf.mxu0
        %1544 = vdwg.mxu0
        %v1546 = vsel %vm461, %v1300, 0
        %v1549 = vsel %vm461, %v1301, 0
        %1551 = vmatprep.subr.mxu0 0.0
        %1552 = vmatpush1.msra.mxu0 0.0
        %1553 = vmatprep.subr.mxu0 0.0
        %1554 = vmatpush1.msra.mxu0 0.0
        %1555 = vmatprep.subr.mxu0 0.0
        %1556 = vmatpush1.msra.mxu0 0.0
        %1557 = vmatprep.subr.mxu0 0.0
        %1558 = vmatpush1.msra.mxu0 0.0
        %1559 = vmatprep.subr.mxu0 0.0
        %1560 = vmatpush1.msra.mxu0 0.0
        %1561 = vmatprep.subr.mxu0 0.0
        %1562 = vmatpush1.msra.mxu0 0.0
        %1563 = vmatprep.subr.mxu0 0.0
        %1564 = vmatpush1.msra.mxu0 0.0
        %1565 = vmatprep.subr.mxu0 0.0
        %1566 = vmatpush1.msra.mxu0 0.0
        %1567 = vmatprep.subr.mxu0 0.0
        %1568 = vmatpush1.msra.mxu0 0.0
        %1569 = vmatprep.subr.mxu0 0.0
        %1570 = vmatpush1.msra.mxu0 0.0
        %1571 = vmatprep.subr.mxu0 0.0
        %1572 = vmatpush1.msra.mxu0 0.0
        %1573 = vmatprep.subr.mxu0 0.0
        %1574 = vmatpush1.msra.mxu0 0.0
        %1575 = vmatprep.subr.mxu0 0.0
        %1576 = vmatpush1.msra.mxu0 0.0
        %1577 = vmatprep.subr.mxu0 0.0
        %1578 = vmatpush1.msra.mxu0 0.0
        %1579 = vmatprep.subr.mxu0 0.0
        %1580 = vmatpush1.msra.mxu0 %v862
        %1581 = vmatprep.subr.mxu0 0.0
        %1582 = vmatpush1.msra.mxu0 %v860
        %1583 = vmatprep.subr.mxu0 0.0
        %1584 = vmatpush2.msra.mxu0 0.0
        %1585 = vmatprep.subr.mxu0 0.0
        %1586 = vmatpush2.msra.mxu0 0.0
        %1587 = vmatprep.subr.mxu0 0.0
        %1588 = vmatpush2.msra.mxu0 0.0
        %1589 = vmatprep.subr.mxu0 0.0
        %1590 = vmatpush2.msra.mxu0 0.0
        %1591 = vmatprep.subr.mxu0 0.0
        %1592 = vmatpush2.msra.mxu0 0.0
        %1593 = vmatprep.subr.mxu0 0.0
        %1594 = vmatpush2.msra.mxu0 0.0
        %1595 = vmatprep.subr.mxu0 0.0
        %1596 = vmatpush2.msra.mxu0 0.0
        %1597 = vmatprep.subr.mxu0 0.0
        %1598 = vmatpush2.msra.mxu0 0.0
        %1599 = vmatprep.subr.mxu0 0.0
        %1600 = vmatpush2.msra.mxu0 0.0
        %1601 = vmatprep.subr.mxu0 0.0
        %1602 = vmatpush2.msra.mxu0 0.0
        %1603 = vmatprep.subr.mxu0 0.0
        %1604 = vmatpush2.msra.mxu0 0.0
        %1605 = vmatprep.subr.mxu0 0.0
        %1606 = vmatpush2.msra.mxu0 0.0
        %1607 = vmatprep.subr.mxu0 0.0
        %1608 = vmatpush2.msra.mxu0 0.0
        %1609 = vmatprep.subr.mxu0 0.0
        %1610 = vmatpush2.msra.mxu0 0.0
        %1611 = vmatprep.subr.mxu0 0.0
        %1612 = vmatpush2.msra.mxu0 0.0
        %1613 = vmatprep.subr.mxu0 0.0
        %1614 = vmatpush2.msra.mxu0 0.0
        %1615 = vmatprep.mubr.f32.mxu0 0.0
        %1616 = vmatmul.mubr.f32.gmra.mxu0 %v1546
        %v1617 = vpop.f32.mrf.mxu0
        %v1618 = vadd.f32 0.0, %v1617
        %v1619 = vpop.f32.mrf.mxu0
        %1620 = vmatprep.mubr.f32.mxu0 0.0
        %1621 = vmatmul.mubr.f32.gmra.mxu0 %v1549
        %v1622 = vpop.f32.mrf.mxu0
        %v1623 = vadd.f32 0.0, %v1622
        %v1624 = vpop.f32.mrf.mxu0
        %1625 = vdwg.mxu0
        %1628 = vrot.lane.b32.xlu0 %v1456, 8
        %v1629 = vpop.permute.xlu0 %1628
        %1630 = vrot.lane.b32.xlu0 %v1461, 8
        %v1631 = vpop.permute.xlu0 %1630
        %1636 = vrot.lane.b32.xlu0 %v1537, 16
        %v1637 = vpop.permute.xlu0 %1636
        %1638 = vrot.lane.b32.xlu0 %v1542, 16
        %v1639 = vpop.permute.xlu0 %1638
        %1644 = vrot.lane.b32.xlu0 %v1618, 24
        %v1645 = vpop.permute.xlu0 %1644
        %1646 = vrot.lane.b32.xlu0 %v1623, 24
        %v1647 = vpop.permute.xlu0 %1646
        %v1650 = vsel %vm865, %v1375, %v1629
        %v1651 = vsel %vm865, %v1380, %v1631
        %v1652 = vsel %vm461, %v1650, %v1637
        %v1653 = vsel %vm461, %v1651, %v1639
        %vm1654 = vcmask 195584
        %v1655 = vsel %vm1654, %v1652, %v1645
        %v1656 = vsel %vm1654, %v1653, %v1647
        %v1657 = vpack.c.bf16 %v1656, %v1655
        %v1658 = vld [vmem:[%s6] sm:$0xf]
        %v1659 = vld [vmem:[%s6 + $0x4] sm:$0xf]
        %v1660 = vld [vmem:[%s6 + $0x8] sm:$0xf]
        %v1661 = vld [vmem:[%s6 + $0xc] sm:$0xf]
        %v1662 = vlaneseq
        %v1663 = vshrl.u32 %v1662, 7
        %v1664 = vsub.s32 3, %v1663
        %v1665 = vrot.slane %v552, %v1664
        %v1670 = vunpack.c.l.b16 %v1658
        %v1671 = vunpack.c.l.b16 %v1659
        %v1672 = vunpack.c.l.b16 %v1660
        %v1673 = vunpack.c.l.b16 %v1661
        %v1674 = vpack.c.b16 %v1671, %v1670
        %v1675 = vpack.c.b16 %v1673, %v1672
        %vm1678 = vcmask 261120
        %v1680 = vsel %vm1678, %v1657, 0
        %1682 = vmatprep.subr.bf16.mxu0 0
        %1683 = vmatpush1.bf16.msra.mxu0 0
        %1684 = vmatprep.subr.bf16.mxu0 0
        %1685 = vmatpush1.bf16.msra.mxu0 0
        %1686 = vmatprep.subr.bf16.mxu0 0
        %1687 = vmatpush1.bf16.msra.mxu0 0
        %1688 = vmatprep.subr.bf16.mxu0 0
        %1689 = vmatpush1.bf16.msra.mxu0 0
        %1690 = vmatprep.subr.bf16.mxu0 0
        %1691 = vmatpush1.bf16.msra.mxu0 0
        %1692 = vmatprep.subr.bf16.mxu0 0
        %1693 = vmatpush1.bf16.msra.mxu0 0
        %1694 = vmatprep.subr.bf16.mxu0 0
        %1695 = vmatpush1.bf16.msra.mxu0 %v1675
        %1696 = vmatprep.subr.bf16.mxu0 0
        %1697 = vmatpush1.bf16.msra.mxu0 %v1674
        %1698 = vmatprep.subr.bf16.mxu0 0
        %1699 = vmatpush2.bf16.msra.mxu0 0
        %1700 = vmatprep.subr.bf16.mxu0 0
        %1701 = vmatpush2.bf16.msra.mxu0 0
        %1702 = vmatprep.subr.bf16.mxu0 0
        %1703 = vmatpush2.bf16.msra.mxu0 0
        %1704 = vmatprep.subr.bf16.mxu0 0
        %1705 = vmatpush2.bf16.msra.mxu0 0
        %1706 = vmatprep.subr.bf16.mxu0 0
        %1707 = vmatpush2.bf16.msra.mxu0 0
        %1708 = vmatprep.subr.bf16.mxu0 0
        %1709 = vmatpush2.bf16.msra.mxu0 0
        %1710 = vmatprep.subr.bf16.mxu0 0
        %1711 = vmatpush2.bf16.msra.mxu0 0
        %1712 = vmatprep.subr.bf16.mxu0 0
        %1713 = vmatpush2.bf16.msra.mxu0 0
        %1714 = vmatprep.mubr.bf16.mxu0 0
        %1715 = vmatmul.mubr.bf16.gmra.mxu0 %v1680
        %v1716 = vpop.f32.mrf.mxu0
        %v1717 = vadd.f32 %v1665, %v1716
        %v1718 = vpop.f32.mrf.mxu0
        %v1719 = vpop.f32.mrf.mxu0
        %v1720 = vadd.f32 %v1665, %v1719
        %v1721 = vpop.f32.mrf.mxu0
        %1722 = vdwg.mxu0
        %v1723 = vadd.f32 %v550, %v1717
        %v1724 = vadd.f32 %v551, %v1720
        %1725 = vadd.xlane.f32.xlu0 %v1723
        %v1726 = vpop.xlane.xlu0 %1725
        %1727 = vadd.xlane.f32.xlu0 %v1724
        %v1728 = vpop.xlane.xlu0 %1727
        %v1729 = vmul.f32 %v1726, 0.03125
        %v1730 = vmul.f32 %v1728, 0.03125
        %v1731 = vsub.f32 %v1723, %v1729
        %v1732 = vsub.f32 %v1724, %v1730
        %v1733 = vmul.f32 %v1731, %v429
        %v1734 = vmul.f32 %v1732, %v429
        %v1735 = vmul.f32 %v1733, %v1733
        %v1736 = vmul.f32 %v1734, %v1734
        %1737 = vadd.xlane.f32.xlu0 %v1735
        %v1738 = vpop.xlane.xlu0 %1737
        %1739 = vadd.xlane.f32.xlu0 %v1736
        %v1740 = vpop.xlane.xlu0 %1739
        %v1741 = vmul.f32 %v1738, 0.03125
        %v1742 = vmul.f32 %v1740, 0.03125
        %v1743 = vadd.f32 %v1741, 1e-12
        %v1744 = vadd.f32 %v1742, 1e-12
        %v1745 = vrsqrt.pop %v1743
        %v1746 = vrsqrt.pop %v1744
        %v1747 = vmul.f32 %v1731, %v1745
        %v1748 = vmul.f32 %v1732, %v1746
        %v1749 = vlaneseq
        %v1750 = vshrl.u32 %v1749, 7
        %v1751 = vsub.s32 4, %v1750
        %v1752 = vrot.slane %v552, %v1751
        %v1753 = vmul.f32 %v1747, %v1752
        %v1754 = vmul.f32 %v1748, %v1752
        %v1755 = vlaneseq
        %v1756 = vshrl.u32 %v1755, 7
        %v1757 = vsub.s32 5, %v1756
        %v1758 = vrot.slane %v552, %v1757
        %v1759 = vadd.f32 %v1753, %v1758
        %v1760 = vadd.f32 %v1754, %v1758
        %v1761 = vpack.c.bf16 %v1760, %v1759
        %v1762 = vld [vmem:[#allocation2] sm:$0xf]
        %v1763 = vld [vmem:[#allocation2 + $0x4] sm:$0xf]
        %v1764 = vld [vmem:[#allocation2 + $0x8] sm:$0xf]
        %v1765 = vld [vmem:[#allocation2 + $0xc] sm:$0xf]
        %v1766 = vld [vmem:[#allocation2 + $0x10] sm:$0xf]
        %v1767 = vld [vmem:[#allocation2 + $0x14] sm:$0xf]
        %v1768 = vld [vmem:[#allocation2 + $0x18] sm:$0xf]
        %v1769 = vld [vmem:[#allocation2 + $0x1c] sm:$0xf]
        %v1770 = vld [vmem:[#allocation2 + $0x20] sm:$0xf]
        %v1771 = vld [vmem:[#allocation2 + $0x24] sm:$0xf]
        %v1772 = vld [vmem:[#allocation2 + $0x28] sm:$0xf]
        %v1773 = vld [vmem:[#allocation2 + $0x2c] sm:$0xf]
        %v1774 = vld [vmem:[#allocation2 + $0x30] sm:$0xf]
        %v1775 = vld [vmem:[#allocation2 + $0x34] sm:$0xf]
        %v1776 = vld [vmem:[#allocation2 + $0x38] sm:$0xf]
        %v1777 = vld [vmem:[#allocation2 + $0x3c] sm:$0xf]
        %v1778 = vlaneseq
        %v1779 = vshrl.u32 %v1778, 7
        %v1780 = vsub.s32 6, %v1779
        %v1781 = vrot.slane %v552, %v1780
        %v1798 = vunpack.c.l.b16 %v1762
        %v1799 = vunpack.c.l.b16 %v1763
        %v1800 = vunpack.c.l.b16 %v1764
        %v1801 = vunpack.c.l.b16 %v1765
        %v1802 = vunpack.c.l.b16 %v1766
        %v1803 = vunpack.c.l.b16 %v1767
        %v1804 = vunpack.c.l.b16 %v1768
        %v1805 = vunpack.c.l.b16 %v1769
        %v1806 = vunpack.c.l.b16 %v1770
        %v1807 = vunpack.c.l.b16 %v1771
        %v1808 = vunpack.c.l.b16 %v1772
        %v1809 = vunpack.c.l.b16 %v1773
        %v1810 = vunpack.c.l.b16 %v1774
        %v1811 = vunpack.c.l.b16 %v1775
        %v1812 = vunpack.c.l.b16 %v1776
        %v1813 = vunpack.c.l.b16 %v1777
        %v1814 = vpack.c.b16 %v1799, %v1798
        %v1815 = vpack.c.b16 %v1801, %v1800
        %v1816 = vpack.c.b16 %v1803, %v1802
        %v1817 = vpack.c.b16 %v1805, %v1804
        %v1818 = vpack.c.b16 %v1807, %v1806
        %v1819 = vpack.c.b16 %v1809, %v1808
        %v1820 = vpack.c.b16 %v1811, %v1810
        %v1821 = vpack.c.b16 %v1813, %v1812
        %1830 = vmatprep.subr.bf16.mxu0 0
        %1831 = vmatpush1.bf16.msra.mxu0 %v1821
        %1832 = vmatprep.subr.bf16.mxu0 0
        %1833 = vmatpush1.bf16.msra.mxu0 %v1820
        %1834 = vmatprep.subr.bf16.mxu0 0
        %1835 = vmatpush1.bf16.msra.mxu0 %v1819
        %1836 = vmatprep.subr.bf16.mxu0 0
        %1837 = vmatpush1.bf16.msra.mxu0 %v1818
        %1838 = vmatprep.subr.bf16.mxu0 0
        %1839 = vmatpush1.bf16.msra.mxu0 %v1817
        %1840 = vmatprep.subr.bf16.mxu0 0
        %1841 = vmatpush1.bf16.msra.mxu0 %v1816
        %1842 = vmatprep.subr.bf16.mxu0 0
        %1843 = vmatpush1.bf16.msra.mxu0 %v1815
        %1844 = vmatprep.subr.bf16.mxu0 0
        %1845 = vmatpush1.bf16.msra.mxu0 %v1814
        %1846 = vmatprep.subr.bf16.mxu0 0
        %1847 = vmatpush2.bf16.msra.mxu0 0
        %1848 = vmatprep.subr.bf16.mxu0 0
        %1849 = vmatpush2.bf16.msra.mxu0 0
        %1850 = vmatprep.subr.bf16.mxu0 0
        %1851 = vmatpush2.bf16.msra.mxu0 0
        %1852 = vmatprep.subr.bf16.mxu0 0
        %1853 = vmatpush2.bf16.msra.mxu0 0
        %1854 = vmatprep.subr.bf16.mxu0 0
        %1855 = vmatpush2.bf16.msra.mxu0 0
        %1856 = vmatprep.subr.bf16.mxu0 0
        %1857 = vmatpush2.bf16.msra.mxu0 0
        %1858 = vmatprep.subr.bf16.mxu0 0
        %1859 = vmatpush2.bf16.msra.mxu0 0
        %1860 = vmatprep.subr.bf16.mxu0 0
        %1861 = vmatpush2.bf16.msra.mxu0 0
        %1862 = vmatprep.mubr.bf16.mxu0 0
        %1863 = vmatmul.mubr.bf16.gmra.mxu0 %v1761
        %v1864 = vpop.f32.mrf.mxu0
        %v1865 = vadd.f32 %v1781, %v1864
        %v1866 = vpop.f32.mrf.mxu0
        %v1867 = vpop.f32.mrf.mxu0
        %v1868 = vadd.f32 %v1781, %v1867
        %v1869 = vpop.f32.mrf.mxu0
        %1870 = vdwg.mxu0
        %v1871 = vmul.f32 %v1865, %v1865
        %v1872 = vmul.f32 %v1868, %v1868
        %v1873 = vmul.f32 %v1865, %v1871
        %v1874 = vmul.f32 %v1868, %v1872
        %v1875 = vmul.f32 %v1873, 0.044715
        %v1876 = vmul.f32 %v1874, 0.044715
        %v1877 = vadd.f32 %v1865, %v1875
        %v1878 = vadd.f32 %v1868, %v1876
        %v1879 = vmul.f32 %v1877, 0.7978846
        %v1880 = vmul.f32 %v1878, 0.7978846
        %v1881 = vtanh.pop %v1879
        %v1882 = vtanh.pop %v1880
        %v1883 = vadd.f32 %v1881, 1.0
        %v1884 = vadd.f32 %v1882, 1.0
        %v1885 = vmul.f32 %v1883, 0.5
        %v1886 = vmul.f32 %v1884, 0.5
        %v1887 = vmul.f32 %v1865, %v1885
        %v1888 = vmul.f32 %v1868, %v1886
        %v1889 = vpack.c.bf16 %v1888, %v1887
        %v1890 = vld [vmem:[#allocation4] sm:$0xf]
        %v1891 = vld [vmem:[#allocation4 + $0x4] sm:$0xf]
        %v1892 = vld [vmem:[#allocation4 + $0x8] sm:$0xf]
        %v1893 = vld [vmem:[#allocation4 + $0xc] sm:$0xf]
        %v1894 = vld [vmem:[#allocation4 + $0x10] sm:$0xf]
        %v1895 = vld [vmem:[#allocation4 + $0x14] sm:$0xf]
        %v1896 = vld [vmem:[#allocation4 + $0x18] sm:$0xf]
        %v1897 = vld [vmem:[#allocation4 + $0x1c] sm:$0xf]
        %v1898 = vld [vmem:[#allocation4 + $0x20] sm:$0xf]
        %v1899 = vld [vmem:[#allocation4 + $0x24] sm:$0xf]
        %v1900 = vld [vmem:[#allocation4 + $0x28] sm:$0xf]
        %v1901 = vld [vmem:[#allocation4 + $0x2c] sm:$0xf]
        %v1902 = vld [vmem:[#allocation4 + $0x30] sm:$0xf]
        %v1903 = vld [vmem:[#allocation4 + $0x34] sm:$0xf]
        %v1904 = vld [vmem:[#allocation4 + $0x38] sm:$0xf]
        %v1905 = vld [vmem:[#allocation4 + $0x3c] sm:$0xf]
        %v1906 = vlaneseq
        %v1907 = vshrl.u32 %v1906, 7
        %v1908 = vsub.s32 7, %v1907
        %v1909 = vrot.slane %v552, %v1908
        %v1926 = vunpack.c.l.b16 %v1890
        %v1927 = vunpack.c.l.b16 %v1891
        %v1928 = vunpack.c.l.b16 %v1892
        %v1929 = vunpack.c.l.b16 %v1893
        %v1930 = vunpack.c.l.b16 %v1894
        %v1931 = vunpack.c.l.b16 %v1895
        %v1932 = vunpack.c.l.b16 %v1896
        %v1933 = vunpack.c.l.b16 %v1897
        %v1934 = vunpack.c.l.b16 %v1898
        %v1935 = vunpack.c.l.b16 %v1899
        %v1936 = vunpack.c.l.b16 %v1900
        %v1937 = vunpack.c.l.b16 %v1901
        %v1938 = vunpack.c.l.b16 %v1902
        %v1939 = vunpack.c.l.b16 %v1903
        %v1940 = vunpack.c.l.b16 %v1904
        %v1941 = vunpack.c.l.b16 %v1905
        %v1942 = vpack.c.b16 %v1927, %v1926
        %v1943 = vpack.c.b16 %v1929, %v1928
        %v1944 = vpack.c.b16 %v1931, %v1930
        %v1945 = vpack.c.b16 %v1933, %v1932
        %v1946 = vpack.c.b16 %v1935, %v1934
        %v1947 = vpack.c.b16 %v1937, %v1936
        %v1948 = vpack.c.b16 %v1939, %v1938
        %v1949 = vpack.c.b16 %v1941, %v1940
        %1958 = vmatprep.subr.bf16.mxu0 0
        %1959 = vmatpush1.bf16.msra.mxu0 %v1949
        %1960 = vmatprep.subr.bf16.mxu0 0
        %1961 = vmatpush1.bf16.msra.mxu0 %v1948
        %1962 = vmatprep.subr.bf16.mxu0 0
        %1963 = vmatpush1.bf16.msra.mxu0 %v1947
        %1964 = vmatprep.subr.bf16.mxu0 0
        %1965 = vmatpush1.bf16.msra.mxu0 %v1946
        %1966 = vmatprep.subr.bf16.mxu0 0
        %1967 = vmatpush1.bf16.msra.mxu0 %v1945
        %1968 = vmatprep.subr.bf16.mxu0 0
        %1969 = vmatpush1.bf16.msra.mxu0 %v1944
        %1970 = vmatprep.subr.bf16.mxu0 0
        %1971 = vmatpush1.bf16.msra.mxu0 %v1943
        %1972 = vmatprep.subr.bf16.mxu0 0
        %1973 = vmatpush1.bf16.msra.mxu0 %v1942
        %1974 = vmatprep.subr.bf16.mxu0 0
        %1975 = vmatpush2.bf16.msra.mxu0 0
        %1976 = vmatprep.subr.bf16.mxu0 0
        %1977 = vmatpush2.bf16.msra.mxu0 0
        %1978 = vmatprep.subr.bf16.mxu0 0
        %1979 = vmatpush2.bf16.msra.mxu0 0
        %1980 = vmatprep.subr.bf16.mxu0 0
        %1981 = vmatpush2.bf16.msra.mxu0 0
        %1982 = vmatprep.subr.bf16.mxu0 0
        %1983 = vmatpush2.bf16.msra.mxu0 0
        %1984 = vmatprep.subr.bf16.mxu0 0
        %1985 = vmatpush2.bf16.msra.mxu0 0
        %1986 = vmatprep.subr.bf16.mxu0 0
        %1987 = vmatpush2.bf16.msra.mxu0 0
        %1988 = vmatprep.subr.bf16.mxu0 0
        %1989 = vmatpush2.bf16.msra.mxu0 0
        %1990 = vmatprep.mubr.bf16.mxu0 0
        %1991 = vmatmul.mubr.bf16.gmra.mxu0 %v1889
        %v1992 = vpop.f32.mrf.mxu0
        %v1993 = vadd.f32 %v1909, %v1992
        %v1994 = vpop.f32.mrf.mxu0
        %v1995 = vpop.f32.mrf.mxu0
        %v1996 = vadd.f32 %v1909, %v1995
        %v1997 = vpop.f32.mrf.mxu0
        %1998 = vdwg.mxu0
        %v1999 = vadd.f32 %v1759, %v1993
        %v2000 = vadd.f32 %v1760, %v1996
        %2001 = vadd.xlane.f32.xlu0 %v1999
        %v2002 = vpop.xlane.xlu0 %2001
        %2003 = vadd.xlane.f32.xlu0 %v2000
        %v2004 = vpop.xlane.xlu0 %2003
        %v2005 = vmul.f32 %v2002, 0.03125
        %v2006 = vmul.f32 %v2004, 0.03125
        %v2007 = vsub.f32 %v1999, %v2005
        %v2008 = vsub.f32 %v2000, %v2006
        %v2009 = vmul.f32 %v2007, %v429
        %v2010 = vmul.f32 %v2008, %v429
        %v2011 = vmul.f32 %v2009, %v2009
        %v2012 = vmul.f32 %v2010, %v2010
        %2013 = vadd.xlane.f32.xlu0 %v2011
        %v2014 = vpop.xlane.xlu0 %2013
        %2015 = vadd.xlane.f32.xlu0 %v2012
        %v2016 = vpop.xlane.xlu0 %2015
        %v2017 = vmul.f32 %v2014, 0.03125
        %v2018 = vmul.f32 %v2016, 0.03125
        %v2019 = vadd.f32 %v2017, 1e-12
        %v2020 = vadd.f32 %v2018, 1e-12
        %v2021 = vrsqrt.pop %v2019
        %v2022 = vrsqrt.pop %v2020
        %v2023 = vmul.f32 %v2007, %v2021
        %v2024 = vmul.f32 %v2008, %v2022
        %v2025 = vlaneseq
        %v2026 = vshrl.u32 %v2025, 7
        %v2027 = vsub.s32 0, %v2026
        %v2028 = vrot.slane %v553, %v2027
        %v2029 = vmul.f32 %v2023, %v2028
        %v2030 = vmul.f32 %v2024, %v2028
        %v2031 = vlaneseq
        %v2032 = vshrl.u32 %v2031, 7
        %v2033 = vsub.s32 1, %v2032
        %v2034 = vrot.slane %v553, %v2033
        %v2035 = vadd.f32 %v2029, %v2034
        %v2036 = vadd.f32 %v2030, %v2034
        %s2037 = scalar_lea.vmem [#allocation6], 16
        %v2038 = vld [vmem:[%s2037] sm:$0xff]
        %v2039 = vld [vmem:[%s2037 + $0x8] sm:$0xff]
        %v2040 = vpack.c.bf16 %v2036, %v2035
        %s2041 = scalar_lea.vmem %s5, 192
        %v2042 = vld [vmem:[%s2041] sm:$0xff]
        %v2043 = vld [vmem:[%s2041 + $0x8] sm:$0xf]
        %v2044 = vld [vmem:[%s2041 + $0xc] sm:$0xff]
        %v2045 = vld [vmem:[%s2041 + $0x14] sm:$0xf]
        %v2046 = vld [vmem:[%s2041 + $0x18] sm:$0xff]
        %v2047 = vld [vmem:[%s2041 + $0x20] sm:$0xf]
        %v2048 = vld [vmem:[%s2041 + $0x24] sm:$0xff]
        %v2049 = vld [vmem:[%s2041 + $0x2c] sm:$0xf]
        %v2050 = vld [vmem:[%s2041 + $0x30] sm:$0xff]
        %v2051 = vld [vmem:[%s2041 + $0x38] sm:$0xf]
        %v2052 = vld [vmem:[%s2041 + $0x3c] sm:$0xff]
        %v2053 = vld [vmem:[%s2041 + $0x44] sm:$0xf]
        %v2054 = vld [vmem:[%s2041 + $0x48] sm:$0xff]
        %v2055 = vld [vmem:[%s2041 + $0x50] sm:$0xf]
        %v2056 = vld [vmem:[%s2041 + $0x54] sm:$0xff]
        %v2057 = vld [vmem:[%s2041 + $0x5c] sm:$0xf]
        %v2058 = vld [vmem:[%s2041 + $0x60] sm:$0xff]
        %v2059 = vld [vmem:[%s2041 + $0x68] sm:$0xf]
        %v2060 = vld [vmem:[%s2041 + $0x6c] sm:$0xff]
        %v2061 = vld [vmem:[%s2041 + $0x74] sm:$0xf]
        %v2062 = vld [vmem:[%s2041 + $0x78] sm:$0xff]
        %v2063 = vld [vmem:[%s2041 + $0x80] sm:$0xf]
        %v2064 = vld [vmem:[%s2041 + $0x84] sm:$0xff]
        %v2065 = vld [vmem:[%s2041 + $0x8c] sm:$0xf]
        %v2066 = vld [vmem:[%s2041 + $0x90] sm:$0xff]
        %v2067 = vld [vmem:[%s2041 + $0x98] sm:$0xf]
        %v2068 = vld [vmem:[%s2041 + $0x9c] sm:$0xff]
        %v2069 = vld [vmem:[%s2041 + $0xa4] sm:$0xf]
        %v2070 = vld [vmem:[%s2041 + $0xa8] sm:$0xff]
        %v2071 = vld [vmem:[%s2041 + $0xb0] sm:$0xf]
        %v2072 = vld [vmem:[%s2041 + $0xb4] sm:$0xff]
        %v2073 = vld [vmem:[%s2041 + $0xbc] sm:$0xf]
        %v2106 = vunpack.c.l.b16 %v2042
        %v2107 = vunpack.c.h.b16 %v2042
        %v2108 = vunpack.c.l.b16 %v2043
        %v2109 = vunpack.c.l.b16 %v2044
        %v2110 = vunpack.c.h.b16 %v2044
        %v2111 = vunpack.c.l.b16 %v2045
        %v2112 = vunpack.c.l.b16 %v2046
        %v2113 = vunpack.c.h.b16 %v2046
        %v2114 = vunpack.c.l.b16 %v2047
        %v2115 = vunpack.c.l.b16 %v2048
        %v2116 = vunpack.c.h.b16 %v2048
        %v2117 = vunpack.c.l.b16 %v2049
        %v2118 = vunpack.c.l.b16 %v2050
        %v2119 = vunpack.c.h.b16 %v2050
        %v2120 = vunpack.c.l.b16 %v2051
        %v2121 = vunpack.c.l.b16 %v2052
        %v2122 = vunpack.c.h.b16 %v2052
        %v2123 = vunpack.c.l.b16 %v2053
        %v2124 = vunpack.c.l.b16 %v2054
        %v2125 = vunpack.c.h.b16 %v2054
        %v2126 = vunpack.c.l.b16 %v2055
        %v2127 = vunpack.c.l.b16 %v2056
        %v2128 = vunpack.c.h.b16 %v2056
        %v2129 = vunpack.c.l.b16 %v2057
        %v2130 = vunpack.c.l.b16 %v2058
        %v2131 = vunpack.c.h.b16 %v2058
        %v2132 = vunpack.c.l.b16 %v2059
        %v2133 = vunpack.c.l.b16 %v2060
        %v2134 = vunpack.c.h.b16 %v2060
        %v2135 = vunpack.c.l.b16 %v2061
        %v2136 = vunpack.c.l.b16 %v2062
        %v2137 = vunpack.c.h.b16 %v2062
        %v2138 = vunpack.c.l.b16 %v2063
        %v2139 = vunpack.c.l.b16 %v2064
        %v2140 = vunpack.c.h.b16 %v2064
        %v2141 = vunpack.c.l.b16 %v2065
        %v2142 = vunpack.c.l.b16 %v2066
        %v2143 = vunpack.c.h.b16 %v2066
        %v2144 = vunpack.c.l.b16 %v2067
        %v2145 = vunpack.c.l.b16 %v2068
        %v2146 = vunpack.c.h.b16 %v2068
        %v2147 = vunpack.c.l.b16 %v2069
        %v2148 = vunpack.c.l.b16 %v2070
        %v2149 = vunpack.c.h.b16 %v2070
        %v2150 = vunpack.c.l.b16 %v2071
        %v2151 = vunpack.c.l.b16 %v2072
        %v2152 = vunpack.c.h.b16 %v2072
        %v2153 = vunpack.c.l.b16 %v2073
        %v2154 = vpack.c.b16 %v2109, %v2106
        %v2155 = vpack.c.b16 %v2110, %v2107
        %v2156 = vpack.c.b16 %v2111, %v2108
        %v2157 = vpack.c.b16 %v2115, %v2112
        %v2158 = vpack.c.b16 %v2116, %v2113
        %v2159 = vpack.c.b16 %v2117, %v2114
        %v2160 = vpack.c.b16 %v2121, %v2118
        %v2161 = vpack.c.b16 %v2122, %v2119
        %v2162 = vpack.c.b16 %v2123, %v2120
        %v2163 = vpack.c.b16 %v2127, %v2124
        %v2164 = vpack.c.b16 %v2128, %v2125
        %v2165 = vpack.c.b16 %v2129, %v2126
        %v2166 = vpack.c.b16 %v2133, %v2130
        %v2167 = vpack.c.b16 %v2134, %v2131
        %v2168 = vpack.c.b16 %v2135, %v2132
        %v2169 = vpack.c.b16 %v2139, %v2136
        %v2170 = vpack.c.b16 %v2140, %v2137
        %v2171 = vpack.c.b16 %v2141, %v2138
        %v2172 = vpack.c.b16 %v2145, %v2142
        %v2173 = vpack.c.b16 %v2146, %v2143
        %v2174 = vpack.c.b16 %v2147, %v2144
        %v2175 = vpack.c.b16 %v2151, %v2148
        %v2176 = vpack.c.b16 %v2152, %v2149
        %v2177 = vpack.c.b16 %v2153, %v2150
        %2202 = vmatprep.subr.bf16.mxu0 %v2176
        %2203 = vmatpush1.bf16.msra.mxu0 %v2175
        %2204 = vmatprep.subr.bf16.mxu0 %v2173
        %2205 = vmatpush1.bf16.msra.mxu0 %v2172
        %2206 = vmatprep.subr.bf16.mxu0 %v2170
        %2207 = vmatpush1.bf16.msra.mxu0 %v2169
        %2208 = vmatprep.subr.bf16.mxu0 %v2167
        %2209 = vmatpush1.bf16.msra.mxu0 %v2166
        %2210 = vmatprep.subr.bf16.mxu0 %v2164
        %2211 = vmatpush1.bf16.msra.mxu0 %v2163
        %2212 = vmatprep.subr.bf16.mxu0 %v2161
        %2213 = vmatpush1.bf16.msra.mxu0 %v2160
        %2214 = vmatprep.subr.bf16.mxu0 %v2158
        %2215 = vmatpush1.bf16.msra.mxu0 %v2157
        %2216 = vmatprep.subr.bf16.mxu0 %v2155
        %2217 = vmatpush1.bf16.msra.mxu0 %v2154
        %2218 = vmatprep.subr.bf16.mxu0 0
        %2219 = vmatpush2.bf16.msra.mxu0 0
        %2220 = vmatprep.subr.bf16.mxu0 0
        %2221 = vmatpush2.bf16.msra.mxu0 0
        %2222 = vmatprep.subr.bf16.mxu0 0
        %2223 = vmatpush2.bf16.msra.mxu0 0
        %2224 = vmatprep.subr.bf16.mxu0 0
        %2225 = vmatpush2.bf16.msra.mxu0 0
        %2226 = vmatprep.subr.bf16.mxu0 0
        %2227 = vmatpush2.bf16.msra.mxu0 0
        %2228 = vmatprep.subr.bf16.mxu0 0
        %2229 = vmatpush2.bf16.msra.mxu0 0
        %2230 = vmatprep.subr.bf16.mxu0 0
        %2231 = vmatpush2.bf16.msra.mxu0 0
        %2232 = vmatprep.subr.bf16.mxu0 0
        %2233 = vmatpush2.bf16.msra.mxu0 0
        %2234 = vmatprep.mubr.bf16.mxu0 0
        %2235 = vmatmul.mubr.bf16.gmra.mxu0 %v2040
        %v2236 = vpop.f32.mrf.mxu0
        %v2237 = vadd.f32 0.0, %v2236
        %v2238 = vpop.f32.mrf.mxu0
        %v2239 = vadd.f32 0.0, %v2238
        %v2240 = vpop.f32.mrf.mxu0
        %v2241 = vadd.f32 0.0, %v2240
        %v2242 = vpop.f32.mrf.mxu0
        %v2243 = vadd.f32 0.0, %v2242
        %2244 = vdwg.mxu0
        %2245 = vmatprep.subr.bf16.mxu0 0
        %2246 = vmatpush1.bf16.msra.mxu0 %v2177
        %2247 = vmatprep.subr.bf16.mxu0 0
        %2248 = vmatpush1.bf16.msra.mxu0 %v2174
        %2249 = vmatprep.subr.bf16.mxu0 0
        %2250 = vmatpush1.bf16.msra.mxu0 %v2171
        %2251 = vmatprep.subr.bf16.mxu0 0
        %2252 = vmatpush1.bf16.msra.mxu0 %v2168
        %2253 = vmatprep.subr.bf16.mxu0 0
        %2254 = vmatpush1.bf16.msra.mxu0 %v2165
        %2255 = vmatprep.subr.bf16.mxu0 0
        %2256 = vmatpush1.bf16.msra.mxu0 %v2162
        %2257 = vmatprep.subr.bf16.mxu0 0
        %2258 = vmatpush1.bf16.msra.mxu0 %v2159
        %2259 = vmatprep.subr.bf16.mxu0 0
        %2260 = vmatpush1.bf16.msra.mxu0 %v2156
        %2261 = vmatprep.subr.bf16.mxu0 0
        %2262 = vmatpush2.bf16.msra.mxu0 0
        %2263 = vmatprep.subr.bf16.mxu0 0
        %2264 = vmatpush2.bf16.msra.mxu0 0
        %2265 = vmatprep.subr.bf16.mxu0 0
        %2266 = vmatpush2.bf16.msra.mxu0 0
        %2267 = vmatprep.subr.bf16.mxu0 0
        %2268 = vmatpush2.bf16.msra.mxu0 0
        %2269 = vmatprep.subr.bf16.mxu0 0
        %2270 = vmatpush2.bf16.msra.mxu0 0
        %2271 = vmatprep.subr.bf16.mxu0 0
        %2272 = vmatpush2.bf16.msra.mxu0 0
        %2273 = vmatprep.subr.bf16.mxu0 0
        %2274 = vmatpush2.bf16.msra.mxu0 0
        %2275 = vmatprep.subr.bf16.mxu0 0
        %2276 = vmatpush2.bf16.msra.mxu0 0
        %2277 = vmatprep.mubr.bf16.mxu0 0
        %2278 = vmatmul.mubr.bf16.gmra.mxu0 %v2040
        %v2279 = vpop.f32.mrf.mxu0
        %v2280 = vadd.f32 0.0, %v2279
        %v2281 = vpop.f32.mrf.mxu0
        %v2282 = vpop.f32.mrf.mxu0
        %v2283 = vadd.f32 0.0, %v2282
        %v2284 = vpop.f32.mrf.mxu0
        %2285 = vdwg.mxu0
        %v2286 = vlaneseq
        %v2287 = vshrl.u32 %v2286, 7
        %v2288 = vsub.s32 0, %v2287
        %v2289 = vrot.slane %v2038, %v2288
        %v2290 = vadd.f32 %v2237, %v2289
        %v2291 = vadd.f32 %v2241, %v2289
        %v2292 = vlaneseq
        %v2293 = vshrl.u32 %v2292, 7
        %v2294 = vsub.s32 1, %v2293
        %v2295 = vrot.slane %v2038, %v2294
        %v2296 = vadd.f32 %v2239, %v2295
        %v2297 = vadd.f32 %v2243, %v2295
        %v2298 = vlaneseq
        %v2299 = vshrl.u32 %v2298, 7
        %v2300 = vsub.s32 2, %v2299
        %v2301 = vrot.slane %v2038, %v2300
        %v2302 = vadd.f32 %v2280, %v2301
        %v2303 = vadd.f32 %v2283, %v2301
        %2306 = vrot.lane.b32.xlu0 %v2290, 120
        %v2307 = vpop.permute.xlu0 %2306
        %2308 = vrot.lane.b32.xlu0 %v2291, 120
        %v2309 = vpop.permute.xlu0 %2308
        %2310 = vrot.lane.b32.xlu0 %v2290, 112
        %v2311 = vpop.permute.xlu0 %2310
        %2312 = vrot.lane.b32.xlu0 %v2291, 112
        %v2313 = vpop.permute.xlu0 %2312
        %2314 = vrot.lane.b32.xlu0 %v2290, 104
        %v2315 = vpop.permute.xlu0 %2314
        %2316 = vrot.lane.b32.xlu0 %v2291, 104
        %v2317 = vpop.permute.xlu0 %2316
        %2320 = vrot.lane.b32.xlu0 %v2296, 120
        %v2321 = vpop.permute.xlu0 %2320
        %2322 = vrot.lane.b32.xlu0 %v2297, 120
        %v2323 = vpop.permute.xlu0 %2322
        %2324 = vrot.lane.b32.xlu0 %v2296, 112
        %v2325 = vpop.permute.xlu0 %2324
        %2326 = vrot.lane.b32.xlu0 %v2297, 112
        %v2327 = vpop.permute.xlu0 %2326
        %2328 = vrot.lane.b32.xlu0 %v2296, 104
        %v2329 = vpop.permute.xlu0 %2328
        %2330 = vrot.lane.b32.xlu0 %v2297, 104
        %v2331 = vpop.permute.xlu0 %2330
        %2334 = vrot.lane.b32.xlu0 %v2302, 120
        %v2335 = vpop.permute.xlu0 %2334
        %2336 = vrot.lane.b32.xlu0 %v2303, 120
        %v2337 = vpop.permute.xlu0 %2336
        %2340 = vrot.lane.b32.xlu0 %v2302, 112
        %v2341 = vpop.permute.xlu0 %2340
        %2342 = vrot.lane.b32.xlu0 %v2303, 112
        %v2343 = vpop.permute.xlu0 %2342
        %2346 = vrot.lane.b32.xlu0 %v2302, 104
        %v2347 = vpop.permute.xlu0 %2346
        %2348 = vrot.lane.b32.xlu0 %v2303, 104
        %v2349 = vpop.permute.xlu0 %2348
        %v2352 = vsel %vm865, %v2290, 0
        %v2354 = vsel %vm865, %v2291, 0
        %v2356 = vsel %vm865, %v2296, 0
        %v2358 = vsel %vm865, %v2297, 0
        %2360 = vmatprep.subr.mxu0 0.0
        %2361 = vmatpush1.xpose.msra.mxu0 0.0
        %2362 = vmatprep.subr.mxu0 0.0
        %2363 = vmatpush1.xpose.msra.mxu0 0.0
        %2364 = vmatprep.subr.mxu0 0.0
        %2365 = vmatpush1.xpose.msra.mxu0 0.0
        %2366 = vmatprep.subr.mxu0 0.0
        %2367 = vmatpush1.xpose.msra.mxu0 0.0
        %2368 = vmatprep.subr.mxu0 0.0
        %2369 = vmatpush1.xpose.msra.mxu0 0.0
        %2370 = vmatprep.subr.mxu0 0.0
        %2371 = vmatpush1.xpose.msra.mxu0 0.0
        %2372 = vmatprep.subr.mxu0 0.0
        %2373 = vmatpush1.xpose.msra.mxu0 0.0
        %2374 = vmatprep.subr.mxu0 0.0
        %2375 = vmatpush1.xpose.msra.mxu0 0.0
        %2376 = vmatprep.subr.mxu0 0.0
        %2377 = vmatpush1.xpose.msra.mxu0 0.0
        %2378 = vmatprep.subr.mxu0 0.0
        %2379 = vmatpush1.xpose.msra.mxu0 0.0
        %2380 = vmatprep.subr.mxu0 0.0
        %2381 = vmatpush1.xpose.msra.mxu0 0.0
        %2382 = vmatprep.subr.mxu0 0.0
        %2383 = vmatpush1.xpose.msra.mxu0 0.0
        %2384 = vmatprep.subr.mxu0 0.0
        %2385 = vmatpush1.xpose.msra.mxu0 0.0
        %2386 = vmatprep.subr.mxu0 0.0
        %2387 = vmatpush1.xpose.msra.mxu0 0.0
        %2388 = vmatprep.subr.mxu0 0.0
        %2389 = vmatpush1.xpose.msra.mxu0 %v2358
        %2390 = vmatprep.subr.mxu0 0.0
        %2391 = vmatpush1.xpose.msra.mxu0 %v2356
        %2392 = vmatprep.subr.mxu0 0.0
        %2393 = vmatpush2.xpose.msra.mxu0 0.0
        %2394 = vmatprep.subr.mxu0 0.0
        %2395 = vmatpush2.xpose.msra.mxu0 0.0
        %2396 = vmatprep.subr.mxu0 0.0
        %2397 = vmatpush2.xpose.msra.mxu0 0.0
        %2398 = vmatprep.subr.mxu0 0.0
        %2399 = vmatpush2.xpose.msra.mxu0 0.0
        %2400 = vmatprep.subr.mxu0 0.0
        %2401 = vmatpush2.xpose.msra.mxu0 0.0
        %2402 = vmatprep.subr.mxu0 0.0
        %2403 = vmatpush2.xpose.msra.mxu0 0.0
        %2404 = vmatprep.subr.mxu0 0.0
        %2405 = vmatpush2.xpose.msra.mxu0 0.0
        %2406 = vmatprep.subr.mxu0 0.0
        %2407 = vmatpush2.xpose.msra.mxu0 0.0
        %2408 = vmatprep.subr.mxu0 0.0
        %2409 = vmatpush2.xpose.msra.mxu0 0.0
        %2410 = vmatprep.subr.mxu0 0.0
        %2411 = vmatpush2.xpose.msra.mxu0 0.0
        %2412 = vmatprep.subr.mxu0 0.0
        %2413 = vmatpush2.xpose.msra.mxu0 0.0
        %2414 = vmatprep.subr.mxu0 0.0
        %2415 = vmatpush2.xpose.msra.mxu0 0.0
        %2416 = vmatprep.subr.mxu0 0.0
        %2417 = vmatpush2.xpose.msra.mxu0 0.0
        %2418 = vmatprep.subr.mxu0 0.0
        %2419 = vmatpush2.xpose.msra.mxu0 0.0
        %2420 = vmatprep.subr.mxu0 0.0
        %2421 = vmatpush2.xpose.msra.mxu0 0.0
        %2422 = vmatprep.subr.mxu0 0.0
        %2423 = vmatpush2.xpose.msra.mxu0 0.0
        %2424 = vmatprep.mubr.f32.mxu0 0.0
        %2425 = vmatmul.mubr.f32.gmra.mxu0 %v2352
        %v2426 = vpop.f32.mrf.mxu0
        %v2427 = vadd.f32 0.0, %v2426
        %v2428 = vpop.f32.mrf.mxu0
        %2429 = vmatprep.mubr.f32.mxu0 0.0
        %2430 = vmatmul.mubr.f32.gmra.mxu0 %v2354
        %v2431 = vpop.f32.mrf.mxu0
        %v2432 = vadd.f32 0.0, %v2431
        %v2433 = vpop.f32.mrf.mxu0
        %2434 = vdwg.mxu0
        %v2435 = vsel %vm865, %v2307, 0
        %v2437 = vsel %vm865, %v2309, 0
        %v2439 = vsel %vm865, %v2321, 0
        %v2441 = vsel %vm865, %v2323, 0
        %2443 = vmatprep.subr.mxu0 0.0
        %2444 = vmatpush1.xpose.msra.mxu0 0.0
        %2445 = vmatprep.subr.mxu0 0.0
        %2446 = vmatpush1.xpose.msra.mxu0 0.0
        %2447 = vmatprep.subr.mxu0 0.0
        %2448 = vmatpush1.xpose.msra.mxu0 0.0
        %2449 = vmatprep.subr.mxu0 0.0
        %2450 = vmatpush1.xpose.msra.mxu0 0.0
        %2451 = vmatprep.subr.mxu0 0.0
        %2452 = vmatpush1.xpose.msra.mxu0 0.0
        %2453 = vmatprep.subr.mxu0 0.0
        %2454 = vmatpush1.xpose.msra.mxu0 0.0
        %2455 = vmatprep.subr.mxu0 0.0
        %2456 = vmatpush1.xpose.msra.mxu0 0.0
        %2457 = vmatprep.subr.mxu0 0.0
        %2458 = vmatpush1.xpose.msra.mxu0 0.0
        %2459 = vmatprep.subr.mxu0 0.0
        %2460 = vmatpush1.xpose.msra.mxu0 0.0
        %2461 = vmatprep.subr.mxu0 0.0
        %2462 = vmatpush1.xpose.msra.mxu0 0.0
        %2463 = vmatprep.subr.mxu0 0.0
        %2464 = vmatpush1.xpose.msra.mxu0 0.0
        %2465 = vmatprep.subr.mxu0 0.0
        %2466 = vmatpush1.xpose.msra.mxu0 0.0
        %2467 = vmatprep.subr.mxu0 0.0
        %2468 = vmatpush1.xpose.msra.mxu0 0.0
        %2469 = vmatprep.subr.mxu0 0.0
        %2470 = vmatpush1.xpose.msra.mxu0 0.0
        %2471 = vmatprep.subr.mxu0 0.0
        %2472 = vmatpush1.xpose.msra.mxu0 %v2441
        %2473 = vmatprep.subr.mxu0 0.0
        %2474 = vmatpush1.xpose.msra.mxu0 %v2439
        %2475 = vmatprep.subr.mxu0 0.0
        %2476 = vmatpush2.xpose.msra.mxu0 0.0
        %2477 = vmatprep.subr.mxu0 0.0
        %2478 = vmatpush2.xpose.msra.mxu0 0.0
        %2479 = vmatprep.subr.mxu0 0.0
        %2480 = vmatpush2.xpose.msra.mxu0 0.0
        %2481 = vmatprep.subr.mxu0 0.0
        %2482 = vmatpush2.xpose.msra.mxu0 0.0
        %2483 = vmatprep.subr.mxu0 0.0
        %2484 = vmatpush2.xpose.msra.mxu0 0.0
        %2485 = vmatprep.subr.mxu0 0.0
        %2486 = vmatpush2.xpose.msra.mxu0 0.0
        %2487 = vmatprep.subr.mxu0 0.0
        %2488 = vmatpush2.xpose.msra.mxu0 0.0
        %2489 = vmatprep.subr.mxu0 0.0
        %2490 = vmatpush2.xpose.msra.mxu0 0.0
        %2491 = vmatprep.subr.mxu0 0.0
        %2492 = vmatpush2.xpose.msra.mxu0 0.0
        %2493 = vmatprep.subr.mxu0 0.0
        %2494 = vmatpush2.xpose.msra.mxu0 0.0
        %2495 = vmatprep.subr.mxu0 0.0
        %2496 = vmatpush2.xpose.msra.mxu0 0.0
        %2497 = vmatprep.subr.mxu0 0.0
        %2498 = vmatpush2.xpose.msra.mxu0 0.0
        %2499 = vmatprep.subr.mxu0 0.0
        %2500 = vmatpush2.xpose.msra.mxu0 0.0
        %2501 = vmatprep.subr.mxu0 0.0
        %2502 = vmatpush2.xpose.msra.mxu0 0.0
        %2503 = vmatprep.subr.mxu0 0.0
        %2504 = vmatpush2.xpose.msra.mxu0 0.0
        %2505 = vmatprep.subr.mxu0 0.0
        %2506 = vmatpush2.xpose.msra.mxu0 0.0
        %2507 = vmatprep.mubr.f32.mxu0 0.0
        %2508 = vmatmul.mubr.f32.gmra.mxu0 %v2435
        %v2509 = vpop.f32.mrf.mxu0
        %v2510 = vadd.f32 0.0, %v2509
        %v2511 = vpop.f32.mrf.mxu0
        %2512 = vmatprep.mubr.f32.mxu0 0.0
        %2513 = vmatmul.mubr.f32.gmra.mxu0 %v2437
        %v2514 = vpop.f32.mrf.mxu0
        %v2515 = vadd.f32 0.0, %v2514
        %v2516 = vpop.f32.mrf.mxu0
        %2517 = vdwg.mxu0
        %v2518 = vsel %vm865, %v2311, 0
        %v2520 = vsel %vm865, %v2313, 0
        %v2522 = vsel %vm865, %v2325, 0
        %v2524 = vsel %vm865, %v2327, 0
        %2526 = vmatprep.subr.mxu0 0.0
        %2527 = vmatpush1.xpose.msra.mxu0 0.0
        %2528 = vmatprep.subr.mxu0 0.0
        %2529 = vmatpush1.xpose.msra.mxu0 0.0
        %2530 = vmatprep.subr.mxu0 0.0
        %2531 = vmatpush1.xpose.msra.mxu0 0.0
        %2532 = vmatprep.subr.mxu0 0.0
        %2533 = vmatpush1.xpose.msra.mxu0 0.0
        %2534 = vmatprep.subr.mxu0 0.0
        %2535 = vmatpush1.xpose.msra.mxu0 0.0
        %2536 = vmatprep.subr.mxu0 0.0
        %2537 = vmatpush1.xpose.msra.mxu0 0.0
        %2538 = vmatprep.subr.mxu0 0.0
        %2539 = vmatpush1.xpose.msra.mxu0 0.0
        %2540 = vmatprep.subr.mxu0 0.0
        %2541 = vmatpush1.xpose.msra.mxu0 0.0
        %2542 = vmatprep.subr.mxu0 0.0
        %2543 = vmatpush1.xpose.msra.mxu0 0.0
        %2544 = vmatprep.subr.mxu0 0.0
        %2545 = vmatpush1.xpose.msra.mxu0 0.0
        %2546 = vmatprep.subr.mxu0 0.0
        %2547 = vmatpush1.xpose.msra.mxu0 0.0
        %2548 = vmatprep.subr.mxu0 0.0
        %2549 = vmatpush1.xpose.msra.mxu0 0.0
        %2550 = vmatprep.subr.mxu0 0.0
        %2551 = vmatpush1.xpose.msra.mxu0 0.0
        %2552 = vmatprep.subr.mxu0 0.0
        %2553 = vmatpush1.xpose.msra.mxu0 0.0
        %2554 = vmatprep.subr.mxu0 0.0
        %2555 = vmatpush1.xpose.msra.mxu0 %v2524
        %2556 = vmatprep.subr.mxu0 0.0
        %2557 = vmatpush1.xpose.msra.mxu0 %v2522
        %2558 = vmatprep.subr.mxu0 0.0
        %2559 = vmatpush2.xpose.msra.mxu0 0.0
        %2560 = vmatprep.subr.mxu0 0.0
        %2561 = vmatpush2.xpose.msra.mxu0 0.0
        %2562 = vmatprep.subr.mxu0 0.0
        %2563 = vmatpush2.xpose.msra.mxu0 0.0
        %2564 = vmatprep.subr.mxu0 0.0
        %2565 = vmatpush2.xpose.msra.mxu0 0.0
        %2566 = vmatprep.subr.mxu0 0.0
        %2567 = vmatpush2.xpose.msra.mxu0 0.0
        %2568 = vmatprep.subr.mxu0 0.0
        %2569 = vmatpush2.xpose.msra.mxu0 0.0
        %2570 = vmatprep.subr.mxu0 0.0
        %2571 = vmatpush2.xpose.msra.mxu0 0.0
        %2572 = vmatprep.subr.mxu0 0.0
        %2573 = vmatpush2.xpose.msra.mxu0 0.0
        %2574 = vmatprep.subr.mxu0 0.0
        %2575 = vmatpush2.xpose.msra.mxu0 0.0
        %2576 = vmatprep.subr.mxu0 0.0
        %2577 = vmatpush2.xpose.msra.mxu0 0.0
        %2578 = vmatprep.subr.mxu0 0.0
        %2579 = vmatpush2.xpose.msra.mxu0 0.0
        %2580 = vmatprep.subr.mxu0 0.0
        %2581 = vmatpush2.xpose.msra.mxu0 0.0
        %2582 = vmatprep.subr.mxu0 0.0
        %2583 = vmatpush2.xpose.msra.mxu0 0.0
        %2584 = vmatprep.subr.mxu0 0.0
        %2585 = vmatpush2.xpose.msra.mxu0 0.0
        %2586 = vmatprep.subr.mxu0 0.0
        %2587 = vmatpush2.xpose.msra.mxu0 0.0
        %2588 = vmatprep.subr.mxu0 0.0
        %2589 = vmatpush2.xpose.msra.mxu0 0.0
        %2590 = vmatprep.mubr.f32.mxu0 0.0
        %2591 = vmatmul.mubr.f32.gmra.mxu0 %v2518
        %v2592 = vpop.f32.mrf.mxu0
        %v2593 = vadd.f32 0.0, %v2592
        %v2594 = vpop.f32.mrf.mxu0
        %2595 = vmatprep.mubr.f32.mxu0 0.0
        %2596 = vmatmul.mubr.f32.gmra.mxu0 %v2520
        %v2597 = vpop.f32.mrf.mxu0
        %v2598 = vadd.f32 0.0, %v2597
        %v2599 = vpop.f32.mrf.mxu0
        %2600 = vdwg.mxu0
        %v2601 = vsel %vm865, %v2315, 0
        %v2603 = vsel %vm865, %v2317, 0
        %v2605 = vsel %vm865, %v2329, 0
        %v2607 = vsel %vm865, %v2331, 0
        %2609 = vmatprep.subr.mxu0 0.0
        %2610 = vmatpush1.xpose.msra.mxu0 0.0
        %2611 = vmatprep.subr.mxu0 0.0
        %2612 = vmatpush1.xpose.msra.mxu0 0.0
        %2613 = vmatprep.subr.mxu0 0.0
        %2614 = vmatpush1.xpose.msra.mxu0 0.0
        %2615 = vmatprep.subr.mxu0 0.0
        %2616 = vmatpush1.xpose.msra.mxu0 0.0
        %2617 = vmatprep.subr.mxu0 0.0
        %2618 = vmatpush1.xpose.msra.mxu0 0.0
        %2619 = vmatprep.subr.mxu0 0.0
        %2620 = vmatpush1.xpose.msra.mxu0 0.0
        %2621 = vmatprep.subr.mxu0 0.0
        %2622 = vmatpush1.xpose.msra.mxu0 0.0
        %2623 = vmatprep.subr.mxu0 0.0
        %2624 = vmatpush1.xpose.msra.mxu0 0.0
        %2625 = vmatprep.subr.mxu0 0.0
        %2626 = vmatpush1.xpose.msra.mxu0 0.0
        %2627 = vmatprep.subr.mxu0 0.0
        %2628 = vmatpush1.xpose.msra.mxu0 0.0
        %2629 = vmatprep.subr.mxu0 0.0
        %2630 = vmatpush1.xpose.msra.mxu0 0.0
        %2631 = vmatprep.subr.mxu0 0.0
        %2632 = vmatpush1.xpose.msra.mxu0 0.0
        %2633 = vmatprep.subr.mxu0 0.0
        %2634 = vmatpush1.xpose.msra.mxu0 0.0
        %2635 = vmatprep.subr.mxu0 0.0
        %2636 = vmatpush1.xpose.msra.mxu0 0.0
        %2637 = vmatprep.subr.mxu0 0.0
        %2638 = vmatpush1.xpose.msra.mxu0 %v2607
        %2639 = vmatprep.subr.mxu0 0.0
        %2640 = vmatpush1.xpose.msra.mxu0 %v2605
        %2641 = vmatprep.subr.mxu0 0.0
        %2642 = vmatpush2.xpose.msra.mxu0 0.0
        %2643 = vmatprep.subr.mxu0 0.0
        %2644 = vmatpush2.xpose.msra.mxu0 0.0
        %2645 = vmatprep.subr.mxu0 0.0
        %2646 = vmatpush2.xpose.msra.mxu0 0.0
        %2647 = vmatprep.subr.mxu0 0.0
        %2648 = vmatpush2.xpose.msra.mxu0 0.0
        %2649 = vmatprep.subr.mxu0 0.0
        %2650 = vmatpush2.xpose.msra.mxu0 0.0
        %2651 = vmatprep.subr.mxu0 0.0
        %2652 = vmatpush2.xpose.msra.mxu0 0.0
        %2653 = vmatprep.subr.mxu0 0.0
        %2654 = vmatpush2.xpose.msra.mxu0 0.0
        %2655 = vmatprep.subr.mxu0 0.0
        %2656 = vmatpush2.xpose.msra.mxu0 0.0
        %2657 = vmatprep.subr.mxu0 0.0
        %2658 = vmatpush2.xpose.msra.mxu0 0.0
        %2659 = vmatprep.subr.mxu0 0.0
        %2660 = vmatpush2.xpose.msra.mxu0 0.0
        %2661 = vmatprep.subr.mxu0 0.0
        %2662 = vmatpush2.xpose.msra.mxu0 0.0
        %2663 = vmatprep.subr.mxu0 0.0
        %2664 = vmatpush2.xpose.msra.mxu0 0.0
        %2665 = vmatprep.subr.mxu0 0.0
        %2666 = vmatpush2.xpose.msra.mxu0 0.0
        %2667 = vmatprep.subr.mxu0 0.0
        %2668 = vmatpush2.xpose.msra.mxu0 0.0
        %2669 = vmatprep.subr.mxu0 0.0
        %2670 = vmatpush2.xpose.msra.mxu0 0.0
        %2671 = vmatprep.subr.mxu0 0.0
        %2672 = vmatpush2.xpose.msra.mxu0 0.0
        %2673 = vmatprep.mubr.f32.mxu0 0.0
        %2674 = vmatmul.mubr.f32.gmra.mxu0 %v2601
        %v2675 = vpop.f32.mrf.mxu0
        %v2676 = vadd.f32 0.0, %v2675
        %v2677 = vpop.f32.mrf.mxu0
        %2678 = vmatprep.mubr.f32.mxu0 0.0
        %2679 = vmatmul.mubr.f32.gmra.mxu0 %v2603
        %v2680 = vpop.f32.mrf.mxu0
        %v2681 = vadd.f32 0.0, %v2680
        %v2682 = vpop.f32.mrf.mxu0
        %2683 = vdwg.mxu0
        %v2684 = vmul.f32 %v2427, 0.35355338
        %v2685 = vmul.f32 %v2432, 0.35355338
        %v2686 = vmul.f32 %v2510, 0.35355338
        %v2687 = vmul.f32 %v2515, 0.35355338
        %v2688 = vmul.f32 %v2593, 0.35355338
        %v2689 = vmul.f32 %v2598, 0.35355338
        %v2690 = vmul.f32 %v2676, 0.35355338
        %v2691 = vmul.f32 %v2681, 0.35355338
        %v2692 = vadd.f32 %v2684, %v444
        %v2693 = vadd.f32 %v2685, %v444
        %v2694 = vadd.f32 %v2686, %v444
        %v2695 = vadd.f32 %v2687, %v444
        %v2696 = vadd.f32 %v2688, %v444
        %v2697 = vadd.f32 %v2689, %v444
        %v2698 = vadd.f32 %v2690, %v444
        %v2699 = vadd.f32 %v2691, %v444
        %v2700 = vsel %vm461, %v2692, -inf
        %2701 = vmax.xlane.f32.xlu0 %v2700
        %v2702 = vpop.xlane.xlu0 %2701
        %v2703 = vsel %vm461, %v2693, -inf
        %2704 = vmax.xlane.f32.xlu0 %v2703
        %v2705 = vpop.xlane.xlu0 %2704
        %v2706 = vsel %vm461, %v2694, -inf
        %2707 = vmax.xlane.f32.xlu0 %v2706
        %v2708 = vpop.xlane.xlu0 %2707
        %v2709 = vsel %vm461, %v2695, -inf
        %2710 = vmax.xlane.f32.xlu0 %v2709
        %v2711 = vpop.xlane.xlu0 %2710
        %v2712 = vsel %vm461, %v2696, -inf
        %2713 = vmax.xlane.f32.xlu0 %v2712
        %v2714 = vpop.xlane.xlu0 %2713
        %v2715 = vsel %vm461, %v2697, -inf
        %2716 = vmax.xlane.f32.xlu0 %v2715
        %v2717 = vpop.xlane.xlu0 %2716
        %v2718 = vsel %vm461, %v2698, -inf
        %2719 = vmax.xlane.f32.xlu0 %v2718
        %v2720 = vpop.xlane.xlu0 %2719
        %v2721 = vsel %vm461, %v2699, -inf
        %2722 = vmax.xlane.f32.xlu0 %v2721
        %v2723 = vpop.xlane.xlu0 %2722
        %v2724 = vsub.f32 %v2692, %v2702
        %v2725 = vsub.f32 %v2693, %v2705
        %v2726 = vsub.f32 %v2694, %v2708
        %v2727 = vsub.f32 %v2695, %v2711
        %v2728 = vsub.f32 %v2696, %v2714
        %v2729 = vsub.f32 %v2697, %v2717
        %v2730 = vsub.f32 %v2698, %v2720
        %v2731 = vsub.f32 %v2699, %v2723
        %v2732 = vmul.f32 %v2724, 1.442695
        %v2733 = vpow.pop %v2732
        %v2734 = vmul.f32 %v2725, 1.442695
        %v2735 = vpow.pop %v2734
        %v2736 = vmul.f32 %v2726, 1.442695
        %v2737 = vpow.pop %v2736
        %v2738 = vmul.f32 %v2727, 1.442695
        %v2739 = vpow.pop %v2738
        %v2740 = vmul.f32 %v2728, 1.442695
        %v2741 = vpow.pop %v2740
        %v2742 = vmul.f32 %v2729, 1.442695
        %v2743 = vpow.pop %v2742
        %v2744 = vmul.f32 %v2730, 1.442695
        %v2745 = vpow.pop %v2744
        %v2746 = vmul.f32 %v2731, 1.442695
        %v2747 = vpow.pop %v2746
        %v2748 = vsel %vm461, %v2733, 0.0
        %2749 = vadd.xlane.f32.xlu0 %v2748
        %v2750 = vpop.xlane.xlu0 %2749
        %v2751 = vsel %vm461, %v2735, 0.0
        %2752 = vadd.xlane.f32.xlu0 %v2751
        %v2753 = vpop.xlane.xlu0 %2752
        %v2754 = vsel %vm461, %v2737, 0.0
        %2755 = vadd.xlane.f32.xlu0 %v2754
        %v2756 = vpop.xlane.xlu0 %2755
        %v2757 = vsel %vm461, %v2739, 0.0
        %2758 = vadd.xlane.f32.xlu0 %v2757
        %v2759 = vpop.xlane.xlu0 %2758
        %v2760 = vsel %vm461, %v2741, 0.0
        %2761 = vadd.xlane.f32.xlu0 %v2760
        %v2762 = vpop.xlane.xlu0 %2761
        %v2763 = vsel %vm461, %v2743, 0.0
        %2764 = vadd.xlane.f32.xlu0 %v2763
        %v2765 = vpop.xlane.xlu0 %2764
        %v2766 = vsel %vm461, %v2745, 0.0
        %2767 = vadd.xlane.f32.xlu0 %v2766
        %v2768 = vpop.xlane.xlu0 %2767
        %v2769 = vsel %vm461, %v2747, 0.0
        %2770 = vadd.xlane.f32.xlu0 %v2769
        %v2771 = vpop.xlane.xlu0 %2770
        %v2772 = vrcp.pop %v2750
        %v2773 = vrcp.pop %v2753
        %v2774 = vrcp.pop %v2756
        %v2775 = vrcp.pop %v2759
        %v2776 = vrcp.pop %v2762
        %v2777 = vrcp.pop %v2765
        %v2778 = vrcp.pop %v2768
        %v2779 = vrcp.pop %v2771
        %v2780 = vmul.f32 %v2733, %v2772
        %v2781 = vmul.f32 %v2735, %v2773
        %v2782 = vmul.f32 %v2737, %v2774
        %v2783 = vmul.f32 %v2739, %v2775
        %v2784 = vmul.f32 %v2741, %v2776
        %v2785 = vmul.f32 %v2743, %v2777
        %v2786 = vmul.f32 %v2745, %v2778
        %v2787 = vmul.f32 %v2747, %v2779
        %v2789 = vsel %vm461, %v2780, 0
        %v2792 = vsel %vm461, %v2781, 0
        %2794 = vmatprep.subr.mxu0 0.0
        %2795 = vmatpush1.msra.mxu0 0.0
        %2796 = vmatprep.subr.mxu0 0.0
        %2797 = vmatpush1.msra.mxu0 0.0
        %2798 = vmatprep.subr.mxu0 0.0
        %2799 = vmatpush1.msra.mxu0 0.0
        %2800 = vmatprep.subr.mxu0 0.0
        %2801 = vmatpush1.msra.mxu0 0.0
        %2802 = vmatprep.subr.mxu0 0.0
        %2803 = vmatpush1.msra.mxu0 0.0
        %2804 = vmatprep.subr.mxu0 0.0
        %2805 = vmatpush1.msra.mxu0 0.0
        %2806 = vmatprep.subr.mxu0 0.0
        %2807 = vmatpush1.msra.mxu0 0.0
        %2808 = vmatprep.subr.mxu0 0.0
        %2809 = vmatpush1.msra.mxu0 0.0
        %2810 = vmatprep.subr.mxu0 0.0
        %2811 = vmatpush1.msra.mxu0 0.0
        %2812 = vmatprep.subr.mxu0 0.0
        %2813 = vmatpush1.msra.mxu0 0.0
        %2814 = vmatprep.subr.mxu0 0.0
        %2815 = vmatpush1.msra.mxu0 0.0
        %2816 = vmatprep.subr.mxu0 0.0
        %2817 = vmatpush1.msra.mxu0 0.0
        %2818 = vmatprep.subr.mxu0 0.0
        %2819 = vmatpush1.msra.mxu0 0.0
        %2820 = vmatprep.subr.mxu0 0.0
        %2821 = vmatpush1.msra.mxu0 0.0
        %2822 = vmatprep.subr.mxu0 0.0
        %2823 = vmatpush1.msra.mxu0 %v2303
        %2824 = vmatprep.subr.mxu0 0.0
        %2825 = vmatpush1.msra.mxu0 %v2302
        %2826 = vmatprep.subr.mxu0 0.0
        %2827 = vmatpush2.msra.mxu0 0.0
        %2828 = vmatprep.subr.mxu0 0.0
        %2829 = vmatpush2.msra.mxu0 0.0
        %2830 = vmatprep.subr.mxu0 0.0
        %2831 = vmatpush2.msra.mxu0 0.0
        %2832 = vmatprep.subr.mxu0 0.0
        %2833 = vmatpush2.msra.mxu0 0.0
        %2834 = vmatprep.subr.mxu0 0.0
        %2835 = vmatpush2.msra.mxu0 0.0
        %2836 = vmatprep.subr.mxu0 0.0
        %2837 = vmatpush2.msra.mxu0 0.0
        %2838 = vmatprep.subr.mxu0 0.0
        %2839 = vmatpush2.msra.mxu0 0.0
        %2840 = vmatprep.subr.mxu0 0.0
        %2841 = vmatpush2.msra.mxu0 0.0
        %2842 = vmatprep.subr.mxu0 0.0
        %2843 = vmatpush2.msra.mxu0 0.0
        %2844 = vmatprep.subr.mxu0 0.0
        %2845 = vmatpush2.msra.mxu0 0.0
        %2846 = vmatprep.subr.mxu0 0.0
        %2847 = vmatpush2.msra.mxu0 0.0
        %2848 = vmatprep.subr.mxu0 0.0
        %2849 = vmatpush2.msra.mxu0 0.0
        %2850 = vmatprep.subr.mxu0 0.0
        %2851 = vmatpush2.msra.mxu0 0.0
        %2852 = vmatprep.subr.mxu0 0.0
        %2853 = vmatpush2.msra.mxu0 0.0
        %2854 = vmatprep.subr.mxu0 0.0
        %2855 = vmatpush2.msra.mxu0 0.0
        %2856 = vmatprep.subr.mxu0 0.0
        %2857 = vmatpush2.msra.mxu0 0.0
        %2858 = vmatprep.mubr.f32.mxu0 0.0
        %2859 = vmatmul.mubr.f32.gmra.mxu0 %v2789
        %v2860 = vpop.f32.mrf.mxu0
        %v2861 = vadd.f32 0.0, %v2860
        %v2862 = vpop.f32.mrf.mxu0
        %2863 = vmatprep.mubr.f32.mxu0 0.0
        %2864 = vmatmul.mubr.f32.gmra.mxu0 %v2792
        %v2865 = vpop.f32.mrf.mxu0
        %v2866 = vadd.f32 0.0, %v2865
        %v2867 = vpop.f32.mrf.mxu0
        %2868 = vdwg.mxu0
        %v2870 = vsel %vm461, %v2782, 0
        %v2873 = vsel %vm461, %v2783, 0
        %2875 = vmatprep.subr.mxu0 0.0
        %2876 = vmatpush1.msra.mxu0 0.0
        %2877 = vmatprep.subr.mxu0 0.0
        %2878 = vmatpush1.msra.mxu0 0.0
        %2879 = vmatprep.subr.mxu0 0.0
        %2880 = vmatpush1.msra.mxu0 0.0
        %2881 = vmatprep.subr.mxu0 0.0
        %2882 = vmatpush1.msra.mxu0 0.0
        %2883 = vmatprep.subr.mxu0 0.0
        %2884 = vmatpush1.msra.mxu0 0.0
        %2885 = vmatprep.subr.mxu0 0.0
        %2886 = vmatpush1.msra.mxu0 0.0
        %2887 = vmatprep.subr.mxu0 0.0
        %2888 = vmatpush1.msra.mxu0 0.0
        %2889 = vmatprep.subr.mxu0 0.0
        %2890 = vmatpush1.msra.mxu0 0.0
        %2891 = vmatprep.subr.mxu0 0.0
        %2892 = vmatpush1.msra.mxu0 0.0
        %2893 = vmatprep.subr.mxu0 0.0
        %2894 = vmatpush1.msra.mxu0 0.0
        %2895 = vmatprep.subr.mxu0 0.0
        %2896 = vmatpush1.msra.mxu0 0.0
        %2897 = vmatprep.subr.mxu0 0.0
        %2898 = vmatpush1.msra.mxu0 0.0
        %2899 = vmatprep.subr.mxu0 0.0
        %2900 = vmatpush1.msra.mxu0 0.0
        %2901 = vmatprep.subr.mxu0 0.0
        %2902 = vmatpush1.msra.mxu0 0.0
        %2903 = vmatprep.subr.mxu0 0.0
        %2904 = vmatpush1.msra.mxu0 %v2337
        %2905 = vmatprep.subr.mxu0 0.0
        %2906 = vmatpush1.msra.mxu0 %v2335
        %2907 = vmatprep.subr.mxu0 0.0
        %2908 = vmatpush2.msra.mxu0 0.0
        %2909 = vmatprep.subr.mxu0 0.0
        %2910 = vmatpush2.msra.mxu0 0.0
        %2911 = vmatprep.subr.mxu0 0.0
        %2912 = vmatpush2.msra.mxu0 0.0
        %2913 = vmatprep.subr.mxu0 0.0
        %2914 = vmatpush2.msra.mxu0 0.0
        %2915 = vmatprep.subr.mxu0 0.0
        %2916 = vmatpush2.msra.mxu0 0.0
        %2917 = vmatprep.subr.mxu0 0.0
        %2918 = vmatpush2.msra.mxu0 0.0
        %2919 = vmatprep.subr.mxu0 0.0
        %2920 = vmatpush2.msra.mxu0 0.0
        %2921 = vmatprep.subr.mxu0 0.0
        %2922 = vmatpush2.msra.mxu0 0.0
        %2923 = vmatprep.subr.mxu0 0.0
        %2924 = vmatpush2.msra.mxu0 0.0
        %2925 = vmatprep.subr.mxu0 0.0
        %2926 = vmatpush2.msra.mxu0 0.0
        %2927 = vmatprep.subr.mxu0 0.0
        %2928 = vmatpush2.msra.mxu0 0.0
        %2929 = vmatprep.subr.mxu0 0.0
        %2930 = vmatpush2.msra.mxu0 0.0
        %2931 = vmatprep.subr.mxu0 0.0
        %2932 = vmatpush2.msra.mxu0 0.0
        %2933 = vmatprep.subr.mxu0 0.0
        %2934 = vmatpush2.msra.mxu0 0.0
        %2935 = vmatprep.subr.mxu0 0.0
        %2936 = vmatpush2.msra.mxu0 0.0
        %2937 = vmatprep.subr.mxu0 0.0
        %2938 = vmatpush2.msra.mxu0 0.0
        %2939 = vmatprep.mubr.f32.mxu0 0.0
        %2940 = vmatmul.mubr.f32.gmra.mxu0 %v2870
        %v2941 = vpop.f32.mrf.mxu0
        %v2942 = vadd.f32 0.0, %v2941
        %v2943 = vpop.f32.mrf.mxu0
        %2944 = vmatprep.mubr.f32.mxu0 0.0
        %2945 = vmatmul.mubr.f32.gmra.mxu0 %v2873
        %v2946 = vpop.f32.mrf.mxu0
        %v2947 = vadd.f32 0.0, %v2946
        %v2948 = vpop.f32.mrf.mxu0
        %2949 = vdwg.mxu0
        %v2951 = vsel %vm461, %v2784, 0
        %v2954 = vsel %vm461, %v2785, 0
        %2956 = vmatprep.subr.mxu0 0.0
        %2957 = vmatpush1.msra.mxu0 0.0
        %2958 = vmatprep.subr.mxu0 0.0
        %2959 = vmatpush1.msra.mxu0 0.0
        %2960 = vmatprep.subr.mxu0 0.0
        %2961 = vmatpush1.msra.mxu0 0.0
        %2962 = vmatprep.subr.mxu0 0.0
        %2963 = vmatpush1.msra.mxu0 0.0
        %2964 = vmatprep.subr.mxu0 0.0
        %2965 = vmatpush1.msra.mxu0 0.0
        %2966 = vmatprep.subr.mxu0 0.0
        %2967 = vmatpush1.msra.mxu0 0.0
        %2968 = vmatprep.subr.mxu0 0.0
        %2969 = vmatpush1.msra.mxu0 0.0
        %2970 = vmatprep.subr.mxu0 0.0
        %2971 = vmatpush1.msra.mxu0 0.0
        %2972 = vmatprep.subr.mxu0 0.0
        %2973 = vmatpush1.msra.mxu0 0.0
        %2974 = vmatprep.subr.mxu0 0.0
        %2975 = vmatpush1.msra.mxu0 0.0
        %2976 = vmatprep.subr.mxu0 0.0
        %2977 = vmatpush1.msra.mxu0 0.0
        %2978 = vmatprep.subr.mxu0 0.0
        %2979 = vmatpush1.msra.mxu0 0.0
        %2980 = vmatprep.subr.mxu0 0.0
        %2981 = vmatpush1.msra.mxu0 0.0
        %2982 = vmatprep.subr.mxu0 0.0
        %2983 = vmatpush1.msra.mxu0 0.0
        %2984 = vmatprep.subr.mxu0 0.0
        %2985 = vmatpush1.msra.mxu0 %v2343
        %2986 = vmatprep.subr.mxu0 0.0
        %2987 = vmatpush1.msra.mxu0 %v2341
        %2988 = vmatprep.subr.mxu0 0.0
        %2989 = vmatpush2.msra.mxu0 0.0
        %2990 = vmatprep.subr.mxu0 0.0
        %2991 = vmatpush2.msra.mxu0 0.0
        %2992 = vmatprep.subr.mxu0 0.0
        %2993 = vmatpush2.msra.mxu0 0.0
        %2994 = vmatprep.subr.mxu0 0.0
        %2995 = vmatpush2.msra.mxu0 0.0
        %2996 = vmatprep.subr.mxu0 0.0
        %2997 = vmatpush2.msra.mxu0 0.0
        %2998 = vmatprep.subr.mxu0 0.0
        %2999 = vmatpush2.msra.mxu0 0.0
        %3000 = vmatprep.subr.mxu0 0.0
        %3001 = vmatpush2.msra.mxu0 0.0
        %3002 = vmatprep.subr.mxu0 0.0
        %3003 = vmatpush2.msra.mxu0 0.0
        %3004 = vmatprep.subr.mxu0 0.0
        %3005 = vmatpush2.msra.mxu0 0.0
        %3006 = vmatprep.subr.mxu0 0.0
        %3007 = vmatpush2.msra.mxu0 0.0
        %3008 = vmatprep.subr.mxu0 0.0
        %3009 = vmatpush2.msra.mxu0 0.0
        %3010 = vmatprep.subr.mxu0 0.0
        %3011 = vmatpush2.msra.mxu0 0.0
        %3012 = vmatprep.subr.mxu0 0.0
        %3013 = vmatpush2.msra.mxu0 0.0
        %3014 = vmatprep.subr.mxu0 0.0
        %3015 = vmatpush2.msra.mxu0 0.0
        %3016 = vmatprep.subr.mxu0 0.0
        %3017 = vmatpush2.msra.mxu0 0.0
        %3018 = vmatprep.subr.mxu0 0.0
        %3019 = vmatpush2.msra.mxu0 0.0
        %3020 = vmatprep.mubr.f32.mxu0 0.0
        %3021 = vmatmul.mubr.f32.gmra.mxu0 %v2951
        %v3022 = vpop.f32.mrf.mxu0
        %v3023 = vadd.f32 0.0, %v3022
        %v3024 = vpop.f32.mrf.mxu0
        %3025 = vmatprep.mubr.f32.mxu0 0.0
        %3026 = vmatmul.mubr.f32.gmra.mxu0 %v2954
        %v3027 = vpop.f32.mrf.mxu0
        %v3028 = vadd.f32 0.0, %v3027
        %v3029 = vpop.f32.mrf.mxu0
        %3030 = vdwg.mxu0
        %v3032 = vsel %vm461, %v2786, 0
        %v3035 = vsel %vm461, %v2787, 0
        %3037 = vmatprep.subr.mxu0 0.0
        %3038 = vmatpush1.msra.mxu0 0.0
        %3039 = vmatprep.subr.mxu0 0.0
        %3040 = vmatpush1.msra.mxu0 0.0
        %3041 = vmatprep.subr.mxu0 0.0
        %3042 = vmatpush1.msra.mxu0 0.0
        %3043 = vmatprep.subr.mxu0 0.0
        %3044 = vmatpush1.msra.mxu0 0.0
        %3045 = vmatprep.subr.mxu0 0.0
        %3046 = vmatpush1.msra.mxu0 0.0
        %3047 = vmatprep.subr.mxu0 0.0
        %3048 = vmatpush1.msra.mxu0 0.0
        %3049 = vmatprep.subr.mxu0 0.0
        %3050 = vmatpush1.msra.mxu0 0.0
        %3051 = vmatprep.subr.mxu0 0.0
        %3052 = vmatpush1.msra.mxu0 0.0
        %3053 = vmatprep.subr.mxu0 0.0
        %3054 = vmatpush1.msra.mxu0 0.0
        %3055 = vmatprep.subr.mxu0 0.0
        %3056 = vmatpush1.msra.mxu0 0.0
        %3057 = vmatprep.subr.mxu0 0.0
        %3058 = vmatpush1.msra.mxu0 0.0
        %3059 = vmatprep.subr.mxu0 0.0
        %3060 = vmatpush1.msra.mxu0 0.0
        %3061 = vmatprep.subr.mxu0 0.0
        %3062 = vmatpush1.msra.mxu0 0.0
        %3063 = vmatprep.subr.mxu0 0.0
        %3064 = vmatpush1.msra.mxu0 0.0
        %3065 = vmatprep.subr.mxu0 0.0
        %3066 = vmatpush1.msra.mxu0 %v2349
        %3067 = vmatprep.subr.mxu0 0.0
        %3068 = vmatpush1.msra.mxu0 %v2347
        %3069 = vmatprep.subr.mxu0 0.0
        %3070 = vmatpush2.msra.mxu0 0.0
        %3071 = vmatprep.subr.mxu0 0.0
        %3072 = vmatpush2.msra.mxu0 0.0
        %3073 = vmatprep.subr.mxu0 0.0
        %3074 = vmatpush2.msra.mxu0 0.0
        %3075 = vmatprep.subr.mxu0 0.0
        %3076 = vmatpush2.msra.mxu0 0.0
        %3077 = vmatprep.subr.mxu0 0.0
        %3078 = vmatpush2.msra.mxu0 0.0
        %3079 = vmatprep.subr.mxu0 0.0
        %3080 = vmatpush2.msra.mxu0 0.0
        %3081 = vmatprep.subr.mxu0 0.0
        %3082 = vmatpush2.msra.mxu0 0.0
        %3083 = vmatprep.subr.mxu0 0.0
        %3084 = vmatpush2.msra.mxu0 0.0
        %3085 = vmatprep.subr.mxu0 0.0
        %3086 = vmatpush2.msra.mxu0 0.0
        %3087 = vmatprep.subr.mxu0 0.0
        %3088 = vmatpush2.msra.mxu0 0.0
        %3089 = vmatprep.subr.mxu0 0.0
        %3090 = vmatpush2.msra.mxu0 0.0
        %3091 = vmatprep.subr.mxu0 0.0
        %3092 = vmatpush2.msra.mxu0 0.0
        %3093 = vmatprep.subr.mxu0 0.0
        %3094 = vmatpush2.msra.mxu0 0.0
        %3095 = vmatprep.subr.mxu0 0.0
        %3096 = vmatpush2.msra.mxu0 0.0
        %3097 = vmatprep.subr.mxu0 0.0
        %3098 = vmatpush2.msra.mxu0 0.0
        %3099 = vmatprep.subr.mxu0 0.0
        %3100 = vmatpush2.msra.mxu0 0.0
        %3101 = vmatprep.mubr.f32.mxu0 0.0
        %3102 = vmatmul.mubr.f32.gmra.mxu0 %v3032
        %v3103 = vpop.f32.mrf.mxu0
        %v3104 = vadd.f32 0.0, %v3103
        %v3105 = vpop.f32.mrf.mxu0
        %3106 = vmatprep.mubr.f32.mxu0 0.0
        %3107 = vmatmul.mubr.f32.gmra.mxu0 %v3035
        %v3108 = vpop.f32.mrf.mxu0
        %v3109 = vadd.f32 0.0, %v3108
        %v3110 = vpop.f32.mrf.mxu0
        %3111 = vdwg.mxu0
        %3114 = vrot.lane.b32.xlu0 %v2942, 8
        %v3115 = vpop.permute.xlu0 %3114
        %3116 = vrot.lane.b32.xlu0 %v2947, 8
        %v3117 = vpop.permute.xlu0 %3116
        %3122 = vrot.lane.b32.xlu0 %v3023, 16
        %v3123 = vpop.permute.xlu0 %3122
        %3124 = vrot.lane.b32.xlu0 %v3028, 16
        %v3125 = vpop.permute.xlu0 %3124
        %3130 = vrot.lane.b32.xlu0 %v3104, 24
        %v3131 = vpop.permute.xlu0 %3130
        %3132 = vrot.lane.b32.xlu0 %v3109, 24
        %v3133 = vpop.permute.xlu0 %3132
        %v3136 = vsel %vm865, %v2861, %v3115
        %v3137 = vsel %vm865, %v2866, %v3117
        %v3138 = vsel %vm461, %v3136, %v3123
        %v3139 = vsel %vm461, %v3137, %v3125
        %v3140 = vsel %vm1654, %v3138, %v3131
        %v3141 = vsel %vm1654, %v3139, %v3133
        %v3142 = vpack.c.bf16 %v3141, %v3140
        %s3143 = scalar_lea.vmem %s6, 16
        %v3144 = vld [vmem:[%s3143] sm:$0xf]
        %v3145 = vld [vmem:[%s3143 + $0x4] sm:$0xf]
        %v3146 = vld [vmem:[%s3143 + $0x8] sm:$0xf]
        %v3147 = vld [vmem:[%s3143 + $0xc] sm:$0xf]
        %v3148 = vlaneseq
        %v3149 = vshrl.u32 %v3148, 7
        %v3150 = vsub.s32 3, %v3149
        %v3151 = vrot.slane %v2038, %v3150
        %v3156 = vunpack.c.l.b16 %v3144
        %v3157 = vunpack.c.l.b16 %v3145
        %v3158 = vunpack.c.l.b16 %v3146
        %v3159 = vunpack.c.l.b16 %v3147
        %v3160 = vpack.c.b16 %v3157, %v3156
        %v3161 = vpack.c.b16 %v3159, %v3158
        %v3165 = vsel %vm1678, %v3142, 0
        %3167 = vmatprep.subr.bf16.mxu0 0
        %3168 = vmatpush1.bf16.msra.mxu0 0
        %3169 = vmatprep.subr.bf16.mxu0 0
        %3170 = vmatpush1.bf16.msra.mxu0 0
        %3171 = vmatprep.subr.bf16.mxu0 0
        %3172 = vmatpush1.bf16.msra.mxu0 0
        %3173 = vmatprep.subr.bf16.mxu0 0
        %3174 = vmatpush1.bf16.msra.mxu0 0
        %3175 = vmatprep.subr.bf16.mxu0 0
        %3176 = vmatpush1.bf16.msra.mxu0 0
        %3177 = vmatprep.subr.bf16.mxu0 0
        %3178 = vmatpush1.bf16.msra.mxu0 0
        %3179 = vmatprep.subr.bf16.mxu0 0
        %3180 = vmatpush1.bf16.msra.mxu0 %v3161
        %3181 = vmatprep.subr.bf16.mxu0 0
        %3182 = vmatpush1.bf16.msra.mxu0 %v3160
        %3183 = vmatprep.subr.bf16.mxu0 0
        %3184 = vmatpush2.bf16.msra.mxu0 0
        %3185 = vmatprep.subr.bf16.mxu0 0
        %3186 = vmatpush2.bf16.msra.mxu0 0
        %3187 = vmatprep.subr.bf16.mxu0 0
        %3188 = vmatpush2.bf16.msra.mxu0 0
        %3189 = vmatprep.subr.bf16.mxu0 0
        %3190 = vmatpush2.bf16.msra.mxu0 0
        %3191 = vmatprep.subr.bf16.mxu0 0
        %3192 = vmatpush2.bf16.msra.mxu0 0
        %3193 = vmatprep.subr.bf16.mxu0 0
        %3194 = vmatpush2.bf16.msra.mxu0 0
        %3195 = vmatprep.subr.bf16.mxu0 0
        %3196 = vmatpush2.bf16.msra.mxu0 0
        %3197 = vmatprep.subr.bf16.mxu0 0
        %3198 = vmatpush2.bf16.msra.mxu0 0
        %3199 = vmatprep.mubr.bf16.mxu0 0
        %3200 = vmatmul.mubr.bf16.gmra.mxu0 %v3165
        %v3201 = vpop.f32.mrf.mxu0
        %v3202 = vadd.f32 %v3151, %v3201
        %v3203 = vpop.f32.mrf.mxu0
        %v3204 = vpop.f32.mrf.mxu0
        %v3205 = vadd.f32 %v3151, %v3204
        %v3206 = vpop.f32.mrf.mxu0
        %3207 = vdwg.mxu0
        %v3208 = vadd.f32 %v2035, %v3202
        %v3209 = vadd.f32 %v2036, %v3205
        %3210 = vadd.xlane.f32.xlu0 %v3208
        %v3211 = vpop.xlane.xlu0 %3210
        %3212 = vadd.xlane.f32.xlu0 %v3209
        %v3213 = vpop.xlane.xlu0 %3212
        %v3214 = vmul.f32 %v3211, 0.03125
        %v3215 = vmul.f32 %v3213, 0.03125
        %v3216 = vsub.f32 %v3208, %v3214
        %v3217 = vsub.f32 %v3209, %v3215
        %v3218 = vmul.f32 %v3216, %v429
        %v3219 = vmul.f32 %v3217, %v429
        %v3220 = vmul.f32 %v3218, %v3218
        %v3221 = vmul.f32 %v3219, %v3219
        %3222 = vadd.xlane.f32.xlu0 %v3220
        %v3223 = vpop.xlane.xlu0 %3222
        %3224 = vadd.xlane.f32.xlu0 %v3221
        %v3225 = vpop.xlane.xlu0 %3224
        %v3226 = vmul.f32 %v3223, 0.03125
        %v3227 = vmul.f32 %v3225, 0.03125
        %v3228 = vadd.f32 %v3226, 1e-12
        %v3229 = vadd.f32 %v3227, 1e-12
        %v3230 = vrsqrt.pop %v3228
        %v3231 = vrsqrt.pop %v3229
        %v3232 = vmul.f32 %v3216, %v3230
        %v3233 = vmul.f32 %v3217, %v3231
        %v3234 = vlaneseq
        %v3235 = vshrl.u32 %v3234, 7
        %v3236 = vsub.s32 4, %v3235
        %v3237 = vrot.slane %v2038, %v3236
        %v3238 = vmul.f32 %v3232, %v3237
        %v3239 = vmul.f32 %v3233, %v3237
        %v3240 = vlaneseq
        %v3241 = vshrl.u32 %v3240, 7
        %v3242 = vsub.s32 5, %v3241
        %v3243 = vrot.slane %v2038, %v3242
        %v3244 = vadd.f32 %v3238, %v3243
        %v3245 = vadd.f32 %v3239, %v3243
        %v3246 = vpack.c.bf16 %v3245, %v3244
        %s3247 = scalar_lea.vmem [#allocation2], 64
        %v3248 = vld [vmem:[%s3247] sm:$0xf]
        %v3249 = vld [vmem:[%s3247 + $0x4] sm:$0xf]
        %v3250 = vld [vmem:[%s3247 + $0x8] sm:$0xf]
        %v3251 = vld [vmem:[%s3247 + $0xc] sm:$0xf]
        %v3252 = vld [vmem:[%s3247 + $0x10] sm:$0xf]
        %v3253 = vld [vmem:[%s3247 + $0x14] sm:$0xf]
        %v3254 = vld [vmem:[%s3247 + $0x18] sm:$0xf]
        %v3255 = vld [vmem:[%s3247 + $0x1c] sm:$0xf]
        %v3256 = vld [vmem:[%s3247 + $0x20] sm:$0xf]
        %v3257 = vld [vmem:[%s3247 + $0x24] sm:$0xf]
        %v3258 = vld [vmem:[%s3247 + $0x28] sm:$0xf]
        %v3259 = vld [vmem:[%s3247 + $0x2c] sm:$0xf]
        %v3260 = vld [vmem:[%s3247 + $0x30] sm:$0xf]
        %v3261 = vld [vmem:[%s3247 + $0x34] sm:$0xf]
        %v3262 = vld [vmem:[%s3247 + $0x38] sm:$0xf]
        %v3263 = vld [vmem:[%s3247 + $0x3c] sm:$0xf]
        %v3264 = vlaneseq
        %v3265 = vshrl.u32 %v3264, 7
        %v3266 = vsub.s32 6, %v3265
        %v3267 = vrot.slane %v2038, %v3266
        %v3284 = vunpack.c.l.b16 %v3248
        %v3285 = vunpack.c.l.b16 %v3249
        %v3286 = vunpack.c.l.b16 %v3250
        %v3287 = vunpack.c.l.b16 %v3251
        %v3288 = vunpack.c.l.b16 %v3252
        %v3289 = vunpack.c.l.b16 %v3253
        %v3290 = vunpack.c.l.b16 %v3254
        %v3291 = vunpack.c.l.b16 %v3255
        %v3292 = vunpack.c.l.b16 %v3256
        %v3293 = vunpack.c.l.b16 %v3257
        %v3294 = vunpack.c.l.b16 %v3258
        %v3295 = vunpack.c.l.b16 %v3259
        %v3296 = vunpack.c.l.b16 %v3260
        %v3297 = vunpack.c.l.b16 %v3261
        %v3298 = vunpack.c.l.b16 %v3262
        %v3299 = vunpack.c.l.b16 %v3263
        %v3300 = vpack.c.b16 %v3285, %v3284
        %v3301 = vpack.c.b16 %v3287, %v3286
        %v3302 = vpack.c.b16 %v3289, %v3288
        %v3303 = vpack.c.b16 %v3291, %v3290
        %v3304 = vpack.c.b16 %v3293, %v3292
        %v3305 = vpack.c.b16 %v3295, %v3294
        %v3306 = vpack.c.b16 %v3297, %v3296
        %v3307 = vpack.c.b16 %v3299, %v3298
        %3316 = vmatprep.subr.bf16.mxu0 0
        %3317 = vmatpush1.bf16.msra.mxu0 %v3307
        %3318 = vmatprep.subr.bf16.mxu0 0
        %3319 = vmatpush1.bf16.msra.mxu0 %v3306
        %3320 = vmatprep.subr.bf16.mxu0 0
        %3321 = vmatpush1.bf16.msra.mxu0 %v3305
        %3322 = vmatprep.subr.bf16.mxu0 0
        %3323 = vmatpush1.bf16.msra.mxu0 %v3304
        %3324 = vmatprep.subr.bf16.mxu0 0
        %3325 = vmatpush1.bf16.msra.mxu0 %v3303
        %3326 = vmatprep.subr.bf16.mxu0 0
        %3327 = vmatpush1.bf16.msra.mxu0 %v3302
        %3328 = vmatprep.subr.bf16.mxu0 0
        %3329 = vmatpush1.bf16.msra.mxu0 %v3301
        %3330 = vmatprep.subr.bf16.mxu0 0
        %3331 = vmatpush1.bf16.msra.mxu0 %v3300
        %3332 = vmatprep.subr.bf16.mxu0 0
        %3333 = vmatpush2.bf16.msra.mxu0 0
        %3334 = vmatprep.subr.bf16.mxu0 0
        %3335 = vmatpush2.bf16.msra.mxu0 0
        %3336 = vmatprep.subr.bf16.mxu0 0
        %3337 = vmatpush2.bf16.msra.mxu0 0
        %3338 = vmatprep.subr.bf16.mxu0 0
        %3339 = vmatpush2.bf16.msra.mxu0 0
        %3340 = vmatprep.subr.bf16.mxu0 0
        %3341 = vmatpush2.bf16.msra.mxu0 0
        %3342 = vmatprep.subr.bf16.mxu0 0
        %3343 = vmatpush2.bf16.msra.mxu0 0
        %3344 = vmatprep.subr.bf16.mxu0 0
        %3345 = vmatpush2.bf16.msra.mxu0 0
        %3346 = vmatprep.subr.bf16.mxu0 0
        %3347 = vmatpush2.bf16.msra.mxu0 0
        %3348 = vmatprep.mubr.bf16.mxu0 0
        %3349 = vmatmul.mubr.bf16.gmra.mxu0 %v3246
        %v3350 = vpop.f32.mrf.mxu0
        %v3351 = vadd.f32 %v3267, %v3350
        %v3352 = vpop.f32.mrf.mxu0
        %v3353 = vpop.f32.mrf.mxu0
        %v3354 = vadd.f32 %v3267, %v3353
        %v3355 = vpop.f32.mrf.mxu0
        %3356 = vdwg.mxu0
        %v3357 = vmul.f32 %v3351, %v3351
        %v3358 = vmul.f32 %v3354, %v3354
        %v3359 = vmul.f32 %v3351, %v3357
        %v3360 = vmul.f32 %v3354, %v3358
        %v3361 = vmul.f32 %v3359, 0.044715
        %v3362 = vmul.f32 %v3360, 0.044715
        %v3363 = vadd.f32 %v3351, %v3361
        %v3364 = vadd.f32 %v3354, %v3362
        %v3365 = vmul.f32 %v3363, 0.7978846
        %v3366 = vmul.f32 %v3364, 0.7978846
        %v3367 = vtanh.pop %v3365
        %v3368 = vtanh.pop %v3366
        %v3369 = vadd.f32 %v3367, 1.0
        %v3370 = vadd.f32 %v3368, 1.0
        %v3371 = vmul.f32 %v3369, 0.5
        %v3372 = vmul.f32 %v3370, 0.5
        %v3373 = vmul.f32 %v3351, %v3371
        %v3374 = vmul.f32 %v3354, %v3372
        %v3375 = vpack.c.bf16 %v3374, %v3373
        %s3376 = scalar_lea.vmem [#allocation4], 64
        %v3377 = vld [vmem:[%s3376] sm:$0xf]
        %v3378 = vld [vmem:[%s3376 + $0x4] sm:$0xf]
        %v3379 = vld [vmem:[%s3376 + $0x8] sm:$0xf]
        %v3380 = vld [vmem:[%s3376 + $0xc] sm:$0xf]
        %v3381 = vld [vmem:[%s3376 + $0x10] sm:$0xf]
        %v3382 = vld [vmem:[%s3376 + $0x14] sm:$0xf]
        %v3383 = vld [vmem:[%s3376 + $0x18] sm:$0xf]
        %v3384 = vld [vmem:[%s3376 + $0x1c] sm:$0xf]
        %v3385 = vld [vmem:[%s3376 + $0x20] sm:$0xf]
        %v3386 = vld [vmem:[%s3376 + $0x24] sm:$0xf]
        %v3387 = vld [vmem:[%s3376 + $0x28] sm:$0xf]
        %v3388 = vld [vmem:[%s3376 + $0x2c] sm:$0xf]
        %v3389 = vld [vmem:[%s3376 + $0x30] sm:$0xf]
        %v3390 = vld [vmem:[%s3376 + $0x34] sm:$0xf]
        %v3391 = vld [vmem:[%s3376 + $0x38] sm:$0xf]
        %v3392 = vld [vmem:[%s3376 + $0x3c] sm:$0xf]
        %v3393 = vlaneseq
        %v3394 = vshrl.u32 %v3393, 7
        %v3395 = vsub.s32 7, %v3394
        %v3396 = vrot.slane %v2038, %v3395
        %v3413 = vunpack.c.l.b16 %v3377
        %v3414 = vunpack.c.l.b16 %v3378
        %v3415 = vunpack.c.l.b16 %v3379
        %v3416 = vunpack.c.l.b16 %v3380
        %v3417 = vunpack.c.l.b16 %v3381
        %v3418 = vunpack.c.l.b16 %v3382
        %v3419 = vunpack.c.l.b16 %v3383
        %v3420 = vunpack.c.l.b16 %v3384
        %v3421 = vunpack.c.l.b16 %v3385
        %v3422 = vunpack.c.l.b16 %v3386
        %v3423 = vunpack.c.l.b16 %v3387
        %v3424 = vunpack.c.l.b16 %v3388
        %v3425 = vunpack.c.l.b16 %v3389
        %v3426 = vunpack.c.l.b16 %v3390
        %v3427 = vunpack.c.l.b16 %v3391
        %v3428 = vunpack.c.l.b16 %v3392
        %v3429 = vpack.c.b16 %v3414, %v3413
        %v3430 = vpack.c.b16 %v3416, %v3415
        %v3431 = vpack.c.b16 %v3418, %v3417
        %v3432 = vpack.c.b16 %v3420, %v3419
        %v3433 = vpack.c.b16 %v3422, %v3421
        %v3434 = vpack.c.b16 %v3424, %v3423
        %v3435 = vpack.c.b16 %v3426, %v3425
        %v3436 = vpack.c.b16 %v3428, %v3427
        %3445 = vmatprep.subr.bf16.mxu0 0
        %3446 = vmatpush1.bf16.msra.mxu0 %v3436
        %3447 = vmatprep.subr.bf16.mxu0 0
        %3448 = vmatpush1.bf16.msra.mxu0 %v3435
        %3449 = vmatprep.subr.bf16.mxu0 0
        %3450 = vmatpush1.bf16.msra.mxu0 %v3434
        %3451 = vmatprep.subr.bf16.mxu0 0
        %3452 = vmatpush1.bf16.msra.mxu0 %v3433
        %3453 = vmatprep.subr.bf16.mxu0 0
        %3454 = vmatpush1.bf16.msra.mxu0 %v3432
        %3455 = vmatprep.subr.bf16.mxu0 0
        %3456 = vmatpush1.bf16.msra.mxu0 %v3431
        %3457 = vmatprep.subr.bf16.mxu0 0
        %3458 = vmatpush1.bf16.msra.mxu0 %v3430
        %3459 = vmatprep.subr.bf16.mxu0 0
        %3460 = vmatpush1.bf16.msra.mxu0 %v3429
        %3461 = vmatprep.subr.bf16.mxu0 0
        %3462 = vmatpush2.bf16.msra.mxu0 0
        %3463 = vmatprep.subr.bf16.mxu0 0
        %3464 = vmatpush2.bf16.msra.mxu0 0
        %3465 = vmatprep.subr.bf16.mxu0 0
        %3466 = vmatpush2.bf16.msra.mxu0 0
        %3467 = vmatprep.subr.bf16.mxu0 0
        %3468 = vmatpush2.bf16.msra.mxu0 0
        %3469 = vmatprep.subr.bf16.mxu0 0
        %3470 = vmatpush2.bf16.msra.mxu0 0
        %3471 = vmatprep.subr.bf16.mxu0 0
        %3472 = vmatpush2.bf16.msra.mxu0 0
        %3473 = vmatprep.subr.bf16.mxu0 0
        %3474 = vmatpush2.bf16.msra.mxu0 0
        %3475 = vmatprep.subr.bf16.mxu0 0
        %3476 = vmatpush2.bf16.msra.mxu0 0
        %3477 = vmatprep.mubr.bf16.mxu0 0
        %3478 = vmatmul.mubr.bf16.gmra.mxu0 %v3375
        %v3479 = vpop.f32.mrf.mxu0
        %v3480 = vadd.f32 %v3396, %v3479
        %v3481 = vpop.f32.mrf.mxu0
        %v3482 = vpop.f32.mrf.mxu0
        %v3483 = vadd.f32 %v3396, %v3482
        %v3484 = vpop.f32.mrf.mxu0
        %3485 = vdwg.mxu0
        %v3486 = vadd.f32 %v3244, %v3480
        %v3487 = vadd.f32 %v3245, %v3483
        %3488 = vadd.xlane.f32.xlu0 %v3486
        %v3489 = vpop.xlane.xlu0 %3488
        %3490 = vadd.xlane.f32.xlu0 %v3487
        %v3491 = vpop.xlane.xlu0 %3490
        %v3492 = vmul.f32 %v3489, 0.03125
        %v3493 = vmul.f32 %v3491, 0.03125
        %v3494 = vsub.f32 %v3486, %v3492
        %v3495 = vsub.f32 %v3487, %v3493
        %v3496 = vmul.f32 %v3494, %v429
        %v3497 = vmul.f32 %v3495, %v429
        %v3498 = vmul.f32 %v3496, %v3496
        %v3499 = vmul.f32 %v3497, %v3497
        %3500 = vadd.xlane.f32.xlu0 %v3498
        %v3501 = vpop.xlane.xlu0 %3500
        %3502 = vadd.xlane.f32.xlu0 %v3499
        %v3503 = vpop.xlane.xlu0 %3502
        %v3504 = vmul.f32 %v3501, 0.03125
        %v3505 = vmul.f32 %v3503, 0.03125
        %v3506 = vadd.f32 %v3504, 1e-12
        %v3507 = vadd.f32 %v3505, 1e-12
        %v3508 = vrsqrt.pop %v3506
        %v3509 = vrsqrt.pop %v3507
        %v3510 = vmul.f32 %v3494, %v3508
        %v3511 = vmul.f32 %v3495, %v3509
        %v3512 = vlaneseq
        %v3513 = vshrl.u32 %v3512, 7
        %v3514 = vsub.s32 0, %v3513
        %v3515 = vrot.slane %v2039, %v3514
        %v3516 = vmul.f32 %v3510, %v3515
        %v3517 = vmul.f32 %v3511, %v3515
        %v3518 = vlaneseq
        %v3519 = vshrl.u32 %v3518, 7
        %v3520 = vsub.s32 1, %v3519
        %v3521 = vrot.slane %v2039, %v3520
        %v3522 = vadd.f32 %v3516, %v3521
        %v3523 = vadd.f32 %v3517, %v3521
        %3524 = vst [vmem:[%s423] sm:$0xff] %v3522
        %3525 = vst [vmem:[%s423 + $0x8] sm:$0xff] %v3523
        %p3526 = scmp.lt.s32.totalorder %s23, 1
        %s3527 = scalar_select %p3526, %s23, 1
        %s3528 = smul.addr %s3527, 2
        %s3529 = smul.addr %s3528, 8
        %s3530 = scalar_lea.vmem %s10, %s3529
        // Predicated region
        $region73: #{mmbt_for_classification.1} parent=59 // pred_check
          %p3531 = pneg %p261
        $region74: #{mmbt_for_classification.1} parent=59 // pred_check_branch
          %3533 = sbr.rel (%p3531) target = $region76
        $region75: #{mmbt_for_classification.1} parent=59 // pred_region
          _
        $region76: #{mmbt_for_classification.1} parent=59 // pred_fallthru
          _
      $region60: #{mmbt_for_classification.1} parent=5 // pred_fallthru
        _
      %p3534 = scmp.le.s32.totalorder 2, %s18
      // Predicated region
      $region77: #{mmbt_for_classification.1} parent=5 // pred_check
        %p3535 = pneg %p3534
      $region78: #{mmbt_for_classification.1} parent=5 // pred_check_branch
        %3537 = sbr.rel (%p3535) target = $region80
      $region79: #{mmbt_for_classification.1} parent=5 // pred_region
        %s3538 = ssub.s32 %s18, 2
        // Predicated region
        $region81: #{mmbt_for_classification.1} parent=79 // pred_check
          %p3539 = pneg %p267
        $region82: #{mmbt_for_classification.1} parent=79 // pred_check_branch
          %3541 = sbr.rel (%p3539) target = $region84
        $region83: #{mmbt_for_classification.1} parent=79 // pred_region
          %p3542 = scmp.lt.s32.totalorder %s24, 1
          %s3543 = scalar_select %p3542, %s24, 1
          %s3544 = smul.addr %s3543, 2
          %s3545 = smul.addr %s3544, 8
          %s3546 = scalar_lea.vmem %s10, %s3545
        $region84: #{mmbt_for_classification.1} parent=79 // pred_fallthru
          _
      $region80: #{mmbt_for_classification.1} parent=5 // pred_fallthru
        _
    $region6: #{mmbt_for_classification.1} parent=1 // loop_footer
      %s22 = sadd.s32 1, %s18
    $region7: #{mmbt_for_classification.1} parent=1 // loop_footer_branch
      %17 = sbr.rel target = $region3
    $region8: #{mmbt_for_classification.1} parent=1 // loop_exit
      _
    %3547 = vsyncpa [#allocation3], 1
    %s3548 = scalar_lea.sflag [#allocation3], 1
    %3549 = vsyncpa %s3548, 1
    %3550 = vsyncpa [#allocation5], 1

</llo_original>
